<compile_context>
chip_gen: v7x
topology: tpu7x:2x2x1
jax: 0.10.0
libtpu: 0.0.40
codegen_flags: <defaults>
</compile_context>

<pallas_src>
import math

import jax
import jax.numpy as jnp
from jax import lax
from jax.experimental import pallas as pl
from jax.experimental.pallas import tpu as pltpu

# ----------------------------- configuration -----------------------------
INPUT_DIMS = {"rna": 64, "methylation": 48, "protein": 32}
MODALITIES = list(INPUT_DIMS.keys())
OUTPUT_DIM = 8
HIDDEN = 32
NUM_HEADS = 4
NUM_LAYERS = 2
BATCH = 4

HEAD_DIM = HIDDEN // NUM_HEADS
FFN = HIDDEN * 2
NMOD = len(MODALITIES)
NTOK = NMOD * BATCH          # 12 real tokens; row = modality * BATCH + batch
LN_EPS = 1e-5
BN_EPS = 1e-5
NEG = -1e30
LANES = 128

_VMEM = pl.BlockSpec(memory_space=pltpu.MemorySpace.VMEM)


# ----------------------------- static slab layout -----------------------------
def _layout_spec():
    spec = []
    for m in MODALITIES:
        spec.append((f"ln_{m}", (2, INPUT_DIMS[m])))
        spec.append((f"emb_{m}", (INPUT_DIMS[m] + 1, HIDDEN)))
    spec.append(("modinfo", (2 * NMOD, HIDDEN)))
    spec.append(("headmask_enc", (NUM_HEADS * NTOK, HIDDEN)))
    spec.append(("attn_bias", (NUM_HEADS * NTOK, NTOK)))
    for l in range(NUM_LAYERS):
        spec += [(f"enc{l}_ln", (6, HIDDEN)),
                 (f"enc{l}_wqkv", (HIDDEN + 1, 3 * HIDDEN)),
                 (f"enc{l}_wo", (HIDDEN, HIDDEN)),
                 (f"enc{l}_w1", (HIDDEN + 1, FFN)),
                 (f"enc{l}_w2", (FFN, HIDDEN))]
    spec += [("pool_qbig", (NUM_HEADS * BATCH, HIDDEN)),
             ("headmask_pool", (NUM_HEADS * BATCH, HIDDEN)),
             ("pool_wkv", (HIDDEN + 1, 2 * HIDDEN)),
             ("pool_wo", (HIDDEN, HIDDEN)),
             ("pool_bias", (NUM_HEADS * BATCH, NTOK)),
             ("pool_R", (NTOK, NMOD)),
             ("head_w1", (HIDDEN + 1, 2 * HIDDEN)),
             ("head_w2", (2 * HIDDEN + 1, HIDDEN)),
             ("head_w3", (HIDDEN + 1, OUTPUT_DIM))]
    return spec


def _build_layout():
    layout, off = {}, 0
    for name, (r, c) in _layout_spec():
        layout[name] = (off, r, c)
        off += -(-r // 8) * 8            # 8-sublane align each block
    return layout, off


LAYOUT, SLAB_ROWS = _build_layout()


# ----------------------------- in-kernel helpers -----------------------------
def _blk(slab_ref, name, r0=0, r1=None):
    """Static row/lane slice of one packed block of the parameter slab."""
    off, r, c = LAYOUT[name]
    r1 = r if r1 is None else r1
    return slab_ref[off + r0: off + r1, 0:c]


def _gelu(x):
    # exact (erf-based) GELU, matching torch.nn.GELU / F.gelu defaults
    return 0.5 * x * (1.0 + lax.erf(x * 0.7071067811865476))


def _layernorm(x, g, b):
    mu = jnp.mean(x, axis=-1, keepdims=True)
    xc = x - mu
    var = jnp.mean(xc * xc, axis=-1, keepdims=True)
    return xc * lax.rsqrt(var + LN_EPS) * g + b


def _softmax_last(s):
    m = jnp.max(s, axis=-1, keepdims=True)
    e = jnp.exp(s - m)
    d = jnp.sum(e, axis=-1, keepdims=True)
    return e * pl.reciprocal(d, approx=True)          # EUP reciprocal


# ----------------------------- the fused forward kernel -----------------------------
def fused_forward_kernel(x_rna_ref, x_meth_ref, x_prot_ref, slab_ref, o_ref):
    f32 = jnp.float32
    H, B, M, NH, T = HIDDEN, BATCH, NMOD, NUM_HEADS, NTOK

    # ---- 1) modality embeddings -> real-token stack (T rows, modality-major) ----
    toks = []
    x_refs = (x_rna_ref, x_meth_ref, x_prot_ref)
    for i, mod in enumerate(MODALITIES):
        D = INPUT_DIMS[mod]
        g = _blk(slab_ref, f"ln_{mod}", 0, 1)
        b = _blk(slab_ref, f"ln_{mod}", 1, 2)
        w = _blk(slab_ref, f"emb_{mod}", 0, D)          # BN folded into Linear
        wb = _blk(slab_ref, f"emb_{mod}", D, D + 1)
        xi = _layernorm(x_refs[i][...], g, b)
        h = _gelu(jnp.dot(xi, w, preferred_element_type=f32) + wb)   # Dropout = identity (eval)
        # (h + modality_embed_i) * fw_i; both folds precomputed in `modinfo`
        tok = (h * _blk(slab_ref, "modinfo", M + i, M + i + 1)
               + _blk(slab_ref, "modinfo", i, i + 1))
        toks.append(tok)
    xf = jnp.concatenate(toks, axis=0)                  # (T, H)

    hm = _blk(slab_ref, "headmask_enc")                 # (NH*T, H) head-lane selector
    abias = _blk(slab_ref, "attn_bias")                 # (NH*T, T) same-batch additive mask

    # ---- 2) pre-norm transformer encoder (unrolled; 6 matmuls per layer) ----
    for l in range(NUM_LAYERS):
        ln1_g = _blk(slab_ref, f"enc{l}_ln", 0, 1)
        ln1_b = _blk(slab_ref, f"enc{l}_ln", 1, 2)
        ln2_g = _blk(slab_ref, f"enc{l}_ln", 2, 3)
        ln2_b = _blk(slab_ref, f"enc{l}_ln", 3, 4)
        attn_bo = _blk(slab_ref, f"enc{l}_ln", 4, 5)
        ffn_b2 = _blk(slab_ref, f"enc{l}_ln", 5, 6)
        wqkv = _blk(slab_ref, f"enc{l}_wqkv", 0, H)     # q columns pre-scaled by 1/sqrt(hd)
        bqkv = _blk(slab_ref, f"enc{l}_wqkv", H, H + 1)
        wo = _blk(slab_ref, f"enc{l}_wo")
        w1 = _blk(slab_ref, f"enc{l}_w1", 0, H)
        b1 = _blk(slab_ref, f"enc{l}_w1", H, H + 1)
        w2 = _blk(slab_ref, f"enc{l}_w2")

        # fused qkv projection: one (T, H) x (H, 3H) matmul
        xn = _layernorm(xf, ln1_g, ln1_b)
        qkv = jnp.dot(xn, wqkv, preferred_element_type=f32) + bqkv   # (T, 3H)
        q, k, v = qkv[:, :H], qkv[:, H:2 * H], qkv[:, 2 * H:]

        # blocked multi-head attention: heads stacked along sublanes via lane masks
        qb = jnp.concatenate([q] * NH, axis=0) * hm                  # (NH*T, H)
        s = lax.dot_general(qb, k, (((1,), (1,)), ((), ())),
                            preferred_element_type=f32) + abias      # (NH*T, T)
        p = _softmax_last(s)
        cf = jnp.dot(p, v, preferred_element_type=f32) * hm          # (NH*T, H)
        ctx = cf[0:T]
        for hh in range(1, NH):
            ctx = ctx + cf[hh * T:(hh + 1) * T]                      # (T, H) heads re-merged
        xf = xf + jnp.dot(ctx, wo, preferred_element_type=f32) + attn_bo

        # feed-forward block
        xn2 = _layernorm(xf, ln2_g, ln2_b)
        h1 = _gelu(jnp.dot(xn2, w1, preferred_element_type=f32) + b1)
        xf = xf + jnp.dot(h1, w2, preferred_element_type=f32) + ffn_b2

    # ---- 3) attention pooling (single pre-projected query; 4 matmuls) ----
    wkv = _blk(slab_ref, "pool_wkv", 0, H)
    bkv = _blk(slab_ref, "pool_wkv", H, H + 1)
    kv = jnp.dot(xf, wkv, preferred_element_type=f32) + bkv          # (T, 2H)
    k, v = kv[:, :H], kv[:, H:]
    qpool = _blk(slab_ref, "pool_qbig")                              # (NH*B, H) pre-scaled+masked
    s = lax.dot_general(qpool, k, (((1,), (1,)), ((), ())),
                        preferred_element_type=f32) + _blk(slab_ref, "pool_bias")
    p = _softmax_last(s)                                             # (NH*B, T)
    cf = jnp.dot(p, v, preferred_element_type=f32) * _blk(slab_ref, "headmask_pool")
    pooled = cf[0:B]
    for hh in range(1, NH):
        pooled = pooled + cf[hh * B:(hh + 1) * B]                    # (B, H)
    pooled = jnp.dot(pooled, _blk(slab_ref, "pool_wo"),
                     preferred_element_type=f32)                     # out-proj bias folded in head
    pm = jnp.dot(p, _blk(slab_ref, "pool_R"), preferred_element_type=f32)   # (NH*B, M)
    attnw = pm[0:B]
    for hh in range(1, NH):
        attnw = attnw + pm[hh * B:(hh + 1) * B]
    attnw = attnw * (1.0 / NH)                                       # torch averages heads

    # ---- 4) prediction head (BatchNorms folded into the Linears) ----
    h1 = _gelu(jnp.dot(pooled, _blk(slab_ref, "head_w1", 0, H),
                       preferred_element_type=f32) + _blk(slab_ref, "head_w1", H, H + 1))
    h2 = _gelu(jnp.dot(h1, _blk(slab_ref, "head_w2", 0, 2 * H),
                       preferred_element_type=f32) + _blk(slab_ref, "head_w2", 2 * H, 2 * H + 1))
    out = (jnp.dot(h2, _blk(slab_ref, "head_w3", 0, H), preferred_element_type=f32)
           + _blk(slab_ref, "head_w3", H, H + 1))

    # single lane-dense output slab: lanes [0:OUT) prediction, [OUT:OUT+M) attn weights
    pad = jnp.zeros((B, LANES - OUTPUT_DIM - M), f32)
    o_ref[...] = jnp.concatenate([out, attnw, pad], axis=1)


# ----------------------------- wrapper (single pallas_call) -----------------------------
@jax.jit
def _fused_forward(x_rna, x_meth, x_prot, slab):
    res = pl.pallas_call(
        fused_forward_kernel,
        out_shape=jax.ShapeDtypeStruct((BATCH, LANES), jnp.float32),
        in_specs=[_VMEM, _VMEM, _VMEM, _VMEM],
        out_specs=_VMEM,
    )(x_rna, x_meth, x_prot, slab)
    return res[:, :OUTPUT_DIM], res[:, OUTPUT_DIM:OUTPUT_DIM + NMOD]


def omics_forward(x_dict, slab):
    return _fused_forward(x_dict["rna"], x_dict["methylation"], x_dict["protein"], slab)


# ----------------------------- one-time parameter folding / packing -----------------------------
def pack_params(p):
    """Fold BN/scale/bias constants and pack everything into ONE (SLAB_ROWS, 128) slab."""
    H, B, M, NH, HD, T = HIDDEN, BATCH, NMOD, NUM_HEADS, HEAD_DIM, NTOK
    f32 = jnp.float32
    scale = 1.0 / math.sqrt(HD)
    fw = jax.nn.softmax(p["feature_importance"])                        # (M,)

    blocks = {}
    for m in MODALITIES:
        ep = p["embed"][m]
        bn_s = ep["bn_g"] / jnp.sqrt(ep["bn_v"] + BN_EPS)               # fold eval BatchNorm
        w_f = ep["w"] * bn_s
        b_f = (ep["b"] - ep["bn_m"]) * bn_s + ep["bn_b"]
        blocks[f"ln_{m}"] = jnp.concatenate([ep["ln_g"], ep["ln_b"]], axis=0)
        blocks[f"emb_{m}"] = jnp.concatenate([w_f, b_f], axis=0)
    # rows 0..M-1: modality_embedding_i * fw_i ; rows M..2M-1: fw_i  (=> (h + me) * fw)
    blocks["modinfo"] = jnp.concatenate(
        [p["modality_embeddings"] * fw[:, None],
         jnp.broadcast_to(fw[:, None], (M, H))], axis=0)

    # static head-lane masks and additive block-diagonal attention masks
    hm1 = ((jnp.arange(H)[None, :] // HD) == jnp.arange(NH)[:, None]).astype(f32)   # (NH, H)
    blocks["headmask_enc"] = jnp.repeat(hm1, T, axis=0)                 # row = h*T + t
    blocks["headmask_pool"] = jnp.repeat(hm1, B, axis=0)                # row = h*B + b
    tcol = jnp.arange(T)
    qrow = jnp.arange(NH * T)
    blocks["attn_bias"] = jnp.where((qrow[:, None] % B) == (tcol[None, :] % B),
                                    0.0, NEG).astype(f32)
    prow = jnp.arange(NH * B)
    blocks["pool_bias"] = jnp.where((prow[:, None] % B) == (tcol[None, :] % B),
                                    0.0, NEG).astype(f32)
    blocks["pool_R"] = ((tcol[:, None] // B) == jnp.arange(M)[None, :]).astype(f32)

    lp = p["layers"]
    qscale = jnp.concatenate([jnp.full((1, H), scale, f32),
                              jnp.ones((1, 2 * H), f32)], axis=1)       # scale q cols/bias only
    for l in range(NUM_LAYERS):
        blocks[f"enc{l}_ln"] = jnp.concatenate(
            [lp["ln1_g"][l], lp["ln1_b"][l], lp["ln2_g"][l], lp["ln2_b"][l],
             lp["bo"][l], lp["b2"][l]], axis=0)
        blocks[f"enc{l}_wqkv"] = jnp.concatenate(
            [lp["wqkv"][l], lp["bqkv"][l]], axis=0) * qscale            # (H+1, 3H)
        blocks[f"enc{l}_wo"] = lp["wo"][l]
        blocks[f"enc{l}_w1"] = jnp.concatenate([lp["w1"][l], lp["b1"][l]], axis=0)
        blocks[f"enc{l}_w2"] = lp["w2"][l]

    pp = p["pool"]
    q_full = (jnp.dot(pp["query"], pp["wq"]) + pp["bq"]) * scale        # pre-projected query
    blocks["pool_qbig"] = jnp.broadcast_to(q_full, (NH * B, H)) * blocks["headmask_pool"]
    blocks["pool_wkv"] = jnp.concatenate([pp["wkv"], pp["bkv"]], axis=0)
    blocks["pool_wo"] = pp["wo"]

    hp = p["head"]
    s1 = hp["bn1_g"] / jnp.sqrt(hp["bn1_v"] + BN_EPS)
    w1f = hp["w1"] * s1
    b1f = (hp["b1"] - hp["bn1_m"]) * s1 + hp["bn1_b"] + jnp.dot(pp["bo"], w1f)  # + pool out bias
    s2 = hp["bn2_g"] / jnp.sqrt(hp["bn2_v"] + BN_EPS)
    w2f = hp["w2"] * s2
    b2f = (hp["b2"] - hp["bn2_m"]) * s2 + hp["bn2_b"]
    blocks["head_w1"] = jnp.concatenate([w1f, b1f], axis=0)
    blocks["head_w2"] = jnp.concatenate([w2f, b2f], axis=0)
    blocks["head_w3"] = jnp.concatenate([hp["w3"], hp["b3"]], axis=0)

    slab = jnp.zeros((SLAB_ROWS, LANES), f32)
    for name, arr in blocks.items():
        off, r, c = LAYOUT[name]
        assert arr.shape == (r, c), (name, arr.shape, (r, c))
        slab = slab.at[off:off + r, :c].set(arr.astype(f32))
    return slab


# ----------------------------- parameter init (deterministic, synthetic) -----------------------------
def _xavier(key, fan_in, fan_out, shape):
    lim = math.sqrt(6.0 / (fan_in + fan_out))
    return jax.random.uniform(key, shape, jnp.float32, -lim, lim)


def init_params(key):
    keys = iter(jax.random.split(key, 64))
    H = HIDDEN
    p = {"embed": {}}
    for m in MODALITIES:
        D = INPUT_DIMS[m]
        p["embed"][m] = dict(
            ln_g=jnp.ones((1, D), jnp.float32), ln_b=jnp.zeros((1, D), jnp.float32),
            w=_xavier(next(keys), D, H, (D, H)), b=jnp.zeros((1, H), jnp.float32),
            bn_g=jnp.ones((1, H), jnp.float32), bn_b=jnp.zeros((1, H), jnp.float32),
            bn_m=jnp.zeros((1, H), jnp.float32), bn_v=jnp.ones((1, H), jnp.float32),
        )
    M = NMOD
    p["modality_embeddings"] = 0.02 * jax.random.normal(next(keys), (M, H), jnp.float32)
    p["feature_importance"] = jnp.ones((M,), jnp.float32)

    p["layers"] = dict(
        ln1_g=jnp.ones((NUM_LAYERS, 1, H), jnp.float32),
        ln1_b=jnp.zeros((NUM_LAYERS, 1, H), jnp.float32),
        wqkv=jnp.stack([_xavier(next(keys), H, 3 * H, (H, 3 * H)) for _ in range(NUM_LAYERS)]),
        bqkv=jnp.zeros((NUM_LAYERS, 1, 3 * H), jnp.float32),
        wo=jnp.stack([_xavier(next(keys), H, H, (H, H)) for _ in range(NUM_LAYERS)]),
        bo=jnp.zeros((NUM_LAYERS, 1, H), jnp.float32),
        ln2_g=jnp.ones((NUM_LAYERS, 1, H), jnp.float32),
        ln2_b=jnp.zeros((NUM_LAYERS, 1, H), jnp.float32),
        w1=jnp.stack([_xavier(next(keys), H, FFN, (H, FFN)) for _ in range(NUM_LAYERS)]),
        b1=jnp.zeros((NUM_LAYERS, 1, FFN), jnp.float32),
        w2=jnp.stack([_xavier(next(keys), FFN, H, (FFN, H)) for _ in range(NUM_LAYERS)]),
        b2=jnp.zeros((NUM_LAYERS, 1, H), jnp.float32),
    )

    in_proj = _xavier(next(keys), H, 3 * H, (H, 3 * H))
    p["pool"] = dict(
        query=0.02 * jax.random.normal(next(keys), (1, H), jnp.float32),
        wq=in_proj[:, :H], bq=jnp.zeros((1, H), jnp.float32),
        wkv=in_proj[:, H:], bkv=jnp.zeros((1, 2 * H), jnp.float32),
        wo=_xavier(next(keys), H, H, (H, H)), bo=jnp.zeros((1, H), jnp.float32),
    )

    p["head"] = dict(
        w1=_xavier(next(keys), H, 2 * H, (H, 2 * H)), b1=jnp.zeros((1, 2 * H), jnp.float32),
        bn1_g=jnp.ones((1, 2 * H), jnp.float32), bn1_b=jnp.zeros((1, 2 * H), jnp.float32),
        bn1_m=jnp.zeros((1, 2 * H), jnp.float32), bn1_v=jnp.ones((1, 2 * H), jnp.float32),
        w2=_xavier(next(keys), 2 * H, H, (2 * H, H)), b2=jnp.zeros((1, H), jnp.float32),
        bn2_g=jnp.ones((1, H), jnp.float32), bn2_b=jnp.zeros((1, H), jnp.float32),
        bn2_m=jnp.zeros((1, H), jnp.float32), bn2_v=jnp.ones((1, H), jnp.float32),
        w3=_xavier(next(keys), H, OUTPUT_DIM, (H, OUTPUT_DIM)),
        b3=jnp.zeros((1, OUTPUT_DIM), jnp.float32),
    )
    return p


# ----------------------------- main -----------------------------
if __name__ == "__main__":
    key = jax.random.PRNGKey(0)
    pkey, *dkeys = jax.random.split(key, 1 + NMOD)
    params = init_params(pkey)
    slab = pack_params(params)            # one-time folding/packing (outside per-call path)
    x_dict = {m: jax.random.normal(dk, (BATCH, INPUT_DIMS[m]), jnp.float32)
              for m, dk in zip(MODALITIES, dkeys)}

    out, attn_w = omics_forward(x_dict, slab)
    jax.block_until_ready((out, attn_w))

    assert out.shape == (BATCH, OUTPUT_DIM)
    assert attn_w.shape == (BATCH, NMOD)
    assert bool(jnp.all(jnp.isfinite(out)))
    # pooling softmax sanity (approx reciprocal => ~2^-12 relative error budget)
    assert bool(jnp.allclose(attn_w.sum(axis=-1), 1.0, atol=2e-3))
    print("KERNEL_OK")
</pallas_src>

<mosaic_0001>
module attributes {stable_mosaic.version = 11 : i64} {
  func.func @fused_forward_kernel(%arg0: memref<4x64xf32, #tpu.memory_space<vmem>>, %arg1: memref<4x48xf32, #tpu.memory_space<vmem>>, %arg2: memref<4x32xf32, #tpu.memory_space<vmem>>, %arg3: memref<952x128xf32, #tpu.memory_space<vmem>>, %arg4: memref<4x128xf32, #tpu.memory_space<vmem>>) attributes {dimension_semantics = [], scalar_prefetch = 0 : i64, scratch_operands = 0 : i64, tpu.core_type = #tpu.core_type<tc>} {
    %c0 = arith.constant 0 : index
    %c0_0 = arith.constant 0 : index
    %0 = vector.load %arg3[%c0, %c0_0] : memref<952x128xf32, #tpu.memory_space<vmem>>, vector<1x64xf32>
    %c1 = arith.constant 1 : index
    %c0_1 = arith.constant 0 : index
    %1 = vector.load %arg3[%c1, %c0_1] : memref<952x128xf32, #tpu.memory_space<vmem>>, vector<1x64xf32>
    %c8 = arith.constant 8 : index
    %c0_2 = arith.constant 0 : index
    %2 = vector.load %arg3[%c8, %c0_2] : memref<952x128xf32, #tpu.memory_space<vmem>>, vector<64x32xf32>
    %c72 = arith.constant 72 : index
    %c0_3 = arith.constant 0 : index
    %3 = vector.load %arg3[%c72, %c0_3] : memref<952x128xf32, #tpu.memory_space<vmem>>, vector<1x32xf32>
    %c0_4 = arith.constant 0 : index
    %c0_5 = arith.constant 0 : index
    %4 = vector.load %arg0[%c0_4, %c0_5] : memref<4x64xf32, #tpu.memory_space<vmem>>, vector<4x64xf32>
    %cst = arith.constant dense<0.000000e+00> : vector<4xf32>
    %5 = vector.multi_reduction <add>, %4, %cst [1] : vector<4x64xf32> to vector<4xf32>
    %6 = vector.shape_cast %5 : vector<4xf32> to vector<4x1xf32>
    %cst_6 = arith.constant 6.400000e+01 : f32
    %7 = vector.broadcast %cst_6 : f32 to vector<4x1xf32>
    %8 = arith.divf %6, %7 : vector<4x1xf32>
    %9 = vector.broadcast %8 : vector<4x1xf32> to vector<4x64xf32>
    %10 = arith.subf %4, %9 : vector<4x64xf32>
    %11 = arith.mulf %10, %10 : vector<4x64xf32>
    %cst_7 = arith.constant dense<0.000000e+00> : vector<4xf32>
    %12 = vector.multi_reduction <add>, %11, %cst_7 [1] : vector<4x64xf32> to vector<4xf32>
    %13 = vector.shape_cast %12 : vector<4xf32> to vector<4x1xf32>
    %cst_8 = arith.constant 6.400000e+01 : f32
    %14 = vector.broadcast %cst_8 : f32 to vector<4x1xf32>
    %15 = arith.divf %13, %14 : vector<4x1xf32>
    %cst_9 = arith.constant 9.99999974E-6 : f32
    %16 = vector.broadcast %cst_9 : f32 to vector<4x1xf32>
    %17 = arith.addf %15, %16 : vector<4x1xf32>
    %18 = math.rsqrt %17 : vector<4x1xf32>
    %19 = vector.broadcast %18 : vector<4x1xf32> to vector<4x64xf32>
    %20 = arith.mulf %10, %19 : vector<4x64xf32>
    %21 = vector.broadcast %0 : vector<1x64xf32> to vector<4x64xf32>
    %22 = arith.mulf %20, %21 : vector<4x64xf32>
    %23 = vector.broadcast %1 : vector<1x64xf32> to vector<4x64xf32>
    %24 = arith.addf %22, %23 : vector<4x64xf32>
    %cst_10 = arith.constant dense<0.000000e+00> : vector<4x32xf32>
    %25 = tpu.matmul %24, %2, %cst_10 {dimension_numbers = #tpu.dot_dimension_numbers<[1], [0], [0], [1], [0, 0, 1, 1], [], []>} : vector<4x64xf32>, vector<64x32xf32>, vector<4x32xf32> -> vector<4x32xf32>
    %26 = vector.broadcast %3 : vector<1x32xf32> to vector<4x32xf32>
    %27 = arith.addf %25, %26 : vector<4x32xf32>
    %cst_11 = arith.constant 5.000000e-01 : f32
    %28 = vector.broadcast %cst_11 : f32 to vector<4x32xf32>
    %29 = arith.mulf %28, %27 : vector<4x32xf32>
    %cst_12 = arith.constant 0.707106769 : f32
    %30 = vector.broadcast %cst_12 : f32 to vector<4x32xf32>
    %31 = arith.mulf %27, %30 : vector<4x32xf32>
    %32 = math.erf %31 : vector<4x32xf32>
    %cst_13 = arith.constant 1.000000e+00 : f32
    %33 = vector.broadcast %cst_13 : f32 to vector<4x32xf32>
    %34 = arith.addf %33, %32 : vector<4x32xf32>
    %35 = arith.mulf %29, %34 : vector<4x32xf32>
    %c195 = arith.constant 195 : index
    %c0_14 = arith.constant 0 : index
    %36 = vector.load %arg3[%c195, %c0_14] : memref<952x128xf32, #tpu.memory_space<vmem>>, vector<1x32xf32>
    %37 = vector.broadcast %36 : vector<1x32xf32> to vector<4x32xf32>
    %38 = arith.mulf %35, %37 : vector<4x32xf32>
    %c192 = arith.constant 192 : index
    %c0_15 = arith.constant 0 : index
    %39 = vector.load %arg3[%c192, %c0_15] : memref<952x128xf32, #tpu.memory_space<vmem>>, vector<1x32xf32>
    %40 = vector.broadcast %39 : vector<1x32xf32> to vector<4x32xf32>
    %41 = arith.addf %38, %40 : vector<4x32xf32>
    %c80 = arith.constant 80 : index
    %c0_16 = arith.constant 0 : index
    %42 = vector.load %arg3[%c80, %c0_16] : memref<952x128xf32, #tpu.memory_space<vmem>>, vector<1x48xf32>
    %c81 = arith.constant 81 : index
    %c0_17 = arith.constant 0 : index
    %43 = vector.load %arg3[%c81, %c0_17] : memref<952x128xf32, #tpu.memory_space<vmem>>, vector<1x48xf32>
    %c88 = arith.constant 88 : index
    %c0_18 = arith.constant 0 : index
    %44 = vector.load %arg3[%c88, %c0_18] : memref<952x128xf32, #tpu.memory_space<vmem>>, vector<48x32xf32>
    %c136 = arith.constant 136 : index
    %c0_19 = arith.constant 0 : index
    %45 = vector.load %arg3[%c136, %c0_19] : memref<952x128xf32, #tpu.memory_space<vmem>>, vector<1x32xf32>
    %c0_20 = arith.constant 0 : index
    %c0_21 = arith.constant 0 : index
    %46 = vector.load %arg1[%c0_20, %c0_21] : memref<4x48xf32, #tpu.memory_space<vmem>>, vector<4x48xf32>
    %cst_22 = arith.constant dense<0.000000e+00> : vector<4xf32>
    %47 = vector.multi_reduction <add>, %46, %cst_22 [1] : vector<4x48xf32> to vector<4xf32>
    %48 = vector.shape_cast %47 : vector<4xf32> to vector<4x1xf32>
    %cst_23 = arith.constant 4.800000e+01 : f32
    %49 = vector.broadcast %cst_23 : f32 to vector<4x1xf32>
    %50 = arith.divf %48, %49 : vector<4x1xf32>
    %51 = vector.broadcast %50 : vector<4x1xf32> to vector<4x48xf32>
    %52 = arith.subf %46, %51 : vector<4x48xf32>
    %53 = arith.mulf %52, %52 : vector<4x48xf32>
    %cst_24 = arith.constant dense<0.000000e+00> : vector<4xf32>
    %54 = vector.multi_reduction <add>, %53, %cst_24 [1] : vector<4x48xf32> to vector<4xf32>
    %55 = vector.shape_cast %54 : vector<4xf32> to vector<4x1xf32>
    %cst_25 = arith.constant 4.800000e+01 : f32
    %56 = vector.broadcast %cst_25 : f32 to vector<4x1xf32>
    %57 = arith.divf %55, %56 : vector<4x1xf32>
    %cst_26 = arith.constant 9.99999974E-6 : f32
    %58 = vector.broadcast %cst_26 : f32 to vector<4x1xf32>
    %59 = arith.addf %57, %58 : vector<4x1xf32>
    %60 = math.rsqrt %59 : vector<4x1xf32>
    %61 = vector.broadcast %60 : vector<4x1xf32> to vector<4x48xf32>
    %62 = arith.mulf %52, %61 : vector<4x48xf32>
    %63 = vector.broadcast %42 : vector<1x48xf32> to vector<4x48xf32>
    %64 = arith.mulf %62, %63 : vector<4x48xf32>
    %65 = vector.broadcast %43 : vector<1x48xf32> to vector<4x48xf32>
    %66 = arith.addf %64, %65 : vector<4x48xf32>
    %cst_27 = arith.constant dense<0.000000e+00> : vector<4x32xf32>
    %67 = tpu.matmul %66, %44, %cst_27 {dimension_numbers = #tpu.dot_dimension_numbers<[1], [0], [0], [1], [0, 0, 1, 1], [], []>} : vector<4x48xf32>, vector<48x32xf32>, vector<4x32xf32> -> vector<4x32xf32>
    %68 = vector.broadcast %45 : vector<1x32xf32> to vector<4x32xf32>
    %69 = arith.addf %67, %68 : vector<4x32xf32>
    %cst_28 = arith.constant 5.000000e-01 : f32
    %70 = vector.broadcast %cst_28 : f32 to vector<4x32xf32>
    %71 = arith.mulf %70, %69 : vector<4x32xf32>
    %cst_29 = arith.constant 0.707106769 : f32
    %72 = vector.broadcast %cst_29 : f32 to vector<4x32xf32>
    %73 = arith.mulf %69, %72 : vector<4x32xf32>
    %74 = math.erf %73 : vector<4x32xf32>
    %cst_30 = arith.constant 1.000000e+00 : f32
    %75 = vector.broadcast %cst_30 : f32 to vector<4x32xf32>
    %76 = arith.addf %75, %74 : vector<4x32xf32>
    %77 = arith.mulf %71, %76 : vector<4x32xf32>
    %c196 = arith.constant 196 : index
    %c0_31 = arith.constant 0 : index
    %78 = vector.load %arg3[%c196, %c0_31] : memref<952x128xf32, #tpu.memory_space<vmem>>, vector<1x32xf32>
    %79 = vector.broadcast %78 : vector<1x32xf32> to vector<4x32xf32>
    %80 = arith.mulf %77, %79 : vector<4x32xf32>
    %c193 = arith.constant 193 : index
    %c0_32 = arith.constant 0 : index
    %81 = vector.load %arg3[%c193, %c0_32] : memref<952x128xf32, #tpu.memory_space<vmem>>, vector<1x32xf32>
    %82 = vector.broadcast %81 : vector<1x32xf32> to vector<4x32xf32>
    %83 = arith.addf %80, %82 : vector<4x32xf32>
    %c144 = arith.constant 144 : index
    %c0_33 = arith.constant 0 : index
    %84 = vector.load %arg3[%c144, %c0_33] : memref<952x128xf32, #tpu.memory_space<vmem>>, vector<1x32xf32>
    %c145 = arith.constant 145 : index
    %c0_34 = arith.constant 0 : index
    %85 = vector.load %arg3[%c145, %c0_34] : memref<952x128xf32, #tpu.memory_space<vmem>>, vector<1x32xf32>
    %c152 = arith.constant 152 : index
    %c0_35 = arith.constant 0 : index
    %86 = vector.load %arg3[%c152, %c0_35] : memref<952x128xf32, #tpu.memory_space<vmem>>, vector<32x32xf32>
    %c184 = arith.constant 184 : index
    %c0_36 = arith.constant 0 : index
    %87 = vector.load %arg3[%c184, %c0_36] : memref<952x128xf32, #tpu.memory_space<vmem>>, vector<1x32xf32>
    %c0_37 = arith.constant 0 : index
    %c0_38 = arith.constant 0 : index
    %88 = vector.load %arg2[%c0_37, %c0_38] : memref<4x32xf32, #tpu.memory_space<vmem>>, vector<4x32xf32>
    %cst_39 = arith.constant dense<0.000000e+00> : vector<4xf32>
    %89 = vector.multi_reduction <add>, %88, %cst_39 [1] : vector<4x32xf32> to vector<4xf32>
    %90 = vector.shape_cast %89 : vector<4xf32> to vector<4x1xf32>
    %cst_40 = arith.constant 3.200000e+01 : f32
    %91 = vector.broadcast %cst_40 : f32 to vector<4x1xf32>
    %92 = arith.divf %90, %91 : vector<4x1xf32>
    %93 = vector.broadcast %92 : vector<4x1xf32> to vector<4x32xf32>
    %94 = arith.subf %88, %93 : vector<4x32xf32>
    %95 = arith.mulf %94, %94 : vector<4x32xf32>
    %cst_41 = arith.constant dense<0.000000e+00> : vector<4xf32>
    %96 = vector.multi_reduction <add>, %95, %cst_41 [1] : vector<4x32xf32> to vector<4xf32>
    %97 = vector.shape_cast %96 : vector<4xf32> to vector<4x1xf32>
    %cst_42 = arith.constant 3.200000e+01 : f32
    %98 = vector.broadcast %cst_42 : f32 to vector<4x1xf32>
    %99 = arith.divf %97, %98 : vector<4x1xf32>
    %cst_43 = arith.constant 9.99999974E-6 : f32
    %100 = vector.broadcast %cst_43 : f32 to vector<4x1xf32>
    %101 = arith.addf %99, %100 : vector<4x1xf32>
    %102 = math.rsqrt %101 : vector<4x1xf32>
    %103 = vector.broadcast %102 : vector<4x1xf32> to vector<4x32xf32>
    %104 = arith.mulf %94, %103 : vector<4x32xf32>
    %105 = vector.broadcast %84 : vector<1x32xf32> to vector<4x32xf32>
    %106 = arith.mulf %104, %105 : vector<4x32xf32>
    %107 = vector.broadcast %85 : vector<1x32xf32> to vector<4x32xf32>
    %108 = arith.addf %106, %107 : vector<4x32xf32>
    %cst_44 = arith.constant dense<0.000000e+00> : vector<4x32xf32>
    %109 = tpu.matmul %108, %86, %cst_44 {dimension_numbers = #tpu.dot_dimension_numbers<[1], [0], [0], [1], [0, 0, 1, 1], [], []>} : vector<4x32xf32>, vector<32x32xf32>, vector<4x32xf32> -> vector<4x32xf32>
    %110 = vector.broadcast %87 : vector<1x32xf32> to vector<4x32xf32>
    %111 = arith.addf %109, %110 : vector<4x32xf32>
    %cst_45 = arith.constant 5.000000e-01 : f32
    %112 = vector.broadcast %cst_45 : f32 to vector<4x32xf32>
    %113 = arith.mulf %112, %111 : vector<4x32xf32>
    %cst_46 = arith.constant 0.707106769 : f32
    %114 = vector.broadcast %cst_46 : f32 to vector<4x32xf32>
    %115 = arith.mulf %111, %114 : vector<4x32xf32>
    %116 = math.erf %115 : vector<4x32xf32>
    %cst_47 = arith.constant 1.000000e+00 : f32
    %117 = vector.broadcast %cst_47 : f32 to vector<4x32xf32>
    %118 = arith.addf %117, %116 : vector<4x32xf32>
    %119 = arith.mulf %113, %118 : vector<4x32xf32>
    %c197 = arith.constant 197 : index
    %c0_48 = arith.constant 0 : index
    %120 = vector.load %arg3[%c197, %c0_48] : memref<952x128xf32, #tpu.memory_space<vmem>>, vector<1x32xf32>
    %121 = vector.broadcast %120 : vector<1x32xf32> to vector<4x32xf32>
    %122 = arith.mulf %119, %121 : vector<4x32xf32>
    %c194 = arith.constant 194 : index
    %c0_49 = arith.constant 0 : index
    %123 = vector.load %arg3[%c194, %c0_49] : memref<952x128xf32, #tpu.memory_space<vmem>>, vector<1x32xf32>
    %124 = vector.broadcast %123 : vector<1x32xf32> to vector<4x32xf32>
    %125 = arith.addf %122, %124 : vector<4x32xf32>
    %126 = tpu.concatenate %41, %83, %125 in 0 : vector<4x32xf32>, vector<4x32xf32>, vector<4x32xf32> -> vector<12x32xf32>
    %c200 = arith.constant 200 : index
    %c0_50 = arith.constant 0 : index
    %127 = vector.load %arg3[%c200, %c0_50] : memref<952x128xf32, #tpu.memory_space<vmem>>, vector<48x32xf32>
    %c248 = arith.constant 248 : index
    %c0_51 = arith.constant 0 : index
    %128 = vector.load %arg3[%c248, %c0_51] : memref<952x128xf32, #tpu.memory_space<vmem>>, vector<48x12xf32>
    %c296 = arith.constant 296 : index
    %c0_52 = arith.constant 0 : index
    %129 = vector.load %arg3[%c296, %c0_52] : memref<952x128xf32, #tpu.memory_space<vmem>>, vector<1x32xf32>
    %c297 = arith.constant 297 : index
    %c0_53 = arith.constant 0 : index
    %130 = vector.load %arg3[%c297, %c0_53] : memref<952x128xf32, #tpu.memory_space<vmem>>, vector<1x32xf32>
    %c298 = arith.constant 298 : index
    %c0_54 = arith.constant 0 : index
    %131 = vector.load %arg3[%c298, %c0_54] : memref<952x128xf32, #tpu.memory_space<vmem>>, vector<1x32xf32>
    %c299 = arith.constant 299 : index
    %c0_55 = arith.constant 0 : index
    %132 = vector.load %arg3[%c299, %c0_55] : memref<952x128xf32, #tpu.memory_space<vmem>>, vector<1x32xf32>
    %c300 = arith.constant 300 : index
    %c0_56 = arith.constant 0 : index
    %133 = vector.load %arg3[%c300, %c0_56] : memref<952x128xf32, #tpu.memory_space<vmem>>, vector<1x32xf32>
    %c301 = arith.constant 301 : index
    %c0_57 = arith.constant 0 : index
    %134 = vector.load %arg3[%c301, %c0_57] : memref<952x128xf32, #tpu.memory_space<vmem>>, vector<1x32xf32>
    %c304 = arith.constant 304 : index
    %c0_58 = arith.constant 0 : index
    %135 = vector.load %arg3[%c304, %c0_58] : memref<952x128xf32, #tpu.memory_space<vmem>>, vector<32x96xf32>
    %c336 = arith.constant 336 : index
    %c0_59 = arith.constant 0 : index
    %136 = vector.load %arg3[%c336, %c0_59] : memref<952x128xf32, #tpu.memory_space<vmem>>, vector<1x96xf32>
    %c344 = arith.constant 344 : index
    %c0_60 = arith.constant 0 : index
    %137 = vector.load %arg3[%c344, %c0_60] : memref<952x128xf32, #tpu.memory_space<vmem>>, vector<32x32xf32>
    %c376 = arith.constant 376 : index
    %c0_61 = arith.constant 0 : index
    %138 = vector.load %arg3[%c376, %c0_61] : memref<952x128xf32, #tpu.memory_space<vmem>>, vector<32x64xf32>
    %c408 = arith.constant 408 : index
    %c0_62 = arith.constant 0 : index
    %139 = vector.load %arg3[%c408, %c0_62] : memref<952x128xf32, #tpu.memory_space<vmem>>, vector<1x64xf32>
    %c416 = arith.constant 416 : index
    %c0_63 = arith.constant 0 : index
    %140 = vector.load %arg3[%c416, %c0_63] : memref<952x128xf32, #tpu.memory_space<vmem>>, vector<64x32xf32>
    %cst_64 = arith.constant dense<0.000000e+00> : vector<12xf32>
    %141 = vector.multi_reduction <add>, %126, %cst_64 [1] : vector<12x32xf32> to vector<12xf32>
    %142 = vector.shape_cast %141 : vector<12xf32> to vector<12x1xf32>
    %cst_65 = arith.constant 3.200000e+01 : f32
    %143 = vector.broadcast %cst_65 : f32 to vector<12x1xf32>
    %144 = arith.divf %142, %143 : vector<12x1xf32>
    %145 = vector.broadcast %144 : vector<12x1xf32> to vector<12x32xf32>
    %146 = arith.subf %126, %145 : vector<12x32xf32>
    %147 = arith.mulf %146, %146 : vector<12x32xf32>
    %cst_66 = arith.constant dense<0.000000e+00> : vector<12xf32>
    %148 = vector.multi_reduction <add>, %147, %cst_66 [1] : vector<12x32xf32> to vector<12xf32>
    %149 = vector.shape_cast %148 : vector<12xf32> to vector<12x1xf32>
    %cst_67 = arith.constant 3.200000e+01 : f32
    %150 = vector.broadcast %cst_67 : f32 to vector<12x1xf32>
    %151 = arith.divf %149, %150 : vector<12x1xf32>
    %cst_68 = arith.constant 9.99999974E-6 : f32
    %152 = vector.broadcast %cst_68 : f32 to vector<12x1xf32>
    %153 = arith.addf %151, %152 : vector<12x1xf32>
    %154 = math.rsqrt %153 : vector<12x1xf32>
    %155 = vector.broadcast %154 : vector<12x1xf32> to vector<12x32xf32>
    %156 = arith.mulf %146, %155 : vector<12x32xf32>
    %157 = vector.broadcast %129 : vector<1x32xf32> to vector<12x32xf32>
    %158 = arith.mulf %156, %157 : vector<12x32xf32>
    %159 = vector.broadcast %130 : vector<1x32xf32> to vector<12x32xf32>
    %160 = arith.addf %158, %159 : vector<12x32xf32>
    %cst_69 = arith.constant dense<0.000000e+00> : vector<12x96xf32>
    %161 = tpu.matmul %160, %135, %cst_69 {dimension_numbers = #tpu.dot_dimension_numbers<[1], [0], [0], [1], [0, 0, 1, 1], [], []>} : vector<12x32xf32>, vector<32x96xf32>, vector<12x96xf32> -> vector<12x96xf32>
    %162 = vector.broadcast %136 : vector<1x96xf32> to vector<12x96xf32>
    %163 = arith.addf %161, %162 : vector<12x96xf32>
    %164 = vector.extract_strided_slice %163 {offsets = [0, 0], sizes = [12, 32], strides = [1, 1]} : vector<12x96xf32> to vector<12x32xf32>
    %165 = vector.extract_strided_slice %163 {offsets = [0, 32], sizes = [12, 32], strides = [1, 1]} : vector<12x96xf32> to vector<12x32xf32>
    %166 = vector.extract_strided_slice %163 {offsets = [0, 64], sizes = [12, 32], strides = [1, 1]} : vector<12x96xf32> to vector<12x32xf32>
    %167 = tpu.concatenate %164, %164, %164, %164 in 0 : vector<12x32xf32>, vector<12x32xf32>, vector<12x32xf32>, vector<12x32xf32> -> vector<48x32xf32>
    %168 = arith.mulf %167, %127 : vector<48x32xf32>
    %cst_70 = arith.constant dense<0.000000e+00> : vector<48x12xf32>
    %169 = tpu.matmul %168, %165, %cst_70 {dimension_numbers = #tpu.dot_dimension_numbers<[1], [1], [0], [0], [0, 0, 1, 0], [], []>} : vector<48x32xf32>, vector<12x32xf32>, vector<48x12xf32> -> vector<48x12xf32>
    %170 = arith.addf %169, %128 : vector<48x12xf32>
    %cst_71 = arith.constant dense<0xFF800000> : vector<48xf32>
    %171 = vector.multi_reduction <maximumf>, %170, %cst_71 [1] : vector<48x12xf32> to vector<48xf32>
    %172 = vector.shape_cast %171 : vector<48xf32> to vector<48x1xf32>
    %173 = vector.broadcast %172 : vector<48x1xf32> to vector<48x12xf32>
    %174 = arith.subf %170, %173 : vector<48x12xf32>
    %175 = math.exp %174 : vector<48x12xf32>
    %cst_72 = arith.constant dense<0.000000e+00> : vector<48xf32>
    %176 = vector.multi_reduction <add>, %175, %cst_72 [1] : vector<48x12xf32> to vector<48xf32>
    %177 = vector.shape_cast %176 : vector<48xf32> to vector<48x1xf32>
    %178 = tpu.reciprocal %177 {approx = true} : vector<48x1xf32> -> vector<48x1xf32>
    %179 = vector.broadcast %178 : vector<48x1xf32> to vector<48x12xf32>
    %180 = arith.mulf %175, %179 : vector<48x12xf32>
    %cst_73 = arith.constant dense<0.000000e+00> : vector<48x32xf32>
    %181 = tpu.matmul %180, %166, %cst_73 {dimension_numbers = #tpu.dot_dimension_numbers<[1], [0], [0], [1], [0, 0, 1, 1], [], []>} : vector<48x12xf32>, vector<12x32xf32>, vector<48x32xf32> -> vector<48x32xf32>
    %182 = arith.mulf %181, %127 : vector<48x32xf32>
    %183 = vector.extract_strided_slice %182 {offsets = [0, 0], sizes = [12, 32], strides = [1, 1]} : vector<48x32xf32> to vector<12x32xf32>
    %184 = vector.extract_strided_slice %182 {offsets = [12, 0], sizes = [12, 32], strides = [1, 1]} : vector<48x32xf32> to vector<12x32xf32>
    %185 = arith.addf %183, %184 : vector<12x32xf32>
    %186 = vector.extract_strided_slice %182 {offsets = [24, 0], sizes = [12, 32], strides = [1, 1]} : vector<48x32xf32> to vector<12x32xf32>
    %187 = arith.addf %185, %186 : vector<12x32xf32>
    %188 = vector.extract_strided_slice %182 {offsets = [36, 0], sizes = [12, 32], strides = [1, 1]} : vector<48x32xf32> to vector<12x32xf32>
    %189 = arith.addf %187, %188 : vector<12x32xf32>
    %cst_74 = arith.constant dense<0.000000e+00> : vector<12x32xf32>
    %190 = tpu.matmul %189, %137, %cst_74 {dimension_numbers = #tpu.dot_dimension_numbers<[1], [0], [0], [1], [0, 0, 1, 1], [], []>} : vector<12x32xf32>, vector<32x32xf32>, vector<12x32xf32> -> vector<12x32xf32>
    %191 = arith.addf %126, %190 : vector<12x32xf32>
    %192 = vector.broadcast %133 : vector<1x32xf32> to vector<12x32xf32>
    %193 = arith.addf %191, %192 : vector<12x32xf32>
    %cst_75 = arith.constant dense<0.000000e+00> : vector<12xf32>
    %194 = vector.multi_reduction <add>, %193, %cst_75 [1] : vector<12x32xf32> to vector<12xf32>
    %195 = vector.shape_cast %194 : vector<12xf32> to vector<12x1xf32>
    %cst_76 = arith.constant 3.200000e+01 : f32
    %196 = vector.broadcast %cst_76 : f32 to vector<12x1xf32>
    %197 = arith.divf %195, %196 : vector<12x1xf32>
    %198 = vector.broadcast %197 : vector<12x1xf32> to vector<12x32xf32>
    %199 = arith.subf %193, %198 : vector<12x32xf32>
    %200 = arith.mulf %199, %199 : vector<12x32xf32>
    %cst_77 = arith.constant dense<0.000000e+00> : vector<12xf32>
    %201 = vector.multi_reduction <add>, %200, %cst_77 [1] : vector<12x32xf32> to vector<12xf32>
    %202 = vector.shape_cast %201 : vector<12xf32> to vector<12x1xf32>
    %cst_78 = arith.constant 3.200000e+01 : f32
    %203 = vector.broadcast %cst_78 : f32 to vector<12x1xf32>
    %204 = arith.divf %202, %203 : vector<12x1xf32>
    %cst_79 = arith.constant 9.99999974E-6 : f32
    %205 = vector.broadcast %cst_79 : f32 to vector<12x1xf32>
    %206 = arith.addf %204, %205 : vector<12x1xf32>
    %207 = math.rsqrt %206 : vector<12x1xf32>
    %208 = vector.broadcast %207 : vector<12x1xf32> to vector<12x32xf32>
    %209 = arith.mulf %199, %208 : vector<12x32xf32>
    %210 = vector.broadcast %131 : vector<1x32xf32> to vector<12x32xf32>
    %211 = arith.mulf %209, %210 : vector<12x32xf32>
    %212 = vector.broadcast %132 : vector<1x32xf32> to vector<12x32xf32>
    %213 = arith.addf %211, %212 : vector<12x32xf32>
    %cst_80 = arith.constant dense<0.000000e+00> : vector<12x64xf32>
    %214 = tpu.matmul %213, %138, %cst_80 {dimension_numbers = #tpu.dot_dimension_numbers<[1], [0], [0], [1], [0, 0, 1, 1], [], []>} : vector<12x32xf32>, vector<32x64xf32>, vector<12x64xf32> -> vector<12x64xf32>
    %215 = vector.broadcast %139 : vector<1x64xf32> to vector<12x64xf32>
    %216 = arith.addf %214, %215 : vector<12x64xf32>
    %cst_81 = arith.constant 5.000000e-01 : f32
    %217 = vector.broadcast %cst_81 : f32 to vector<12x64xf32>
    %218 = arith.mulf %217, %216 : vector<12x64xf32>
    %cst_82 = arith.constant 0.707106769 : f32
    %219 = vector.broadcast %cst_82 : f32 to vector<12x64xf32>
    %220 = arith.mulf %216, %219 : vector<12x64xf32>
    %221 = math.erf %220 : vector<12x64xf32>
    %cst_83 = arith.constant 1.000000e+00 : f32
    %222 = vector.broadcast %cst_83 : f32 to vector<12x64xf32>
    %223 = arith.addf %222, %221 : vector<12x64xf32>
    %224 = arith.mulf %218, %223 : vector<12x64xf32>
    %cst_84 = arith.constant dense<0.000000e+00> : vector<12x32xf32>
    %225 = tpu.matmul %224, %140, %cst_84 {dimension_numbers = #tpu.dot_dimension_numbers<[1], [0], [0], [1], [0, 0, 1, 1], [], []>} : vector<12x64xf32>, vector<64x32xf32>, vector<12x32xf32> -> vector<12x32xf32>
    %226 = arith.addf %193, %225 : vector<12x32xf32>
    %227 = vector.broadcast %134 : vector<1x32xf32> to vector<12x32xf32>
    %228 = arith.addf %226, %227 : vector<12x32xf32>
    %c480 = arith.constant 480 : index
    %c0_85 = arith.constant 0 : index
    %229 = vector.load %arg3[%c480, %c0_85] : memref<952x128xf32, #tpu.memory_space<vmem>>, vector<1x32xf32>
    %c481 = arith.constant 481 : index
    %c0_86 = arith.constant 0 : index
    %230 = vector.load %arg3[%c481, %c0_86] : memref<952x128xf32, #tpu.memory_space<vmem>>, vector<1x32xf32>
    %c482 = arith.constant 482 : index
    %c0_87 = arith.constant 0 : index
    %231 = vector.load %arg3[%c482, %c0_87] : memref<952x128xf32, #tpu.memory_space<vmem>>, vector<1x32xf32>
    %c483 = arith.constant 483 : index
    %c0_88 = arith.constant 0 : index
    %232 = vector.load %arg3[%c483, %c0_88] : memref<952x128xf32, #tpu.memory_space<vmem>>, vector<1x32xf32>
    %c484 = arith.constant 484 : index
    %c0_89 = arith.constant 0 : index
    %233 = vector.load %arg3[%c484, %c0_89] : memref<952x128xf32, #tpu.memory_space<vmem>>, vector<1x32xf32>
    %c485 = arith.constant 485 : index
    %c0_90 = arith.constant 0 : index
    %234 = vector.load %arg3[%c485, %c0_90] : memref<952x128xf32, #tpu.memory_space<vmem>>, vector<1x32xf32>
    %c488 = arith.constant 488 : index
    %c0_91 = arith.constant 0 : index
    %235 = vector.load %arg3[%c488, %c0_91] : memref<952x128xf32, #tpu.memory_space<vmem>>, vector<32x96xf32>
    %c520 = arith.constant 520 : index
    %c0_92 = arith.constant 0 : index
    %236 = vector.load %arg3[%c520, %c0_92] : memref<952x128xf32, #tpu.memory_space<vmem>>, vector<1x96xf32>
    %c528 = arith.constant 528 : index
    %c0_93 = arith.constant 0 : index
    %237 = vector.load %arg3[%c528, %c0_93] : memref<952x128xf32, #tpu.memory_space<vmem>>, vector<32x32xf32>
    %c560 = arith.constant 560 : index
    %c0_94 = arith.constant 0 : index
    %238 = vector.load %arg3[%c560, %c0_94] : memref<952x128xf32, #tpu.memory_space<vmem>>, vector<32x64xf32>
    %c592 = arith.constant 592 : index
    %c0_95 = arith.constant 0 : index
    %239 = vector.load %arg3[%c592, %c0_95] : memref<952x128xf32, #tpu.memory_space<vmem>>, vector<1x64xf32>
    %c600 = arith.constant 600 : index
    %c0_96 = arith.constant 0 : index
    %240 = vector.load %arg3[%c600, %c0_96] : memref<952x128xf32, #tpu.memory_space<vmem>>, vector<64x32xf32>
    %cst_97 = arith.constant dense<0.000000e+00> : vector<12xf32>
    %241 = vector.multi_reduction <add>, %228, %cst_97 [1] : vector<12x32xf32> to vector<12xf32>
    %242 = vector.shape_cast %241 : vector<12xf32> to vector<12x1xf32>
    %cst_98 = arith.constant 3.200000e+01 : f32
    %243 = vector.broadcast %cst_98 : f32 to vector<12x1xf32>
    %244 = arith.divf %242, %243 : vector<12x1xf32>
    %245 = vector.broadcast %244 : vector<12x1xf32> to vector<12x32xf32>
    %246 = arith.subf %228, %245 : vector<12x32xf32>
    %247 = arith.mulf %246, %246 : vector<12x32xf32>
    %cst_99 = arith.constant dense<0.000000e+00> : vector<12xf32>
    %248 = vector.multi_reduction <add>, %247, %cst_99 [1] : vector<12x32xf32> to vector<12xf32>
    %249 = vector.shape_cast %248 : vector<12xf32> to vector<12x1xf32>
    %cst_100 = arith.constant 3.200000e+01 : f32
    %250 = vector.broadcast %cst_100 : f32 to vector<12x1xf32>
    %251 = arith.divf %249, %250 : vector<12x1xf32>
    %cst_101 = arith.constant 9.99999974E-6 : f32
    %252 = vector.broadcast %cst_101 : f32 to vector<12x1xf32>
    %253 = arith.addf %251, %252 : vector<12x1xf32>
    %254 = math.rsqrt %253 : vector<12x1xf32>
    %255 = vector.broadcast %254 : vector<12x1xf32> to vector<12x32xf32>
    %256 = arith.mulf %246, %255 : vector<12x32xf32>
    %257 = vector.broadcast %229 : vector<1x32xf32> to vector<12x32xf32>
    %258 = arith.mulf %256, %257 : vector<12x32xf32>
    %259 = vector.broadcast %230 : vector<1x32xf32> to vector<12x32xf32>
    %260 = arith.addf %258, %259 : vector<12x32xf32>
    %cst_102 = arith.constant dense<0.000000e+00> : vector<12x96xf32>
    %261 = tpu.matmul %260, %235, %cst_102 {dimension_numbers = #tpu.dot_dimension_numbers<[1], [0], [0], [1], [0, 0, 1, 1], [], []>} : vector<12x32xf32>, vector<32x96xf32>, vector<12x96xf32> -> vector<12x96xf32>
    %262 = vector.broadcast %236 : vector<1x96xf32> to vector<12x96xf32>
    %263 = arith.addf %261, %262 : vector<12x96xf32>
    %264 = vector.extract_strided_slice %263 {offsets = [0, 0], sizes = [12, 32], strides = [1, 1]} : vector<12x96xf32> to vector<12x32xf32>
    %265 = vector.extract_strided_slice %263 {offsets = [0, 32], sizes = [12, 32], strides = [1, 1]} : vector<12x96xf32> to vector<12x32xf32>
    %266 = vector.extract_strided_slice %263 {offsets = [0, 64], sizes = [12, 32], strides = [1, 1]} : vector<12x96xf32> to vector<12x32xf32>
    %267 = tpu.concatenate %264, %264, %264, %264 in 0 : vector<12x32xf32>, vector<12x32xf32>, vector<12x32xf32>, vector<12x32xf32> -> vector<48x32xf32>
    %268 = arith.mulf %267, %127 : vector<48x32xf32>
    %cst_103 = arith.constant dense<0.000000e+00> : vector<48x12xf32>
    %269 = tpu.matmul %268, %265, %cst_103 {dimension_numbers = #tpu.dot_dimension_numbers<[1], [1], [0], [0], [0, 0, 1, 0], [], []>} : vector<48x32xf32>, vector<12x32xf32>, vector<48x12xf32> -> vector<48x12xf32>
    %270 = arith.addf %269, %128 : vector<48x12xf32>
    %cst_104 = arith.constant dense<0xFF800000> : vector<48xf32>
    %271 = vector.multi_reduction <maximumf>, %270, %cst_104 [1] : vector<48x12xf32> to vector<48xf32>
    %272 = vector.shape_cast %271 : vector<48xf32> to vector<48x1xf32>
    %273 = vector.broadcast %272 : vector<48x1xf32> to vector<48x12xf32>
    %274 = arith.subf %270, %273 : vector<48x12xf32>
    %275 = math.exp %274 : vector<48x12xf32>
    %cst_105 = arith.constant dense<0.000000e+00> : vector<48xf32>
    %276 = vector.multi_reduction <add>, %275, %cst_105 [1] : vector<48x12xf32> to vector<48xf32>
    %277 = vector.shape_cast %276 : vector<48xf32> to vector<48x1xf32>
    %278 = tpu.reciprocal %277 {approx = true} : vector<48x1xf32> -> vector<48x1xf32>
    %279 = vector.broadcast %278 : vector<48x1xf32> to vector<48x12xf32>
    %280 = arith.mulf %275, %279 : vector<48x12xf32>
    %cst_106 = arith.constant dense<0.000000e+00> : vector<48x32xf32>
    %281 = tpu.matmul %280, %266, %cst_106 {dimension_numbers = #tpu.dot_dimension_numbers<[1], [0], [0], [1], [0, 0, 1, 1], [], []>} : vector<48x12xf32>, vector<12x32xf32>, vector<48x32xf32> -> vector<48x32xf32>
    %282 = arith.mulf %281, %127 : vector<48x32xf32>
    %283 = vector.extract_strided_slice %282 {offsets = [0, 0], sizes = [12, 32], strides = [1, 1]} : vector<48x32xf32> to vector<12x32xf32>
    %284 = vector.extract_strided_slice %282 {offsets = [12, 0], sizes = [12, 32], strides = [1, 1]} : vector<48x32xf32> to vector<12x32xf32>
    %285 = arith.addf %283, %284 : vector<12x32xf32>
    %286 = vector.extract_strided_slice %282 {offsets = [24, 0], sizes = [12, 32], strides = [1, 1]} : vector<48x32xf32> to vector<12x32xf32>
    %287 = arith.addf %285, %286 : vector<12x32xf32>
    %288 = vector.extract_strided_slice %282 {offsets = [36, 0], sizes = [12, 32], strides = [1, 1]} : vector<48x32xf32> to vector<12x32xf32>
    %289 = arith.addf %287, %288 : vector<12x32xf32>
    %cst_107 = arith.constant dense<0.000000e+00> : vector<12x32xf32>
    %290 = tpu.matmul %289, %237, %cst_107 {dimension_numbers = #tpu.dot_dimension_numbers<[1], [0], [0], [1], [0, 0, 1, 1], [], []>} : vector<12x32xf32>, vector<32x32xf32>, vector<12x32xf32> -> vector<12x32xf32>
    %291 = arith.addf %228, %290 : vector<12x32xf32>
    %292 = vector.broadcast %233 : vector<1x32xf32> to vector<12x32xf32>
    %293 = arith.addf %291, %292 : vector<12x32xf32>
    %cst_108 = arith.constant dense<0.000000e+00> : vector<12xf32>
    %294 = vector.multi_reduction <add>, %293, %cst_108 [1] : vector<12x32xf32> to vector<12xf32>
    %295 = vector.shape_cast %294 : vector<12xf32> to vector<12x1xf32>
    %cst_109 = arith.constant 3.200000e+01 : f32
    %296 = vector.broadcast %cst_109 : f32 to vector<12x1xf32>
    %297 = arith.divf %295, %296 : vector<12x1xf32>
    %298 = vector.broadcast %297 : vector<12x1xf32> to vector<12x32xf32>
    %299 = arith.subf %293, %298 : vector<12x32xf32>
    %300 = arith.mulf %299, %299 : vector<12x32xf32>
    %cst_110 = arith.constant dense<0.000000e+00> : vector<12xf32>
    %301 = vector.multi_reduction <add>, %300, %cst_110 [1] : vector<12x32xf32> to vector<12xf32>
    %302 = vector.shape_cast %301 : vector<12xf32> to vector<12x1xf32>
    %cst_111 = arith.constant 3.200000e+01 : f32
    %303 = vector.broadcast %cst_111 : f32 to vector<12x1xf32>
    %304 = arith.divf %302, %303 : vector<12x1xf32>
    %cst_112 = arith.constant 9.99999974E-6 : f32
    %305 = vector.broadcast %cst_112 : f32 to vector<12x1xf32>
    %306 = arith.addf %304, %305 : vector<12x1xf32>
    %307 = math.rsqrt %306 : vector<12x1xf32>
    %308 = vector.broadcast %307 : vector<12x1xf32> to vector<12x32xf32>
    %309 = arith.mulf %299, %308 : vector<12x32xf32>
    %310 = vector.broadcast %231 : vector<1x32xf32> to vector<12x32xf32>
    %311 = arith.mulf %309, %310 : vector<12x32xf32>
    %312 = vector.broadcast %232 : vector<1x32xf32> to vector<12x32xf32>
    %313 = arith.addf %311, %312 : vector<12x32xf32>
    %cst_113 = arith.constant dense<0.000000e+00> : vector<12x64xf32>
    %314 = tpu.matmul %313, %238, %cst_113 {dimension_numbers = #tpu.dot_dimension_numbers<[1], [0], [0], [1], [0, 0, 1, 1], [], []>} : vector<12x32xf32>, vector<32x64xf32>, vector<12x64xf32> -> vector<12x64xf32>
    %315 = vector.broadcast %239 : vector<1x64xf32> to vector<12x64xf32>
    %316 = arith.addf %314, %315 : vector<12x64xf32>
    %cst_114 = arith.constant 5.000000e-01 : f32
    %317 = vector.broadcast %cst_114 : f32 to vector<12x64xf32>
    %318 = arith.mulf %317, %316 : vector<12x64xf32>
    %cst_115 = arith.constant 0.707106769 : f32
    %319 = vector.broadcast %cst_115 : f32 to vector<12x64xf32>
    %320 = arith.mulf %316, %319 : vector<12x64xf32>
    %321 = math.erf %320 : vector<12x64xf32>
    %cst_116 = arith.constant 1.000000e+00 : f32
    %322 = vector.broadcast %cst_116 : f32 to vector<12x64xf32>
    %323 = arith.addf %322, %321 : vector<12x64xf32>
    %324 = arith.mulf %318, %323 : vector<12x64xf32>
    %cst_117 = arith.constant dense<0.000000e+00> : vector<12x32xf32>
    %325 = tpu.matmul %324, %240, %cst_117 {dimension_numbers = #tpu.dot_dimension_numbers<[1], [0], [0], [1], [0, 0, 1, 1], [], []>} : vector<12x64xf32>, vector<64x32xf32>, vector<12x32xf32> -> vector<12x32xf32>
    %326 = arith.addf %293, %325 : vector<12x32xf32>
    %327 = vector.broadcast %234 : vector<1x32xf32> to vector<12x32xf32>
    %328 = arith.addf %326, %327 : vector<12x32xf32>
    %c696 = arith.constant 696 : index
    %c0_118 = arith.constant 0 : index
    %329 = vector.load %arg3[%c696, %c0_118] : memref<952x128xf32, #tpu.memory_space<vmem>>, vector<32x64xf32>
    %c728 = arith.constant 728 : index
    %c0_119 = arith.constant 0 : index
    %330 = vector.load %arg3[%c728, %c0_119] : memref<952x128xf32, #tpu.memory_space<vmem>>, vector<1x64xf32>
    %cst_120 = arith.constant dense<0.000000e+00> : vector<12x64xf32>
    %331 = tpu.matmul %328, %329, %cst_120 {dimension_numbers = #tpu.dot_dimension_numbers<[1], [0], [0], [1], [0, 0, 1, 1], [], []>} : vector<12x32xf32>, vector<32x64xf32>, vector<12x64xf32> -> vector<12x64xf32>
    %332 = vector.broadcast %330 : vector<1x64xf32> to vector<12x64xf32>
    %333 = arith.addf %331, %332 : vector<12x64xf32>
    %334 = vector.extract_strided_slice %333 {offsets = [0, 0], sizes = [12, 32], strides = [1, 1]} : vector<12x64xf32> to vector<12x32xf32>
    %335 = vector.extract_strided_slice %333 {offsets = [0, 32], sizes = [12, 32], strides = [1, 1]} : vector<12x64xf32> to vector<12x32xf32>
    %c664 = arith.constant 664 : index
    %c0_121 = arith.constant 0 : index
    %336 = vector.load %arg3[%c664, %c0_121] : memref<952x128xf32, #tpu.memory_space<vmem>>, vector<16x32xf32>
    %cst_122 = arith.constant dense<0.000000e+00> : vector<16x12xf32>
    %337 = tpu.matmul %336, %334, %cst_122 {dimension_numbers = #tpu.dot_dimension_numbers<[1], [1], [0], [0], [0, 0, 1, 0], [], []>} : vector<16x32xf32>, vector<12x32xf32>, vector<16x12xf32> -> vector<16x12xf32>
    %c768 = arith.constant 768 : index
    %c0_123 = arith.constant 0 : index
    %338 = vector.load %arg3[%c768, %c0_123] : memref<952x128xf32, #tpu.memory_space<vmem>>, vector<16x12xf32>
    %339 = arith.addf %337, %338 : vector<16x12xf32>
    %cst_124 = arith.constant dense<0xFF800000> : vector<16xf32>
    %340 = vector.multi_reduction <maximumf>, %339, %cst_124 [1] : vector<16x12xf32> to vector<16xf32>
    %341 = vector.shape_cast %340 : vector<16xf32> to vector<16x1xf32>
    %342 = vector.broadcast %341 : vector<16x1xf32> to vector<16x12xf32>
    %343 = arith.subf %339, %342 : vector<16x12xf32>
    %344 = math.exp %343 : vector<16x12xf32>
    %cst_125 = arith.constant dense<0.000000e+00> : vector<16xf32>
    %345 = vector.multi_reduction <add>, %344, %cst_125 [1] : vector<16x12xf32> to vector<16xf32>
    %346 = vector.shape_cast %345 : vector<16xf32> to vector<16x1xf32>
    %347 = tpu.reciprocal %346 {approx = true} : vector<16x1xf32> -> vector<16x1xf32>
    %348 = vector.broadcast %347 : vector<16x1xf32> to vector<16x12xf32>
    %349 = arith.mulf %344, %348 : vector<16x12xf32>
    %cst_126 = arith.constant dense<0.000000e+00> : vector<16x32xf32>
    %350 = tpu.matmul %349, %335, %cst_126 {dimension_numbers = #tpu.dot_dimension_numbers<[1], [0], [0], [1], [0, 0, 1, 1], [], []>} : vector<16x12xf32>, vector<12x32xf32>, vector<16x32xf32> -> vector<16x32xf32>
    %c680 = arith.constant 680 : index
    %c0_127 = arith.constant 0 : index
    %351 = vector.load %arg3[%c680, %c0_127] : memref<952x128xf32, #tpu.memory_space<vmem>>, vector<16x32xf32>
    %352 = arith.mulf %350, %351 : vector<16x32xf32>
    %353 = vector.extract_strided_slice %352 {offsets = [0, 0], sizes = [4, 32], strides = [1, 1]} : vector<16x32xf32> to vector<4x32xf32>
    %354 = vector.extract_strided_slice %352 {offsets = [4, 0], sizes = [4, 32], strides = [1, 1]} : vector<16x32xf32> to vector<4x32xf32>
    %355 = arith.addf %353, %354 : vector<4x32xf32>
    %356 = vector.extract_strided_slice %352 {offsets = [8, 0], sizes = [4, 32], strides = [1, 1]} : vector<16x32xf32> to vector<4x32xf32>
    %357 = arith.addf %355, %356 : vector<4x32xf32>
    %358 = vector.extract_strided_slice %352 {offsets = [12, 0], sizes = [4, 32], strides = [1, 1]} : vector<16x32xf32> to vector<4x32xf32>
    %359 = arith.addf %357, %358 : vector<4x32xf32>
    %c736 = arith.constant 736 : index
    %c0_128 = arith.constant 0 : index
    %360 = vector.load %arg3[%c736, %c0_128] : memref<952x128xf32, #tpu.memory_space<vmem>>, vector<32x32xf32>
    %cst_129 = arith.constant dense<0.000000e+00> : vector<4x32xf32>
    %361 = tpu.matmul %359, %360, %cst_129 {dimension_numbers = #tpu.dot_dimension_numbers<[1], [0], [0], [1], [0, 0, 1, 1], [], []>} : vector<4x32xf32>, vector<32x32xf32>, vector<4x32xf32> -> vector<4x32xf32>
    %c784 = arith.constant 784 : index
    %c0_130 = arith.constant 0 : index
    %362 = vector.load %arg3[%c784, %c0_130] : memref<952x128xf32, #tpu.memory_space<vmem>>, vector<12x3xf32>
    %cst_131 = arith.constant dense<0.000000e+00> : vector<16x3xf32>
    %363 = tpu.matmul %349, %362, %cst_131 {dimension_numbers = #tpu.dot_dimension_numbers<[1], [0], [0], [1], [0, 0, 1, 1], [], []>} : vector<16x12xf32>, vector<12x3xf32>, vector<16x3xf32> -> vector<16x3xf32>
    %364 = vector.extract_strided_slice %363 {offsets = [0, 0], sizes = [4, 3], strides = [1, 1]} : vector<16x3xf32> to vector<4x3xf32>
    %365 = vector.extract_strided_slice %363 {offsets = [4, 0], sizes = [4, 3], strides = [1, 1]} : vector<16x3xf32> to vector<4x3xf32>
    %366 = arith.addf %364, %365 : vector<4x3xf32>
    %367 = vector.extract_strided_slice %363 {offsets = [8, 0], sizes = [4, 3], strides = [1, 1]} : vector<16x3xf32> to vector<4x3xf32>
    %368 = arith.addf %366, %367 : vector<4x3xf32>
    %369 = vector.extract_strided_slice %363 {offsets = [12, 0], sizes = [4, 3], strides = [1, 1]} : vector<16x3xf32> to vector<4x3xf32>
    %370 = arith.addf %368, %369 : vector<4x3xf32>
    %cst_132 = arith.constant 2.500000e-01 : f32
    %371 = vector.broadcast %cst_132 : f32 to vector<4x3xf32>
    %372 = arith.mulf %370, %371 : vector<4x3xf32>
    %c800 = arith.constant 800 : index
    %c0_133 = arith.constant 0 : index
    %373 = vector.load %arg3[%c800, %c0_133] : memref<952x128xf32, #tpu.memory_space<vmem>>, vector<32x64xf32>
    %cst_134 = arith.constant dense<0.000000e+00> : vector<4x64xf32>
    %374 = tpu.matmul %361, %373, %cst_134 {dimension_numbers = #tpu.dot_dimension_numbers<[1], [0], [0], [1], [0, 0, 1, 1], [], []>} : vector<4x32xf32>, vector<32x64xf32>, vector<4x64xf32> -> vector<4x64xf32>
    %c832 = arith.constant 832 : index
    %c0_135 = arith.constant 0 : index
    %375 = vector.load %arg3[%c832, %c0_135] : memref<952x128xf32, #tpu.memory_space<vmem>>, vector<1x64xf32>
    %376 = vector.broadcast %375 : vector<1x64xf32> to vector<4x64xf32>
    %377 = arith.addf %374, %376 : vector<4x64xf32>
    %cst_136 = arith.constant 5.000000e-01 : f32
    %378 = vector.broadcast %cst_136 : f32 to vector<4x64xf32>
    %379 = arith.mulf %378, %377 : vector<4x64xf32>
    %cst_137 = arith.constant 0.707106769 : f32
    %380 = vector.broadcast %cst_137 : f32 to vector<4x64xf32>
    %381 = arith.mulf %377, %380 : vector<4x64xf32>
    %382 = math.erf %381 : vector<4x64xf32>
    %cst_138 = arith.constant 1.000000e+00 : f32
    %383 = vector.broadcast %cst_138 : f32 to vector<4x64xf32>
    %384 = arith.addf %383, %382 : vector<4x64xf32>
    %385 = arith.mulf %379, %384 : vector<4x64xf32>
    %c840 = arith.constant 840 : index
    %c0_139 = arith.constant 0 : index
    %386 = vector.load %arg3[%c840, %c0_139] : memref<952x128xf32, #tpu.memory_space<vmem>>, vector<64x32xf32>
    %cst_140 = arith.constant dense<0.000000e+00> : vector<4x32xf32>
    %387 = tpu.matmul %385, %386, %cst_140 {dimension_numbers = #tpu.dot_dimension_numbers<[1], [0], [0], [1], [0, 0, 1, 1], [], []>} : vector<4x64xf32>, vector<64x32xf32>, vector<4x32xf32> -> vector<4x32xf32>
    %c904 = arith.constant 904 : index
    %c0_141 = arith.constant 0 : index
    %388 = vector.load %arg3[%c904, %c0_141] : memref<952x128xf32, #tpu.memory_space<vmem>>, vector<1x32xf32>
    %389 = vector.broadcast %388 : vector<1x32xf32> to vector<4x32xf32>
    %390 = arith.addf %387, %389 : vector<4x32xf32>
    %cst_142 = arith.constant 5.000000e-01 : f32
    %391 = vector.broadcast %cst_142 : f32 to vector<4x32xf32>
    %392 = arith.mulf %391, %390 : vector<4x32xf32>
    %cst_143 = arith.constant 0.707106769 : f32
    %393 = vector.broadcast %cst_143 : f32 to vector<4x32xf32>
    %394 = arith.mulf %390, %393 : vector<4x32xf32>
    %395 = math.erf %394 : vector<4x32xf32>
    %cst_144 = arith.constant 1.000000e+00 : f32
    %396 = vector.broadcast %cst_144 : f32 to vector<4x32xf32>
    %397 = arith.addf %396, %395 : vector<4x32xf32>
    %398 = arith.mulf %392, %397 : vector<4x32xf32>
    %c912 = arith.constant 912 : index
    %c0_145 = arith.constant 0 : index
    %399 = vector.load %arg3[%c912, %c0_145] : memref<952x128xf32, #tpu.memory_space<vmem>>, vector<32x8xf32>
    %cst_146 = arith.constant dense<0.000000e+00> : vector<4x8xf32>
    %400 = tpu.matmul %398, %399, %cst_146 {dimension_numbers = #tpu.dot_dimension_numbers<[1], [0], [0], [1], [0, 0, 1, 1], [], []>} : vector<4x32xf32>, vector<32x8xf32>, vector<4x8xf32> -> vector<4x8xf32>
    %c944 = arith.constant 944 : index
    %c0_147 = arith.constant 0 : index
    %401 = vector.load %arg3[%c944, %c0_147] : memref<952x128xf32, #tpu.memory_space<vmem>>, vector<1x8xf32>
    %402 = vector.broadcast %401 : vector<1x8xf32> to vector<4x8xf32>
    %403 = arith.addf %400, %402 : vector<4x8xf32>
    %cst_148 = arith.constant 0.000000e+00 : f32
    %404 = vector.broadcast %cst_148 : f32 to vector<4x117xf32>
    %405 = tpu.concatenate %403, %372, %404 in 1 : vector<4x8xf32>, vector<4x3xf32>, vector<4x117xf32> -> vector<4x128xf32>
    %c0_149 = arith.constant 0 : index
    %c0_150 = arith.constant 0 : index
    %406 = vector.load %arg4[%c0_149, %c0_150] : memref<4x128xf32, #tpu.memory_space<vmem>>, vector<4x128xf32>
    tpu.vector_store %arg4[%c0_149, %c0_150], %405 {strides = array<i32>} : memref<4x128xf32, #tpu.memory_space<vmem>>, vector<4x128xf32>,
    return
  }
}

</mosaic_0001>

<llo_original>
// kernel: _fused_forward.1
$region0: #{_fused_forward.1}
  #allocation0 [shape = 'u32[]', space=smem, size = 0x4, offset = 0x4, fixed_abs, tag = 'smem constant byte address 0x4 - core index']
  #allocation1 [shape = 'u32[144,128]{1,0:T(1,128)}', space=vmem, size = 0x12000, scoped, tag = 'internal scratch']
  %s0 = inlined_call_operand.hbm [shape: f32[4,64], index: 0, kind: input, shape index: {}]
  %s1 = inlined_call_operand.hbm [shape: f32[4,48], index: 1, kind: input, shape index: {}]
  %s2 = inlined_call_operand.vmem [shape: f32[4,32], index: 2, kind: input, shape index: {}]
  %s3 = inlined_call_operand.hbm [shape: f32[952,128], index: 3, kind: input, shape index: {}]
  %s4 = inlined_call_operand.vmem [shape: f32[4,128], index: 4, kind: output, shape index: {}]
  %s5 = sld [smem:[#allocation0]]
  $region38: #{_fused_forward.1} parent=0
    _
  %s7 = ssub.s32 1, %s5
  %s8 = scalar_select 0, %s7, %s5
  $region1: #{_fused_forward.1} parent=0
    #allocation2 [shape = 'u8[2048]{0}', space=vmem, size = 0x800, scoped, tag = 'input window, operand 0, single buffered']
    #allocation3 [shape = 's32[1]{0}', space=sflag, size = 0x4, scoped, tag = 'scoped memory for _fused_forward.1']
    #allocation4 [shape = 'u8[2048]{0}', space=vmem, size = 0x800, scoped, tag = 'input window, operand 1, single buffered']
    #allocation5 [shape = 's32[1]{0}', space=sflag, size = 0x4, scoped, tag = 'scoped memory for _fused_forward.1']
    #allocation6 [shape = 'u8[487424]{0}', space=vmem, size = 0x77000, scoped, tag = 'input window, operand 3, single buffered']
    %9 = vsyncpa [#allocation3], 0
    %10 = vsyncpa [#allocation5], 0
    // Predicated region
    $region2: #{_fused_forward.1} parent=1 // pred_check
      _
    $region3: #{_fused_forward.1} parent=1 // pred_check_branch
      %12 = sbr.rel (0) target = $region5
    $region4: #{_fused_forward.1} parent=1 // pred_region
      %s14 = ssub.s32 64, 64
      %15 = vsyncadd [#allocation3], %s14
      %s17 = sshll.u32 [#allocation2], 4
      %s18 = int_to_ptr.vmem [resolvable:$true] %s17
      %20 = dma.hbm_to_vmem [thread:$0]  %s0, 64, %s18, [#allocation3]
    $region5: #{_fused_forward.1} parent=1 // pred_fallthru
      _
    // Predicated region
    $region6: #{_fused_forward.1} parent=1 // pred_check
      _
    $region7: #{_fused_forward.1} parent=1 // pred_check_branch
      %22 = sbr.rel (0) target = $region9
    $region8: #{_fused_forward.1} parent=1 // pred_region
      %s24 = ssub.s32 64, 64
      %25 = vsyncadd [#allocation5], %s24
      %s27 = sshll.u32 [#allocation4], 4
      %s28 = int_to_ptr.vmem [resolvable:$true] %s27
      %30 = dma.hbm_to_vmem [thread:$0]  %s1, 64, %s28, [#allocation5]
    $region9: #{_fused_forward.1} parent=1 // pred_fallthru
      _
    // Predicated region
    $region10: #{_fused_forward.1} parent=1 // pred_check
      _
    $region11: #{_fused_forward.1} parent=1 // pred_check_branch
      %32 = sbr.rel (0) target = $region13
    $region12: #{_fused_forward.1} parent=1 // pred_region
      _
    $region13: #{_fused_forward.1} parent=1 // pred_fallthru
      _
    // Predicated region
    $region14: #{_fused_forward.1} parent=1 // pred_check
      _
    $region15: #{_fused_forward.1} parent=1 // pred_check_branch
      %34 = sbr.rel (0) target = $region17
    $region16: #{_fused_forward.1} parent=1 // pred_region
      %s36 = ssub.s32 15232, 15232
      %37 = vsyncadd [#allocation5], %s36
      %s38 = sshll.u32 [#allocation6], 4
      %s39 = int_to_ptr.vmem [resolvable:$true] %s38
      %44 = dma.hbm_to_vmem [thread:$0]  %s3, 15232, %s39, [#allocation5], 128, 128, 8
    $region17: #{_fused_forward.1} parent=1 // pred_fallthru
      _
    // Predicated region
    $region18: #{_fused_forward.1} parent=1 // pred_check
      _
    $region19: #{_fused_forward.1} parent=1 // pred_check_branch
      %46 = sbr.rel (0) target = $region21
    $region20: #{_fused_forward.1} parent=1 // pred_region
      %47 = dma.done [#allocation3], 64
    $region21: #{_fused_forward.1} parent=1 // pred_fallthru
      _
    // Predicated region
    $region22: #{_fused_forward.1} parent=1 // pred_check
      _
    $region23: #{_fused_forward.1} parent=1 // pred_check_branch
      %49 = sbr.rel (0) target = $region25
    $region24: #{_fused_forward.1} parent=1 // pred_region
      %50 = dma.done [#allocation5], 64
    $region25: #{_fused_forward.1} parent=1 // pred_fallthru
      _
    // Predicated region
    $region26: #{_fused_forward.1} parent=1 // pred_check
      _
    $region27: #{_fused_forward.1} parent=1 // pred_check_branch
      %52 = sbr.rel (0) target = $region29
    $region28: #{_fused_forward.1} parent=1 // pred_region
      %53 = dma.done [#allocation5], 15232
    $region29: #{_fused_forward.1} parent=1 // pred_fallthru
      _
    %v54 = vld [vmem:[#allocation6] sm:$0x1]
    %v55 = vld [vmem:[#allocation6 + $0x1] sm:$0x1]
    %v56 = vld [vmem:[#allocation6 + $0x8] sm:$0xff]
    %v57 = vld [vmem:[#allocation6 + $0x10] sm:$0xff]
    %v58 = vld [vmem:[#allocation6 + $0x18] sm:$0xff]
    %v59 = vld [vmem:[#allocation6 + $0x20] sm:$0xff]
    %v60 = vld [vmem:[#allocation6 + $0x28] sm:$0xff]
    %v61 = vld [vmem:[#allocation6 + $0x30] sm:$0xff]
    %v62 = vld [vmem:[#allocation6 + $0x38] sm:$0xff]
    %v63 = vld [vmem:[#allocation6 + $0x40] sm:$0xff]
    %v64 = vld [vmem:[#allocation6 + $0x48] sm:$0x1]
    %v65 = vld [vmem:[#allocation2] sm:$0xf]
    %vm66 = vcmask 519168
    %v67 = vsel %vm66, %v65, 0.0
    %68 = vadd.xlane.f32.xlu0 %v67
    %v69 = vpop.xlane.xlu0 %68
    %v70 = vrcp.pop 64.0
    %v71 = vmul.f32 %v69, %v70
    %v72 = vsub.f32 %v65, %v71
    %v73 = vmul.f32 %v72, %v72
    %v74 = vsel %vm66, %v73, 0.0
    %75 = vadd.xlane.f32.xlu0 %v74
    %v76 = vpop.xlane.xlu0 %75
    %v77 = vmul.f32 %v76, %v70
    %v78 = vadd.f32 %v77, 1e-05
    %v79 = vrsqrt.pop %v78
    %v80 = vmul.f32 %v72, %v79
    %v81 = vlaneseq
    %v82 = vshrl.u32 %v81, 7
    %v83 = vsub.s32 0, %v82
    %v84 = vrot.slane %v54, %v83
    %v85 = vmul.f32 %v80, %v84
    %v86 = vlaneseq
    %v87 = vshrl.u32 %v86, 7
    %v88 = vsub.s32 0, %v87
    %v89 = vrot.slane %v55, %v88
    %v90 = vadd.f32 %v85, %v89
    %v91 = vlaneseq
    %v92 = vshrl.u32 %v91, 7
    %v93 = vsub.s32 0, %v92
    %v94 = vrot.slane %v64, %v93
    %vm95 = vcmask 523264
    %v97 = vsel %vm95, %v90, 0
    %99 = vmatprep.subr.mxu0 0.0
    %100 = vmatpush1.msra.mxu0 %v56
    %101 = vmatprep.subr.mxu0 0.0
    %102 = vmatpush1.msra.mxu0 %v57
    %103 = vmatprep.subr.mxu0 0.0
    %104 = vmatpush1.msra.mxu0 %v58
    %105 = vmatprep.subr.mxu0 0.0
    %106 = vmatpush1.msra.mxu0 %v59
    %107 = vmatprep.subr.mxu0 0.0
    %108 = vmatpush1.msra.mxu0 %v60
    %109 = vmatprep.subr.mxu0 0.0
    %110 = vmatpush1.msra.mxu0 %v61
    %111 = vmatprep.subr.mxu0 0.0
    %112 = vmatpush1.msra.mxu0 %v62
    %113 = vmatprep.subr.mxu0 0.0
    %114 = vmatpush1.msra.mxu0 %v63
    %115 = vmatprep.subr.mxu0 0.0
    %116 = vmatpush1.msra.mxu0 0.0
    %117 = vmatprep.subr.mxu0 0.0
    %118 = vmatpush1.msra.mxu0 0.0
    %119 = vmatprep.subr.mxu0 0.0
    %120 = vmatpush1.msra.mxu0 0.0
    %121 = vmatprep.subr.mxu0 0.0
    %122 = vmatpush1.msra.mxu0 0.0
    %123 = vmatprep.subr.mxu0 0.0
    %124 = vmatpush1.msra.mxu0 0.0
    %125 = vmatprep.subr.mxu0 0.0
    %126 = vmatpush1.msra.mxu0 0.0
    %127 = vmatprep.subr.mxu0 0.0
    %128 = vmatpush1.msra.mxu0 0.0
    %129 = vmatprep.subr.mxu0 0.0
    %130 = vmatpush1.msra.mxu0 0.0
    %131 = vmatprep.subr.mxu0 0.0
    %132 = vmatpush1.msra.mxu0 0.0
    %133 = vmatprep.subr.mxu0 0.0
    %134 = vmatpush1.msra.mxu0 0.0
    %135 = vmatprep.subr.mxu0 0.0
    %136 = vmatpush1.msra.mxu0 0.0
    %137 = vmatprep.subr.mxu0 0.0
    %138 = vmatpush1.msra.mxu0 0.0
    %139 = vmatprep.subr.mxu0 0.0
    %140 = vmatpush1.msra.mxu0 0.0
    %141 = vmatprep.subr.mxu0 0.0
    %142 = vmatpush1.msra.mxu0 0.0
    %143 = vmatprep.subr.mxu0 0.0
    %144 = vmatpush1.msra.mxu0 0.0
    %145 = vmatprep.subr.mxu0 0.0
    %146 = vmatpush1.msra.mxu0 0.0
    %147 = vmatprep.subr.mxu0 0.0
    %148 = vmatpush1.msra.mxu0 0.0
    %149 = vmatprep.subr.mxu0 0.0
    %150 = vmatpush1.msra.mxu0 0.0
    %151 = vmatprep.subr.mxu0 0.0
    %152 = vmatpush1.msra.mxu0 0.0
    %153 = vmatprep.subr.mxu0 0.0
    %154 = vmatpush1.msra.mxu0 0.0
    %155 = vmatprep.subr.mxu0 0.0
    %156 = vmatpush1.msra.mxu0 0.0
    %157 = vmatprep.subr.mxu0 0.0
    %158 = vmatpush1.msra.mxu0 0.0
    %159 = vmatprep.subr.mxu0 0.0
    %160 = vmatpush1.msra.mxu0 0.0
    %161 = vmatprep.subr.mxu0 0.0
    %162 = vmatpush1.msra.mxu0 0.0
    %163 = vmatprep.mubr.f32.mxu0 0.0
    %164 = vmatmul.mubr.f32.gmra.mrb[0].mxu0 %v97
    %v165 = vpop.f32.mrb[0].mxu0
    %v166 = vadd.f32 %v94, %v165
    %v167 = vpop.f32.mrb[0].mxu0
    %168 = vdwg.mxu0
    %v169 = vmul.f32 %v166, 0.5
    %v170 = vmul.f32 %v166, 0.70710677
    %v171 = verf.f32.pop %v170
    %v172 = vadd.f32 %v171, 1.0
    %v173 = vmul.f32 %v169, %v172
    %v174 = vld [vmem:[#allocation6 + $0xc3] sm:$0x1]
    %v175 = vlaneseq
    %v176 = vshrl.u32 %v175, 7
    %v177 = vsub.s32 0, %v176
    %v178 = vrot.slane %v174, %v177
    %v179 = vmul.f32 %v173, %v178
    %v180 = vld [vmem:[#allocation6 + $0xc0] sm:$0x1]
    %v181 = vlaneseq
    %v182 = vshrl.u32 %v181, 7
    %v183 = vsub.s32 0, %v182
    %v184 = vrot.slane %v180, %v183
    %v185 = vadd.f32 %v179, %v184
    %v186 = vld [vmem:[#allocation6 + $0x50] sm:$0x1]
    %v187 = vld [vmem:[#allocation6 + $0x51] sm:$0x1]
    %v188 = vld [vmem:[#allocation6 + $0x58] sm:$0xff]
    %v189 = vld [vmem:[#allocation6 + $0x60] sm:$0xff]
    %v190 = vld [vmem:[#allocation6 + $0x68] sm:$0xff]
    %v191 = vld [vmem:[#allocation6 + $0x70] sm:$0xff]
    %v192 = vld [vmem:[#allocation6 + $0x78] sm:$0xff]
    %v193 = vld [vmem:[#allocation6 + $0x80] sm:$0xff]
    %v194 = vld [vmem:[#allocation6 + $0x88] sm:$0x1]
    %v195 = vld [vmem:[#allocation4] sm:$0xf]
    %vm196 = vcmask 388096
    %v197 = vsel %vm196, %v195, 0.0
    %198 = vadd.xlane.f32.xlu0 %v197
    %v199 = vpop.xlane.xlu0 %198
    %v200 = vrcp.pop 48.0
    %v201 = vmul.f32 %v199, %v200
    %v202 = vsub.f32 %v195, %v201
    %v203 = vmul.f32 %v202, %v202
    %v204 = vsel %vm196, %v203, 0.0
    %205 = vadd.xlane.f32.xlu0 %v204
    %v206 = vpop.xlane.xlu0 %205
    %v207 = vmul.f32 %v206, %v200
    %v208 = vadd.f32 %v207, 1e-05
    %v209 = vrsqrt.pop %v208
    %v210 = vmul.f32 %v202, %v209
    %v211 = vlaneseq
    %v212 = vshrl.u32 %v211, 7
    %v213 = vsub.s32 0, %v212
    %v214 = vrot.slane %v186, %v213
    %v215 = vmul.f32 %v210, %v214
    %v216 = vlaneseq
    %v217 = vshrl.u32 %v216, 7
    %v218 = vsub.s32 0, %v217
    %v219 = vrot.slane %v187, %v218
    %v220 = vadd.f32 %v215, %v219
    %v221 = vlaneseq
    %v222 = vshrl.u32 %v221, 7
    %v223 = vsub.s32 0, %v222
    %v224 = vrot.slane %v194, %v223
    %vm225 = vcmask 392192
    %v227 = vsel %vm225, %v220, 0
    %229 = vmatprep.subr.mxu0 0.0
    %230 = vmatpush1.msra.mxu0 %v188
    %231 = vmatprep.subr.mxu0 0.0
    %232 = vmatpush1.msra.mxu0 %v189
    %233 = vmatprep.subr.mxu0 0.0
    %234 = vmatpush1.msra.mxu0 %v190
    %235 = vmatprep.subr.mxu0 0.0
    %236 = vmatpush1.msra.mxu0 %v191
    %237 = vmatprep.subr.mxu0 0.0
    %238 = vmatpush1.msra.mxu0 %v192
    %239 = vmatprep.subr.mxu0 0.0
    %240 = vmatpush1.msra.mxu0 %v193
    %241 = vmatprep.subr.mxu0 0.0
    %242 = vmatpush1.msra.mxu0 0.0
    %243 = vmatprep.subr.mxu0 0.0
    %244 = vmatpush1.msra.mxu0 0.0
    %245 = vmatprep.subr.mxu0 0.0
    %246 = vmatpush1.msra.mxu0 0.0
    %247 = vmatprep.subr.mxu0 0.0
    %248 = vmatpush1.msra.mxu0 0.0
    %249 = vmatprep.subr.mxu0 0.0
    %250 = vmatpush1.msra.mxu0 0.0
    %251 = vmatprep.subr.mxu0 0.0
    %252 = vmatpush1.msra.mxu0 0.0
    %253 = vmatprep.subr.mxu0 0.0
    %254 = vmatpush1.msra.mxu0 0.0
    %255 = vmatprep.subr.mxu0 0.0
    %256 = vmatpush1.msra.mxu0 0.0
    %257 = vmatprep.subr.mxu0 0.0
    %258 = vmatpush1.msra.mxu0 0.0
    %259 = vmatprep.subr.mxu0 0.0
    %260 = vmatpush1.msra.mxu0 0.0
    %261 = vmatprep.subr.mxu0 0.0
    %262 = vmatpush1.msra.mxu0 0.0
    %263 = vmatprep.subr.mxu0 0.0
    %264 = vmatpush1.msra.mxu0 0.0
    %265 = vmatprep.subr.mxu0 0.0
    %266 = vmatpush1.msra.mxu0 0.0
    %267 = vmatprep.subr.mxu0 0.0
    %268 = vmatpush1.msra.mxu0 0.0
    %269 = vmatprep.subr.mxu0 0.0
    %270 = vmatpush1.msra.mxu0 0.0
    %271 = vmatprep.subr.mxu0 0.0
    %272 = vmatpush1.msra.mxu0 0.0
    %273 = vmatprep.subr.mxu0 0.0
    %274 = vmatpush1.msra.mxu0 0.0
    %275 = vmatprep.subr.mxu0 0.0
    %276 = vmatpush1.msra.mxu0 0.0
    %277 = vmatprep.subr.mxu0 0.0
    %278 = vmatpush1.msra.mxu0 0.0
    %279 = vmatprep.subr.mxu0 0.0
    %280 = vmatpush1.msra.mxu0 0.0
    %281 = vmatprep.subr.mxu0 0.0
    %282 = vmatpush1.msra.mxu0 0.0
    %283 = vmatprep.subr.mxu0 0.0
    %284 = vmatpush1.msra.mxu0 0.0
    %285 = vmatprep.subr.mxu0 0.0
    %286 = vmatpush1.msra.mxu0 0.0
    %287 = vmatprep.subr.mxu0 0.0
    %288 = vmatpush1.msra.mxu0 0.0
    %289 = vmatprep.subr.mxu0 0.0
    %290 = vmatpush1.msra.mxu0 0.0
    %291 = vmatprep.subr.mxu0 0.0
    %292 = vmatpush1.msra.mxu0 0.0
    %293 = vmatprep.mubr.f32.mxu0 0.0
    %294 = vmatmul.mubr.f32.gmra.mrb[0].mxu0 %v227
    %v295 = vpop.f32.mrb[0].mxu0
    %v296 = vadd.f32 %v224, %v295
    %v297 = vpop.f32.mrb[0].mxu0
    %298 = vdwg.mxu0
    %v299 = vmul.f32 %v296, 0.5
    %v300 = vmul.f32 %v296, 0.70710677
    %v301 = verf.f32.pop %v300
    %v302 = vadd.f32 %v301, 1.0
    %v303 = vmul.f32 %v299, %v302
    %v304 = vld [vmem:[#allocation6 + $0xc4] sm:$0x1]
    %v305 = vlaneseq
    %v306 = vshrl.u32 %v305, 7
    %v307 = vsub.s32 0, %v306
    %v308 = vrot.slane %v304, %v307
    %v309 = vmul.f32 %v303, %v308
    %v310 = vld [vmem:[#allocation6 + $0xc1] sm:$0x1]
    %v311 = vlaneseq
    %v312 = vshrl.u32 %v311, 7
    %v313 = vsub.s32 0, %v312
    %v314 = vrot.slane %v310, %v313
    %v315 = vadd.f32 %v309, %v314
    %v316 = vld [vmem:[#allocation6 + $0x90] sm:$0x1]
    %v317 = vld [vmem:[#allocation6 + $0x91] sm:$0x1]
    %v318 = vld [vmem:[#allocation6 + $0x98] sm:$0xff]
    %v319 = vld [vmem:[#allocation6 + $0xa0] sm:$0xff]
    %v320 = vld [vmem:[#allocation6 + $0xa8] sm:$0xff]
    %v321 = vld [vmem:[#allocation6 + $0xb0] sm:$0xff]
    %v322 = vld [vmem:[#allocation6 + $0xb8] sm:$0x1]
    %v323 = vld [vmem:[%s2] sm:$0xf]
    %vm324 = vcmask 257024
    %v325 = vsel %vm324, %v323, 0.0
    %326 = vadd.xlane.f32.xlu0 %v325
    %v327 = vpop.xlane.xlu0 %326
    %v328 = vrcp.pop 32.0
    %v329 = vmul.f32 %v327, %v328
    %v330 = vsub.f32 %v323, %v329
    %v331 = vmul.f32 %v330, %v330
    %v332 = vsel %vm324, %v331, 0.0
    %333 = vadd.xlane.f32.xlu0 %v332
    %v334 = vpop.xlane.xlu0 %333
    %v335 = vmul.f32 %v334, %v328
    %v336 = vadd.f32 %v335, 1e-05
    %v337 = vrsqrt.pop %v336
    %v338 = vmul.f32 %v330, %v337
    %v339 = vlaneseq
    %v340 = vshrl.u32 %v339, 7
    %v341 = vsub.s32 0, %v340
    %v342 = vrot.slane %v316, %v341
    %v343 = vmul.f32 %v338, %v342
    %v344 = vlaneseq
    %v345 = vshrl.u32 %v344, 7
    %v346 = vsub.s32 0, %v345
    %v347 = vrot.slane %v317, %v346
    %v348 = vadd.f32 %v343, %v347
    %v349 = vlaneseq
    %v350 = vshrl.u32 %v349, 7
    %v351 = vsub.s32 0, %v350
    %v352 = vrot.slane %v322, %v351
    %vm353 = vcmask 261120
    %v355 = vsel %vm353, %v348, 0
    %357 = vmatprep.subr.mxu0 0.0
    %358 = vmatpush1.msra.mxu0 %v318
    %359 = vmatprep.subr.mxu0 0.0
    %360 = vmatpush1.msra.mxu0 %v319
    %361 = vmatprep.subr.mxu0 0.0
    %362 = vmatpush1.msra.mxu0 %v320
    %363 = vmatprep.subr.mxu0 0.0
    %364 = vmatpush1.msra.mxu0 %v321
    %365 = vmatprep.subr.mxu0 0.0
    %366 = vmatpush1.msra.mxu0 0.0
    %367 = vmatprep.subr.mxu0 0.0
    %368 = vmatpush1.msra.mxu0 0.0
    %369 = vmatprep.subr.mxu0 0.0
    %370 = vmatpush1.msra.mxu0 0.0
    %371 = vmatprep.subr.mxu0 0.0
    %372 = vmatpush1.msra.mxu0 0.0
    %373 = vmatprep.subr.mxu0 0.0
    %374 = vmatpush1.msra.mxu0 0.0
    %375 = vmatprep.subr.mxu0 0.0
    %376 = vmatpush1.msra.mxu0 0.0
    %377 = vmatprep.subr.mxu0 0.0
    %378 = vmatpush1.msra.mxu0 0.0
    %379 = vmatprep.subr.mxu0 0.0
    %380 = vmatpush1.msra.mxu0 0.0
    %381 = vmatprep.subr.mxu0 0.0
    %382 = vmatpush1.msra.mxu0 0.0
    %383 = vmatprep.subr.mxu0 0.0
    %384 = vmatpush1.msra.mxu0 0.0
    %385 = vmatprep.subr.mxu0 0.0
    %386 = vmatpush1.msra.mxu0 0.0
    %387 = vmatprep.subr.mxu0 0.0
    %388 = vmatpush1.msra.mxu0 0.0
    %389 = vmatprep.subr.mxu0 0.0
    %390 = vmatpush1.msra.mxu0 0.0
    %391 = vmatprep.subr.mxu0 0.0
    %392 = vmatpush1.msra.mxu0 0.0
    %393 = vmatprep.subr.mxu0 0.0
    %394 = vmatpush1.msra.mxu0 0.0
    %395 = vmatprep.subr.mxu0 0.0
    %396 = vmatpush1.msra.mxu0 0.0
    %397 = vmatprep.subr.mxu0 0.0
    %398 = vmatpush1.msra.mxu0 0.0
    %399 = vmatprep.subr.mxu0 0.0
    %400 = vmatpush1.msra.mxu0 0.0
    %401 = vmatprep.subr.mxu0 0.0
    %402 = vmatpush1.msra.mxu0 0.0
    %403 = vmatprep.subr.mxu0 0.0
    %404 = vmatpush1.msra.mxu0 0.0
    %405 = vmatprep.subr.mxu0 0.0
    %406 = vmatpush1.msra.mxu0 0.0
    %407 = vmatprep.subr.mxu0 0.0
    %408 = vmatpush1.msra.mxu0 0.0
    %409 = vmatprep.subr.mxu0 0.0
    %410 = vmatpush1.msra.mxu0 0.0
    %411 = vmatprep.subr.mxu0 0.0
    %412 = vmatpush1.msra.mxu0 0.0
    %413 = vmatprep.subr.mxu0 0.0
    %414 = vmatpush1.msra.mxu0 0.0
    %415 = vmatprep.subr.mxu0 0.0
    %416 = vmatpush1.msra.mxu0 0.0
    %417 = vmatprep.subr.mxu0 0.0
    %418 = vmatpush1.msra.mxu0 0.0
    %419 = vmatprep.subr.mxu0 0.0
    %420 = vmatpush1.msra.mxu0 0.0
    %421 = vmatprep.mubr.f32.mxu0 0.0
    %422 = vmatmul.mubr.f32.gmra.mrb[0].mxu0 %v355
    %v423 = vpop.f32.mrb[0].mxu0
    %v424 = vadd.f32 %v352, %v423
    %v425 = vpop.f32.mrb[0].mxu0
    %426 = vdwg.mxu0
    %v427 = vmul.f32 %v424, 0.5
    %v428 = vmul.f32 %v424, 0.70710677
    %v429 = verf.f32.pop %v428
    %v430 = vadd.f32 %v429, 1.0
    %v431 = vmul.f32 %v427, %v430
    %v432 = vld [vmem:[#allocation6 + $0xc5] sm:$0x1]
    %v433 = vlaneseq
    %v434 = vshrl.u32 %v433, 7
    %v435 = vsub.s32 0, %v434
    %v436 = vrot.slane %v432, %v435
    %v437 = vmul.f32 %v431, %v436
    %v438 = vld [vmem:[#allocation6 + $0xc2] sm:$0x1]
    %v439 = vlaneseq
    %v440 = vshrl.u32 %v439, 7
    %v441 = vsub.s32 0, %v440
    %v442 = vrot.slane %v438, %v441
    %v443 = vadd.f32 %v437, %v442
    %v445 = vrot.slane %v315, 4
    %vm447 = vcmask 1043456
    %v448 = vsel %vm447, %v185, %v445
    %v449 = vld [vmem:[#allocation6 + $0xc8] sm:$0xff]
    %v450 = vld [vmem:[#allocation6 + $0xd0] sm:$0xff]
    %v451 = vld [vmem:[#allocation6 + $0xd8] sm:$0xff]
    %v452 = vld [vmem:[#allocation6 + $0xe0] sm:$0xff]
    %v453 = vld [vmem:[#allocation6 + $0xe8] sm:$0xff]
    %v454 = vld [vmem:[#allocation6 + $0xf0] sm:$0xff]
    %v455 = vld [vmem:[#allocation6 + $0xf8] sm:$0xff]
    %v456 = vld [vmem:[#allocation6 + $0x100] sm:$0xff]
    %v457 = vld [vmem:[#allocation6 + $0x108] sm:$0xff]
    %v458 = vld [vmem:[#allocation6 + $0x110] sm:$0xff]
    %v459 = vld [vmem:[#allocation6 + $0x118] sm:$0xff]
    %v460 = vld [vmem:[#allocation6 + $0x120] sm:$0xff]
    %v461 = vld [vmem:[#allocation6 + $0x128] sm:$0x1]
    %v462 = vld [vmem:[#allocation6 + $0x129] sm:$0x1]
    %v463 = vld [vmem:[#allocation6 + $0x12a] sm:$0x1]
    %v464 = vld [vmem:[#allocation6 + $0x12b] sm:$0x1]
    %v465 = vld [vmem:[#allocation6 + $0x12c] sm:$0x1]
    %v466 = vld [vmem:[#allocation6 + $0x12d] sm:$0x1]
    %v467 = vld [vmem:[#allocation6 + $0x130] sm:$0xff]
    %v468 = vld [vmem:[#allocation6 + $0x138] sm:$0xff]
    %v469 = vld [vmem:[#allocation6 + $0x140] sm:$0xff]
    %v470 = vld [vmem:[#allocation6 + $0x148] sm:$0xff]
    %v471 = vld [vmem:[#allocation6 + $0x150] sm:$0x1]
    %v472 = vld [vmem:[#allocation6 + $0x158] sm:$0xff]
    %v473 = vld [vmem:[#allocation6 + $0x160] sm:$0xff]
    %v474 = vld [vmem:[#allocation6 + $0x168] sm:$0xff]
    %v475 = vld [vmem:[#allocation6 + $0x170] sm:$0xff]
    %v476 = vld [vmem:[#allocation6 + $0x178] sm:$0xff]
    %v477 = vld [vmem:[#allocation6 + $0x180] sm:$0xff]
    %v478 = vld [vmem:[#allocation6 + $0x188] sm:$0xff]
    %v479 = vld [vmem:[#allocation6 + $0x190] sm:$0xff]
    %v480 = vld [vmem:[#allocation6 + $0x198] sm:$0x1]
    %v481 = vld [vmem:[#allocation6 + $0x1a0] sm:$0xff]
    %v482 = vld [vmem:[#allocation6 + $0x1a8] sm:$0xff]
    %v483 = vld [vmem:[#allocation6 + $0x1b0] sm:$0xff]
    %v484 = vld [vmem:[#allocation6 + $0x1b8] sm:$0xff]
    %v485 = vld [vmem:[#allocation6 + $0x1c0] sm:$0xff]
    %v486 = vld [vmem:[#allocation6 + $0x1c8] sm:$0xff]
    %v487 = vld [vmem:[#allocation6 + $0x1d0] sm:$0xff]
    %v488 = vld [vmem:[#allocation6 + $0x1d8] sm:$0xff]
    %v489 = vsel %vm353, %v448, 0.0
    %490 = vadd.xlane.f32.xlu0 %v489
    %v491 = vpop.xlane.xlu0 %490
    %v492 = vsel %vm324, %v443, 0.0
    %493 = vadd.xlane.f32.xlu0 %v492
    %v494 = vpop.xlane.xlu0 %493
    %v495 = vmul.f32 %v491, %v328
    %v496 = vmul.f32 %v494, %v328
    %v497 = vsub.f32 %v448, %v495
    %v498 = vsub.f32 %v443, %v496
    %v499 = vmul.f32 %v497, %v497
    %v500 = vmul.f32 %v498, %v498
    %v501 = vsel %vm353, %v499, 0.0
    %502 = vadd.xlane.f32.xlu0 %v501
    %v503 = vpop.xlane.xlu0 %502
    %v504 = vsel %vm324, %v500, 0.0
    %505 = vadd.xlane.f32.xlu0 %v504
    %v506 = vpop.xlane.xlu0 %505
    %v507 = vmul.f32 %v503, %v328
    %v508 = vmul.f32 %v506, %v328
    %v509 = vadd.f32 %v507, 1e-05
    %v510 = vadd.f32 %v508, 1e-05
    %v511 = vrsqrt.pop %v509
    %v512 = vrsqrt.pop %v510
    %v513 = vmul.f32 %v497, %v511
    %v514 = vmul.f32 %v498, %v512
    %v515 = vlaneseq
    %v516 = vshrl.u32 %v515, 7
    %v517 = vsub.s32 0, %v516
    %v518 = vrot.slane %v461, %v517
    %v519 = vmul.f32 %v513, %v518
    %v520 = vmul.f32 %v514, %v518
    %v521 = vlaneseq
    %v522 = vshrl.u32 %v521, 7
    %v523 = vsub.s32 0, %v522
    %v524 = vrot.slane %v462, %v523
    %v525 = vadd.f32 %v519, %v524
    %v526 = vadd.f32 %v520, %v524
    %v527 = vlaneseq
    %v528 = vshrl.u32 %v527, 7
    %v529 = vsub.s32 0, %v528
    %v530 = vrot.slane %v471, %v529
    %v532 = vsel %vm353, %v525, 0
    %v535 = vsel %vm353, %v526, 0
    %537 = vmatprep.subr.mxu0 0.0
    %538 = vmatpush1.msra.mxu0 %v467
    %539 = vmatprep.subr.mxu0 0.0
    %540 = vmatpush1.msra.mxu0 %v468
    %541 = vmatprep.subr.mxu0 0.0
    %542 = vmatpush1.msra.mxu0 %v469
    %543 = vmatprep.subr.mxu0 0.0
    %544 = vmatpush1.msra.mxu0 %v470
    %545 = vmatprep.subr.mxu0 0.0
    %546 = vmatpush1.msra.mxu0 0.0
    %547 = vmatprep.subr.mxu0 0.0
    %548 = vmatpush1.msra.mxu0 0.0
    %549 = vmatprep.subr.mxu0 0.0
    %550 = vmatpush1.msra.mxu0 0.0
    %551 = vmatprep.subr.mxu0 0.0
    %552 = vmatpush1.msra.mxu0 0.0
    %553 = vmatprep.subr.mxu0 0.0
    %554 = vmatpush1.msra.mxu0 0.0
    %555 = vmatprep.subr.mxu0 0.0
    %556 = vmatpush1.msra.mxu0 0.0
    %557 = vmatprep.subr.mxu0 0.0
    %558 = vmatpush1.msra.mxu0 0.0
    %559 = vmatprep.subr.mxu0 0.0
    %560 = vmatpush1.msra.mxu0 0.0
    %561 = vmatprep.subr.mxu0 0.0
    %562 = vmatpush1.msra.mxu0 0.0
    %563 = vmatprep.subr.mxu0 0.0
    %564 = vmatpush1.msra.mxu0 0.0
    %565 = vmatprep.subr.mxu0 0.0
    %566 = vmatpush1.msra.mxu0 0.0
    %567 = vmatprep.subr.mxu0 0.0
    %568 = vmatpush1.msra.mxu0 0.0
    %569 = vmatprep.subr.mxu0 0.0
    %570 = vmatpush1.msra.mxu0 0.0
    %571 = vmatprep.subr.mxu0 0.0
    %572 = vmatpush1.msra.mxu0 0.0
    %573 = vmatprep.subr.mxu0 0.0
    %574 = vmatpush1.msra.mxu0 0.0
    %575 = vmatprep.subr.mxu0 0.0
    %576 = vmatpush1.msra.mxu0 0.0
    %577 = vmatprep.subr.mxu0 0.0
    %578 = vmatpush1.msra.mxu0 0.0
    %579 = vmatprep.subr.mxu0 0.0
    %580 = vmatpush1.msra.mxu0 0.0
    %581 = vmatprep.subr.mxu0 0.0
    %582 = vmatpush1.msra.mxu0 0.0
    %583 = vmatprep.subr.mxu0 0.0
    %584 = vmatpush1.msra.mxu0 0.0
    %585 = vmatprep.subr.mxu0 0.0
    %586 = vmatpush1.msra.mxu0 0.0
    %587 = vmatprep.subr.mxu0 0.0
    %588 = vmatpush1.msra.mxu0 0.0
    %589 = vmatprep.subr.mxu0 0.0
    %590 = vmatpush1.msra.mxu0 0.0
    %591 = vmatprep.subr.mxu0 0.0
    %592 = vmatpush1.msra.mxu0 0.0
    %593 = vmatprep.subr.mxu0 0.0
    %594 = vmatpush1.msra.mxu0 0.0
    %595 = vmatprep.subr.mxu0 0.0
    %596 = vmatpush1.msra.mxu0 0.0
    %597 = vmatprep.subr.mxu0 0.0
    %598 = vmatpush1.msra.mxu0 0.0
    %599 = vmatprep.subr.mxu0 0.0
    %600 = vmatpush1.msra.mxu0 0.0
    %601 = vmatprep.mubr.f32.mxu0 0.0
    %602 = vmatmul.mubr.f32.gmra.mrb[0].mxu0 %v532
    %v603 = vpop.f32.mrb[0].mxu0
    %v604 = vadd.f32 %v530, %v603
    %v605 = vpop.f32.mrb[0].mxu0
    %606 = vmatprep.mubr.f32.mxu0 0.0
    %607 = vmatmul.mubr.f32.gmra.mrb[0].mxu0 %v535
    %v608 = vpop.f32.mrb[0].mxu0
    %v609 = vadd.f32 %v530, %v608
    %v610 = vpop.f32.mrb[0].mxu0
    %611 = vdwg.mxu0
    %v614 = vrot.slane %v604, 4
    %v615 = vrot.slane %v609, 4
    %v616 = vsel %vm447, %v614, %v615
    %v619 = vsel %vm447, %v609, %v614
    %v620 = vmul.f32 %v604, %v449
    %v621 = vmul.f32 %v619, %v450
    %v622 = vmul.f32 %v616, %v451
    %v623 = vmul.f32 %v604, %v452
    %v624 = vmul.f32 %v619, %v453
    %v625 = vmul.f32 %v616, %v454
    %626 = vrot.lane.b32.xlu0 %v604, 96
    %v627 = vpop.permute.xlu0 %626
    %628 = vrot.lane.b32.xlu0 %v609, 96
    %v629 = vpop.permute.xlu0 %628
    %v631 = vsel %vm353, %v620, 0
    %v634 = vsel %vm353, %v621, 0
    %v637 = vsel %vm353, %v622, 0
    %v640 = vsel %vm353, %v623, 0
    %v643 = vsel %vm353, %v624, 0
    %v646 = vsel %vm353, %v625, 0
    %v648 = vsel %vm353, %v627, 0
    %v650 = vsel %vm353, %v629, 0
    %652 = vmatprep.subr.mxu0 0.0
    %653 = vmatpush1.xpose.msra.mxu0 %v648
    %654 = vmatprep.subr.mxu0 0.0
    %655 = vmatpush1.xpose.msra.mxu0 %v650
    %656 = vmatprep.subr.mxu0 0.0
    %657 = vmatpush1.xpose.msra.mxu0 0.0
    %658 = vmatprep.subr.mxu0 0.0
    %659 = vmatpush1.xpose.msra.mxu0 0.0
    %660 = vmatprep.subr.mxu0 0.0
    %661 = vmatpush1.xpose.msra.mxu0 0.0
    %662 = vmatprep.subr.mxu0 0.0
    %663 = vmatpush1.xpose.msra.mxu0 0.0
    %664 = vmatprep.subr.mxu0 0.0
    %665 = vmatpush1.xpose.msra.mxu0 0.0
    %666 = vmatprep.subr.mxu0 0.0
    %667 = vmatpush1.xpose.msra.mxu0 0.0
    %668 = vmatprep.subr.mxu0 0.0
    %669 = vmatpush1.xpose.msra.mxu0 0.0
    %670 = vmatprep.subr.mxu0 0.0
    %671 = vmatpush1.xpose.msra.mxu0 0.0
    %672 = vmatprep.subr.mxu0 0.0
    %673 = vmatpush1.xpose.msra.mxu0 0.0
    %674 = vmatprep.subr.mxu0 0.0
    %675 = vmatpush1.xpose.msra.mxu0 0.0
    %676 = vmatprep.subr.mxu0 0.0
    %677 = vmatpush1.xpose.msra.mxu0 0.0
    %678 = vmatprep.subr.mxu0 0.0
    %679 = vmatpush1.xpose.msra.mxu0 0.0
    %680 = vmatprep.subr.mxu0 0.0
    %681 = vmatpush1.xpose.msra.mxu0 0.0
    %682 = vmatprep.subr.mxu0 0.0
    %683 = vmatpush1.xpose.msra.mxu0 0.0
    %684 = vmatprep.subr.mxu0 0.0
    %685 = vmatpush1.xpose.msra.mxu0 0.0
    %686 = vmatprep.subr.mxu0 0.0
    %687 = vmatpush1.xpose.msra.mxu0 0.0
    %688 = vmatprep.subr.mxu0 0.0
    %689 = vmatpush1.xpose.msra.mxu0 0.0
    %690 = vmatprep.subr.mxu0 0.0
    %691 = vmatpush1.xpose.msra.mxu0 0.0
    %692 = vmatprep.subr.mxu0 0.0
    %693 = vmatpush1.xpose.msra.mxu0 0.0
    %694 = vmatprep.subr.mxu0 0.0
    %695 = vmatpush1.xpose.msra.mxu0 0.0
    %696 = vmatprep.subr.mxu0 0.0
    %697 = vmatpush1.xpose.msra.mxu0 0.0
    %698 = vmatprep.subr.mxu0 0.0
    %699 = vmatpush1.xpose.msra.mxu0 0.0
    %700 = vmatprep.subr.mxu0 0.0
    %701 = vmatpush1.xpose.msra.mxu0 0.0
    %702 = vmatprep.subr.mxu0 0.0
    %703 = vmatpush1.xpose.msra.mxu0 0.0
    %704 = vmatprep.subr.mxu0 0.0
    %705 = vmatpush1.xpose.msra.mxu0 0.0
    %706 = vmatprep.subr.mxu0 0.0
    %707 = vmatpush1.xpose.msra.mxu0 0.0
    %708 = vmatprep.subr.mxu0 0.0
    %709 = vmatpush1.xpose.msra.mxu0 0.0
    %710 = vmatprep.subr.mxu0 0.0
    %711 = vmatpush1.xpose.msra.mxu0 0.0
    %712 = vmatprep.subr.mxu0 0.0
    %713 = vmatpush1.xpose.msra.mxu0 0.0
    %714 = vmatprep.subr.mxu0 0.0
    %715 = vmatpush1.xpose.msra.mxu0 0.0
    %716 = vmatprep.mubr.f32.mxu0 0.0
    %717 = vmatmul.mubr.f32.gmra.mrb[0].mxu0 %v631
    %v718 = vpop.f32.mrb[0].mxu0
    %v719 = vadd.f32 %v455, %v718
    %v720 = vpop.f32.mrb[0].mxu0
    %721 = vmatprep.mubr.f32.mxu0 0.0
    %722 = vmatmul.mubr.f32.gmra.mrb[0].mxu0 %v634
    %v723 = vpop.f32.mrb[0].mxu0
    %v724 = vadd.f32 %v456, %v723
    %v725 = vpop.f32.mrb[0].mxu0
    %726 = vmatprep.mubr.f32.mxu0 0.0
    %727 = vmatmul.mubr.f32.gmra.mrb[0].mxu0 %v637
    %v728 = vpop.f32.mrb[0].mxu0
    %v729 = vadd.f32 %v457, %v728
    %v730 = vpop.f32.mrb[0].mxu0
    %731 = vmatprep.mubr.f32.mxu0 0.0
    %732 = vmatmul.mubr.f32.gmra.mrb[0].mxu0 %v640
    %v733 = vpop.f32.mrb[0].mxu0
    %v734 = vadd.f32 %v458, %v733
    %v735 = vpop.f32.mrb[0].mxu0
    %736 = vmatprep.mubr.f32.mxu0 0.0
    %737 = vmatmul.mubr.f32.gmra.mrb[0].mxu0 %v643
    %v738 = vpop.f32.mrb[0].mxu0
    %v739 = vadd.f32 %v459, %v738
    %v740 = vpop.f32.mrb[0].mxu0
    %741 = vmatprep.mubr.f32.mxu0 0.0
    %742 = vmatmul.mubr.f32.gmra.mrb[0].mxu0 %v646
    %v743 = vpop.f32.mrb[0].mxu0
    %v744 = vadd.f32 %v460, %v743
    %v745 = vpop.f32.mrb[0].mxu0
    %746 = vdwg.mxu0
    %vm747 = vcmask 97280
    %v748 = vsel %vm747, %v719, -inf
    %749 = vmax.xlane.f32.xlu0 %v748
    %v750 = vpop.xlane.xlu0 %749
    %v751 = vsel %vm747, %v724, -inf
    %752 = vmax.xlane.f32.xlu0 %v751
    %v753 = vpop.xlane.xlu0 %752
    %v754 = vsel %vm747, %v729, -inf
    %755 = vmax.xlane.f32.xlu0 %v754
    %v756 = vpop.xlane.xlu0 %755
    %v757 = vsel %vm747, %v734, -inf
    %758 = vmax.xlane.f32.xlu0 %v757
    %v759 = vpop.xlane.xlu0 %758
    %v760 = vsel %vm747, %v739, -inf
    %761 = vmax.xlane.f32.xlu0 %v760
    %v762 = vpop.xlane.xlu0 %761
    %v763 = vsel %vm747, %v744, -inf
    %764 = vmax.xlane.f32.xlu0 %v763
    %v765 = vpop.xlane.xlu0 %764
    %v766 = vsub.f32 %v719, %v750
    %v767 = vsub.f32 %v724, %v753
    %v768 = vsub.f32 %v729, %v756
    %v769 = vsub.f32 %v734, %v759
    %v770 = vsub.f32 %v739, %v762
    %v771 = vsub.f32 %v744, %v765
    %v772 = vmul.f32 %v766, 1.442695
    %v773 = vpow.pop %v772
    %v774 = vmul.f32 %v767, 1.442695
    %v775 = vpow.pop %v774
    %v776 = vmul.f32 %v768, 1.442695
    %v777 = vpow.pop %v776
    %v778 = vmul.f32 %v769, 1.442695
    %v779 = vpow.pop %v778
    %v780 = vmul.f32 %v770, 1.442695
    %v781 = vpow.pop %v780
    %v782 = vmul.f32 %v771, 1.442695
    %v783 = vpow.pop %v782
    %v784 = vsel %vm747, %v773, 0.0
    %785 = vadd.xlane.f32.xlu0 %v784
    %v786 = vpop.xlane.xlu0 %785
    %v787 = vsel %vm747, %v775, 0.0
    %788 = vadd.xlane.f32.xlu0 %v787
    %v789 = vpop.xlane.xlu0 %788
    %v790 = vsel %vm747, %v777, 0.0
    %791 = vadd.xlane.f32.xlu0 %v790
    %v792 = vpop.xlane.xlu0 %791
    %v793 = vsel %vm747, %v779, 0.0
    %794 = vadd.xlane.f32.xlu0 %v793
    %v795 = vpop.xlane.xlu0 %794
    %v796 = vsel %vm747, %v781, 0.0
    %797 = vadd.xlane.f32.xlu0 %v796
    %v798 = vpop.xlane.xlu0 %797
    %v799 = vsel %vm747, %v783, 0.0
    %800 = vadd.xlane.f32.xlu0 %v799
    %v801 = vpop.xlane.xlu0 %800
    %v802 = vrcp.pop %v786
    %v803 = vrcp.pop %v789
    %v804 = vrcp.pop %v792
    %v805 = vrcp.pop %v795
    %v806 = vrcp.pop %v798
    %v807 = vrcp.pop %v801
    %v808 = vmul.f32 %v773, %v802
    %v809 = vmul.f32 %v775, %v803
    %v810 = vmul.f32 %v777, %v804
    %v811 = vmul.f32 %v779, %v805
    %v812 = vmul.f32 %v781, %v806
    %v813 = vmul.f32 %v783, %v807
    %814 = vrot.lane.b32.xlu0 %v604, 64
    %v815 = vpop.permute.xlu0 %814
    %816 = vrot.lane.b32.xlu0 %v609, 64
    %v817 = vpop.permute.xlu0 %816
    %v820 = vsel %vm747, %v808, 0
    %v823 = vsel %vm747, %v809, 0
    %v826 = vsel %vm747, %v810, 0
    %v829 = vsel %vm747, %v811, 0
    %v832 = vsel %vm747, %v812, 0
    %v835 = vsel %vm747, %v813, 0
    %v837 = vsel %vm447, %v817, 0
    %839 = vmatprep.subr.mxu0 0.0
    %840 = vmatpush1.msra.mxu0 %v815
    %841 = vmatprep.subr.mxu0 0.0
    %842 = vmatpush1.msra.mxu0 %v837
    %843 = vmatprep.subr.mxu0 0.0
    %844 = vmatpush1.msra.mxu0 0.0
    %845 = vmatprep.subr.mxu0 0.0
    %846 = vmatpush1.msra.mxu0 0.0
    %847 = vmatprep.subr.mxu0 0.0
    %848 = vmatpush1.msra.mxu0 0.0
    %849 = vmatprep.subr.mxu0 0.0
    %850 = vmatpush1.msra.mxu0 0.0
    %851 = vmatprep.subr.mxu0 0.0
    %852 = vmatpush1.msra.mxu0 0.0
    %853 = vmatprep.subr.mxu0 0.0
    %854 = vmatpush1.msra.mxu0 0.0
    %855 = vmatprep.subr.mxu0 0.0
    %856 = vmatpush1.msra.mxu0 0.0
    %857 = vmatprep.subr.mxu0 0.0
    %858 = vmatpush1.msra.mxu0 0.0
    %859 = vmatprep.subr.mxu0 0.0
    %860 = vmatpush1.msra.mxu0 0.0
    %861 = vmatprep.subr.mxu0 0.0
    %862 = vmatpush1.msra.mxu0 0.0
    %863 = vmatprep.subr.mxu0 0.0
    %864 = vmatpush1.msra.mxu0 0.0
    %865 = vmatprep.subr.mxu0 0.0
    %866 = vmatpush1.msra.mxu0 0.0
    %867 = vmatprep.subr.mxu0 0.0
    %868 = vmatpush1.msra.mxu0 0.0
    %869 = vmatprep.subr.mxu0 0.0
    %870 = vmatpush1.msra.mxu0 0.0
    %871 = vmatprep.subr.mxu0 0.0
    %872 = vmatpush1.msra.mxu0 0.0
    %873 = vmatprep.subr.mxu0 0.0
    %874 = vmatpush1.msra.mxu0 0.0
    %875 = vmatprep.subr.mxu0 0.0
    %876 = vmatpush1.msra.mxu0 0.0
    %877 = vmatprep.subr.mxu0 0.0
    %878 = vmatpush1.msra.mxu0 0.0
    %879 = vmatprep.subr.mxu0 0.0
    %880 = vmatpush1.msra.mxu0 0.0
    %881 = vmatprep.subr.mxu0 0.0
    %882 = vmatpush1.msra.mxu0 0.0
    %883 = vmatprep.subr.mxu0 0.0
    %884 = vmatpush1.msra.mxu0 0.0
    %885 = vmatprep.subr.mxu0 0.0
    %886 = vmatpush1.msra.mxu0 0.0
    %887 = vmatprep.subr.mxu0 0.0
    %888 = vmatpush1.msra.mxu0 0.0
    %889 = vmatprep.subr.mxu0 0.0
    %890 = vmatpush1.msra.mxu0 0.0
    %891 = vmatprep.subr.mxu0 0.0
    %892 = vmatpush1.msra.mxu0 0.0
    %893 = vmatprep.subr.mxu0 0.0
    %894 = vmatpush1.msra.mxu0 0.0
    %895 = vmatprep.subr.mxu0 0.0
    %896 = vmatpush1.msra.mxu0 0.0
    %897 = vmatprep.subr.mxu0 0.0
    %898 = vmatpush1.msra.mxu0 0.0
    %899 = vmatprep.subr.mxu0 0.0
    %900 = vmatpush1.msra.mxu0 0.0
    %901 = vmatprep.subr.mxu0 0.0
    %902 = vmatpush1.msra.mxu0 0.0
    %903 = vmatprep.mubr.f32.mxu0 0.0
    %904 = vmatmul.mubr.f32.gmra.mrb[0].mxu0 %v820
    %v905 = vpop.f32.mrb[0].mxu0
    %v906 = vadd.f32 0.0, %v905
    %v907 = vpop.f32.mrb[0].mxu0
    %908 = vmatprep.mubr.f32.mxu0 0.0
    %909 = vmatmul.mubr.f32.gmra.mrb[0].mxu0 %v823
    %v910 = vpop.f32.mrb[0].mxu0
    %v911 = vadd.f32 0.0, %v910
    %v912 = vpop.f32.mrb[0].mxu0
    %913 = vmatprep.mubr.f32.mxu0 0.0
    %914 = vmatmul.mubr.f32.gmra.mrb[0].mxu0 %v826
    %v915 = vpop.f32.mrb[0].mxu0
    %v916 = vadd.f32 0.0, %v915
    %v917 = vpop.f32.mrb[0].mxu0
    %918 = vmatprep.mubr.f32.mxu0 0.0
    %919 = vmatmul.mubr.f32.gmra.mrb[0].mxu0 %v829
    %v920 = vpop.f32.mrb[0].mxu0
    %v921 = vadd.f32 0.0, %v920
    %v922 = vpop.f32.mrb[0].mxu0
    %923 = vmatprep.mubr.f32.mxu0 0.0
    %924 = vmatmul.mubr.f32.gmra.mrb[0].mxu0 %v832
    %v925 = vpop.f32.mrb[0].mxu0
    %v926 = vadd.f32 0.0, %v925
    %v927 = vpop.f32.mrb[0].mxu0
    %928 = vmatprep.mubr.f32.mxu0 0.0
    %929 = vmatmul.mubr.f32.gmra.mrb[0].mxu0 %v835
    %v930 = vpop.f32.mrb[0].mxu0
    %v931 = vadd.f32 0.0, %v930
    %v932 = vpop.f32.mrb[0].mxu0
    %933 = vdwg.mxu0
    %v934 = vmul.f32 %v906, %v449
    %v935 = vmul.f32 %v911, %v450
    %v936 = vmul.f32 %v916, %v451
    %v937 = vmul.f32 %v921, %v452
    %v938 = vmul.f32 %v926, %v453
    %v939 = vmul.f32 %v931, %v454
    %v942 = vrot.slane %v935, 4
    %v943 = vrot.slane %v936, 4
    %v944 = vsel %vm447, %v942, %v943
    %v947 = vadd.f32 %v934, %v944
    %v948 = vadd.f32 %v935, %v943
    %v949 = vadd.f32 %v947, %v937
    %v950 = vadd.f32 %v948, %v938
    %v953 = vrot.slane %v938, 4
    %v954 = vrot.slane %v939, 4
    %v955 = vsel %vm447, %v953, %v954
    %v958 = vadd.f32 %v949, %v955
    %v959 = vadd.f32 %v950, %v954
    %v961 = vsel %vm353, %v958, 0
    %v964 = vsel %vm353, %v959, 0
    %966 = vmatprep.subr.mxu0 0.0
    %967 = vmatpush1.msra.mxu0 %v472
    %968 = vmatprep.subr.mxu0 0.0
    %969 = vmatpush1.msra.mxu0 %v473
    %970 = vmatprep.subr.mxu0 0.0
    %971 = vmatpush1.msra.mxu0 %v474
    %972 = vmatprep.subr.mxu0 0.0
    %973 = vmatpush1.msra.mxu0 %v475
    %974 = vmatprep.subr.mxu0 0.0
    %975 = vmatpush1.msra.mxu0 0.0
    %976 = vmatprep.subr.mxu0 0.0
    %977 = vmatpush1.msra.mxu0 0.0
    %978 = vmatprep.subr.mxu0 0.0
    %979 = vmatpush1.msra.mxu0 0.0
    %980 = vmatprep.subr.mxu0 0.0
    %981 = vmatpush1.msra.mxu0 0.0
    %982 = vmatprep.subr.mxu0 0.0
    %983 = vmatpush1.msra.mxu0 0.0
    %984 = vmatprep.subr.mxu0 0.0
    %985 = vmatpush1.msra.mxu0 0.0
    %986 = vmatprep.subr.mxu0 0.0
    %987 = vmatpush1.msra.mxu0 0.0
    %988 = vmatprep.subr.mxu0 0.0
    %989 = vmatpush1.msra.mxu0 0.0
    %990 = vmatprep.subr.mxu0 0.0
    %991 = vmatpush1.msra.mxu0 0.0
    %992 = vmatprep.subr.mxu0 0.0
    %993 = vmatpush1.msra.mxu0 0.0
    %994 = vmatprep.subr.mxu0 0.0
    %995 = vmatpush1.msra.mxu0 0.0
    %996 = vmatprep.subr.mxu0 0.0
    %997 = vmatpush1.msra.mxu0 0.0
    %998 = vmatprep.subr.mxu0 0.0
    %999 = vmatpush1.msra.mxu0 0.0
    %1000 = vmatprep.subr.mxu0 0.0
    %1001 = vmatpush1.msra.mxu0 0.0
    %1002 = vmatprep.subr.mxu0 0.0
    %1003 = vmatpush1.msra.mxu0 0.0
    %1004 = vmatprep.subr.mxu0 0.0
    %1005 = vmatpush1.msra.mxu0 0.0
    %1006 = vmatprep.subr.mxu0 0.0
    %1007 = vmatpush1.msra.mxu0 0.0
    %1008 = vmatprep.subr.mxu0 0.0
    %1009 = vmatpush1.msra.mxu0 0.0
    %1010 = vmatprep.subr.mxu0 0.0
    %1011 = vmatpush1.msra.mxu0 0.0
    %1012 = vmatprep.subr.mxu0 0.0
    %1013 = vmatpush1.msra.mxu0 0.0
    %1014 = vmatprep.subr.mxu0 0.0
    %1015 = vmatpush1.msra.mxu0 0.0
    %1016 = vmatprep.subr.mxu0 0.0
    %1017 = vmatpush1.msra.mxu0 0.0
    %1018 = vmatprep.subr.mxu0 0.0
    %1019 = vmatpush1.msra.mxu0 0.0
    %1020 = vmatprep.subr.mxu0 0.0
    %1021 = vmatpush1.msra.mxu0 0.0
    %1022 = vmatprep.subr.mxu0 0.0
    %1023 = vmatpush1.msra.mxu0 0.0
    %1024 = vmatprep.subr.mxu0 0.0
    %1025 = vmatpush1.msra.mxu0 0.0
    %1026 = vmatprep.subr.mxu0 0.0
    %1027 = vmatpush1.msra.mxu0 0.0
    %1028 = vmatprep.subr.mxu0 0.0
    %1029 = vmatpush1.msra.mxu0 0.0
    %1030 = vmatprep.mubr.f32.mxu0 0.0
    %1031 = vmatmul.mubr.f32.gmra.mrb[0].mxu0 %v961
    %v1032 = vpop.f32.mrb[0].mxu0
    %v1033 = vadd.f32 0.0, %v1032
    %v1034 = vpop.f32.mrb[0].mxu0
    %1035 = vmatprep.mubr.f32.mxu0 0.0
    %1036 = vmatmul.mubr.f32.gmra.mrb[0].mxu0 %v964
    %v1037 = vpop.f32.mrb[0].mxu0
    %v1038 = vadd.f32 0.0, %v1037
    %v1039 = vpop.f32.mrb[0].mxu0
    %1040 = vdwg.mxu0
    %v1041 = vadd.f32 %v448, %v1033
    %v1042 = vadd.f32 %v443, %v1038
    %v1043 = vlaneseq
    %v1044 = vshrl.u32 %v1043, 7
    %v1045 = vsub.s32 0, %v1044
    %v1046 = vrot.slane %v465, %v1045
    %v1047 = vadd.f32 %v1041, %v1046
    %v1048 = vadd.f32 %v1042, %v1046
    %v1049 = vsel %vm353, %v1047, 0.0
    %1050 = vadd.xlane.f32.xlu0 %v1049
    %v1051 = vpop.xlane.xlu0 %1050
    %v1052 = vsel %vm324, %v1048, 0.0
    %1053 = vadd.xlane.f32.xlu0 %v1052
    %v1054 = vpop.xlane.xlu0 %1053
    %v1055 = vmul.f32 %v1051, %v328
    %v1056 = vmul.f32 %v1054, %v328
    %v1057 = vsub.f32 %v1047, %v1055
    %v1058 = vsub.f32 %v1048, %v1056
    %v1059 = vmul.f32 %v1057, %v1057
    %v1060 = vmul.f32 %v1058, %v1058
    %v1061 = vsel %vm353, %v1059, 0.0
    %1062 = vadd.xlane.f32.xlu0 %v1061
    %v1063 = vpop.xlane.xlu0 %1062
    %v1064 = vsel %vm324, %v1060, 0.0
    %1065 = vadd.xlane.f32.xlu0 %v1064
    %v1066 = vpop.xlane.xlu0 %1065
    %v1067 = vmul.f32 %v1063, %v328
    %v1068 = vmul.f32 %v1066, %v328
    %v1069 = vadd.f32 %v1067, 1e-05
    %v1070 = vadd.f32 %v1068, 1e-05
    %v1071 = vrsqrt.pop %v1069
    %v1072 = vrsqrt.pop %v1070
    %v1073 = vmul.f32 %v1057, %v1071
    %v1074 = vmul.f32 %v1058, %v1072
    %v1075 = vlaneseq
    %v1076 = vshrl.u32 %v1075, 7
    %v1077 = vsub.s32 0, %v1076
    %v1078 = vrot.slane %v463, %v1077
    %v1079 = vmul.f32 %v1073, %v1078
    %v1080 = vmul.f32 %v1074, %v1078
    %v1081 = vlaneseq
    %v1082 = vshrl.u32 %v1081, 7
    %v1083 = vsub.s32 0, %v1082
    %v1084 = vrot.slane %v464, %v1083
    %v1085 = vadd.f32 %v1079, %v1084
    %v1086 = vadd.f32 %v1080, %v1084
    %v1087 = vlaneseq
    %v1088 = vshrl.u32 %v1087, 7
    %v1089 = vsub.s32 0, %v1088
    %v1090 = vrot.slane %v480, %v1089
    %v1092 = vsel %vm353, %v1085, 0
    %v1095 = vsel %vm353, %v1086, 0
    %1097 = vmatprep.subr.mxu0 0.0
    %1098 = vmatpush1.msra.mxu0 %v476
    %1099 = vmatprep.subr.mxu0 0.0
    %1100 = vmatpush1.msra.mxu0 %v477
    %1101 = vmatprep.subr.mxu0 0.0
    %1102 = vmatpush1.msra.mxu0 %v478
    %1103 = vmatprep.subr.mxu0 0.0
    %1104 = vmatpush1.msra.mxu0 %v479
    %1105 = vmatprep.subr.mxu0 0.0
    %1106 = vmatpush1.msra.mxu0 0.0
    %1107 = vmatprep.subr.mxu0 0.0
    %1108 = vmatpush1.msra.mxu0 0.0
    %1109 = vmatprep.subr.mxu0 0.0
    %1110 = vmatpush1.msra.mxu0 0.0
    %1111 = vmatprep.subr.mxu0 0.0
    %1112 = vmatpush1.msra.mxu0 0.0
    %1113 = vmatprep.subr.mxu0 0.0
    %1114 = vmatpush1.msra.mxu0 0.0
    %1115 = vmatprep.subr.mxu0 0.0
    %1116 = vmatpush1.msra.mxu0 0.0
    %1117 = vmatprep.subr.mxu0 0.0
    %1118 = vmatpush1.msra.mxu0 0.0
    %1119 = vmatprep.subr.mxu0 0.0
    %1120 = vmatpush1.msra.mxu0 0.0
    %1121 = vmatprep.subr.mxu0 0.0
    %1122 = vmatpush1.msra.mxu0 0.0
    %1123 = vmatprep.subr.mxu0 0.0
    %1124 = vmatpush1.msra.mxu0 0.0
    %1125 = vmatprep.subr.mxu0 0.0
    %1126 = vmatpush1.msra.mxu0 0.0
    %1127 = vmatprep.subr.mxu0 0.0
    %1128 = vmatpush1.msra.mxu0 0.0
    %1129 = vmatprep.subr.mxu0 0.0
    %1130 = vmatpush1.msra.mxu0 0.0
    %1131 = vmatprep.subr.mxu0 0.0
    %1132 = vmatpush1.msra.mxu0 0.0
    %1133 = vmatprep.subr.mxu0 0.0
    %1134 = vmatpush1.msra.mxu0 0.0
    %1135 = vmatprep.subr.mxu0 0.0
    %1136 = vmatpush1.msra.mxu0 0.0
    %1137 = vmatprep.subr.mxu0 0.0
    %1138 = vmatpush1.msra.mxu0 0.0
    %1139 = vmatprep.subr.mxu0 0.0
    %1140 = vmatpush1.msra.mxu0 0.0
    %1141 = vmatprep.subr.mxu0 0.0
    %1142 = vmatpush1.msra.mxu0 0.0
    %1143 = vmatprep.subr.mxu0 0.0
    %1144 = vmatpush1.msra.mxu0 0.0
    %1145 = vmatprep.subr.mxu0 0.0
    %1146 = vmatpush1.msra.mxu0 0.0
    %1147 = vmatprep.subr.mxu0 0.0
    %1148 = vmatpush1.msra.mxu0 0.0
    %1149 = vmatprep.subr.mxu0 0.0
    %1150 = vmatpush1.msra.mxu0 0.0
    %1151 = vmatprep.subr.mxu0 0.0
    %1152 = vmatpush1.msra.mxu0 0.0
    %1153 = vmatprep.subr.mxu0 0.0
    %1154 = vmatpush1.msra.mxu0 0.0
    %1155 = vmatprep.subr.mxu0 0.0
    %1156 = vmatpush1.msra.mxu0 0.0
    %1157 = vmatprep.subr.mxu0 0.0
    %1158 = vmatpush1.msra.mxu0 0.0
    %1159 = vmatprep.subr.mxu0 0.0
    %1160 = vmatpush1.msra.mxu0 0.0
    %1161 = vmatprep.mubr.f32.mxu0 0.0
    %1162 = vmatmul.mubr.f32.gmra.mrb[0].mxu0 %v1092
    %v1163 = vpop.f32.mrb[0].mxu0
    %v1164 = vadd.f32 %v1090, %v1163
    %v1165 = vpop.f32.mrb[0].mxu0
    %1166 = vmatprep.mubr.f32.mxu0 0.0
    %1167 = vmatmul.mubr.f32.gmra.mrb[0].mxu0 %v1095
    %v1168 = vpop.f32.mrb[0].mxu0
    %v1169 = vadd.f32 %v1090, %v1168
    %v1170 = vpop.f32.mrb[0].mxu0
    %1171 = vdwg.mxu0
    %v1172 = vmul.f32 %v1164, 0.5
    %v1173 = vmul.f32 %v1169, 0.5
    %v1174 = vmul.f32 %v1164, 0.70710677
    %v1175 = vmul.f32 %v1169, 0.70710677
    %v1176 = verf.f32.pop %v1174
    %v1177 = verf.f32.pop %v1175
    %v1178 = vadd.f32 %v1176, 1.0
    %v1179 = vadd.f32 %v1177, 1.0
    %v1180 = vmul.f32 %v1172, %v1178
    %v1181 = vmul.f32 %v1173, %v1179
    %v1183 = vsel %vm95, %v1180, 0
    %v1186 = vsel %vm95, %v1181, 0
    %1188 = vmatprep.subr.mxu0 0.0
    %1189 = vmatpush1.msra.mxu0 %v481
    %1190 = vmatprep.subr.mxu0 0.0
    %1191 = vmatpush1.msra.mxu0 %v482
    %1192 = vmatprep.subr.mxu0 0.0
    %1193 = vmatpush1.msra.mxu0 %v483
    %1194 = vmatprep.subr.mxu0 0.0
    %1195 = vmatpush1.msra.mxu0 %v484
    %1196 = vmatprep.subr.mxu0 0.0
    %1197 = vmatpush1.msra.mxu0 %v485
    %1198 = vmatprep.subr.mxu0 0.0
    %1199 = vmatpush1.msra.mxu0 %v486
    %1200 = vmatprep.subr.mxu0 0.0
    %1201 = vmatpush1.msra.mxu0 %v487
    %1202 = vmatprep.subr.mxu0 0.0
    %1203 = vmatpush1.msra.mxu0 %v488
    %1204 = vmatprep.subr.mxu0 0.0
    %1205 = vmatpush1.msra.mxu0 0.0
    %1206 = vmatprep.subr.mxu0 0.0
    %1207 = vmatpush1.msra.mxu0 0.0
    %1208 = vmatprep.subr.mxu0 0.0
    %1209 = vmatpush1.msra.mxu0 0.0
    %1210 = vmatprep.subr.mxu0 0.0
    %1211 = vmatpush1.msra.mxu0 0.0
    %1212 = vmatprep.subr.mxu0 0.0
    %1213 = vmatpush1.msra.mxu0 0.0
    %1214 = vmatprep.subr.mxu0 0.0
    %1215 = vmatpush1.msra.mxu0 0.0
    %1216 = vmatprep.subr.mxu0 0.0
    %1217 = vmatpush1.msra.mxu0 0.0
    %1218 = vmatprep.subr.mxu0 0.0
    %1219 = vmatpush1.msra.mxu0 0.0
    %1220 = vmatprep.subr.mxu0 0.0
    %1221 = vmatpush1.msra.mxu0 0.0
    %1222 = vmatprep.subr.mxu0 0.0
    %1223 = vmatpush1.msra.mxu0 0.0
    %1224 = vmatprep.subr.mxu0 0.0
    %1225 = vmatpush1.msra.mxu0 0.0
    %1226 = vmatprep.subr.mxu0 0.0
    %1227 = vmatpush1.msra.mxu0 0.0
    %1228 = vmatprep.subr.mxu0 0.0
    %1229 = vmatpush1.msra.mxu0 0.0
    %1230 = vmatprep.subr.mxu0 0.0
    %1231 = vmatpush1.msra.mxu0 0.0
    %1232 = vmatprep.subr.mxu0 0.0
    %1233 = vmatpush1.msra.mxu0 0.0
    %1234 = vmatprep.subr.mxu0 0.0
    %1235 = vmatpush1.msra.mxu0 0.0
    %1236 = vmatprep.subr.mxu0 0.0
    %1237 = vmatpush1.msra.mxu0 0.0
    %1238 = vmatprep.subr.mxu0 0.0
    %1239 = vmatpush1.msra.mxu0 0.0
    %1240 = vmatprep.subr.mxu0 0.0
    %1241 = vmatpush1.msra.mxu0 0.0
    %1242 = vmatprep.subr.mxu0 0.0
    %1243 = vmatpush1.msra.mxu0 0.0
    %1244 = vmatprep.subr.mxu0 0.0
    %1245 = vmatpush1.msra.mxu0 0.0
    %1246 = vmatprep.subr.mxu0 0.0
    %1247 = vmatpush1.msra.mxu0 0.0
    %1248 = vmatprep.subr.mxu0 0.0
    %1249 = vmatpush1.msra.mxu0 0.0
    %1250 = vmatprep.subr.mxu0 0.0
    %1251 = vmatpush1.msra.mxu0 0.0
    %1252 = vmatprep.mubr.f32.mxu0 0.0
    %1253 = vmatmul.mubr.f32.gmra.mrb[0].mxu0 %v1183
    %v1254 = vpop.f32.mrb[0].mxu0
    %v1255 = vadd.f32 0.0, %v1254
    %v1256 = vpop.f32.mrb[0].mxu0
    %1257 = vmatprep.mubr.f32.mxu0 0.0
    %1258 = vmatmul.mubr.f32.gmra.mrb[0].mxu0 %v1186
    %v1259 = vpop.f32.mrb[0].mxu0
    %v1260 = vadd.f32 0.0, %v1259
    %v1261 = vpop.f32.mrb[0].mxu0
    %1262 = vdwg.mxu0
    %v1263 = vadd.f32 %v1047, %v1255
    %v1264 = vadd.f32 %v1048, %v1260
    %v1265 = vlaneseq
    %v1266 = vshrl.u32 %v1265, 7
    %v1267 = vsub.s32 0, %v1266
    %v1268 = vrot.slane %v466, %v1267
    %v1269 = vadd.f32 %v1263, %v1268
    %v1270 = vadd.f32 %v1264, %v1268
    %v1271 = vld [vmem:[#allocation6 + $0x1e0] sm:$0x1]
    %v1272 = vld [vmem:[#allocation6 + $0x1e1] sm:$0x1]
    %v1273 = vld [vmem:[#allocation6 + $0x1e2] sm:$0x1]
    %v1274 = vld [vmem:[#allocation6 + $0x1e3] sm:$0x1]
    %v1275 = vld [vmem:[#allocation6 + $0x1e4] sm:$0x1]
    %v1276 = vld [vmem:[#allocation6 + $0x1e5] sm:$0x1]
    %v1277 = vld [vmem:[#allocation6 + $0x1e8] sm:$0xff]
    %v1278 = vld [vmem:[#allocation6 + $0x1f0] sm:$0xff]
    %v1279 = vld [vmem:[#allocation6 + $0x1f8] sm:$0xff]
    %v1280 = vld [vmem:[#allocation6 + $0x200] sm:$0xff]
    %v1281 = vld [vmem:[#allocation6 + $0x208] sm:$0x1]
    %v1282 = vld [vmem:[#allocation6 + $0x210] sm:$0xff]
    %v1283 = vld [vmem:[#allocation6 + $0x218] sm:$0xff]
    %v1284 = vld [vmem:[#allocation6 + $0x220] sm:$0xff]
    %v1285 = vld [vmem:[#allocation6 + $0x228] sm:$0xff]
    %v1286 = vld [vmem:[#allocation6 + $0x230] sm:$0xff]
    %v1287 = vld [vmem:[#allocation6 + $0x238] sm:$0xff]
    %v1288 = vld [vmem:[#allocation6 + $0x240] sm:$0xff]
    %v1289 = vld [vmem:[#allocation6 + $0x248] sm:$0xff]
    %v1290 = vld [vmem:[#allocation6 + $0x250] sm:$0x1]
    %v1291 = vld [vmem:[#allocation6 + $0x258] sm:$0xff]
    %v1292 = vld [vmem:[#allocation6 + $0x260] sm:$0xff]
    %v1293 = vld [vmem:[#allocation6 + $0x268] sm:$0xff]
    %v1294 = vld [vmem:[#allocation6 + $0x270] sm:$0xff]
    %v1295 = vld [vmem:[#allocation6 + $0x278] sm:$0xff]
    %v1296 = vld [vmem:[#allocation6 + $0x280] sm:$0xff]
    %v1297 = vld [vmem:[#allocation6 + $0x288] sm:$0xff]
    %v1298 = vld [vmem:[#allocation6 + $0x290] sm:$0xff]
    %v1299 = vsel %vm353, %v1269, 0.0
    %1300 = vadd.xlane.f32.xlu0 %v1299
    %v1301 = vpop.xlane.xlu0 %1300
    %v1302 = vsel %vm324, %v1270, 0.0
    %1303 = vadd.xlane.f32.xlu0 %v1302
    %v1304 = vpop.xlane.xlu0 %1303
    %v1305 = vmul.f32 %v1301, %v328
    %v1306 = vmul.f32 %v1304, %v328
    %v1307 = vsub.f32 %v1269, %v1305
    %v1308 = vsub.f32 %v1270, %v1306
    %v1309 = vmul.f32 %v1307, %v1307
    %v1310 = vmul.f32 %v1308, %v1308
    %v1311 = vsel %vm353, %v1309, 0.0
    %1312 = vadd.xlane.f32.xlu0 %v1311
    %v1313 = vpop.xlane.xlu0 %1312
    %v1314 = vsel %vm324, %v1310, 0.0
    %1315 = vadd.xlane.f32.xlu0 %v1314
    %v1316 = vpop.xlane.xlu0 %1315
    %v1317 = vmul.f32 %v1313, %v328
    %v1318 = vmul.f32 %v1316, %v328
    %v1319 = vadd.f32 %v1317, 1e-05
    %v1320 = vadd.f32 %v1318, 1e-05
    %v1321 = vrsqrt.pop %v1319
    %v1322 = vrsqrt.pop %v1320
    %v1323 = vmul.f32 %v1307, %v1321
    %v1324 = vmul.f32 %v1308, %v1322
    %v1325 = vlaneseq
    %v1326 = vshrl.u32 %v1325, 7
    %v1327 = vsub.s32 0, %v1326
    %v1328 = vrot.slane %v1271, %v1327
    %v1329 = vmul.f32 %v1323, %v1328
    %v1330 = vmul.f32 %v1324, %v1328
    %v1331 = vlaneseq
    %v1332 = vshrl.u32 %v1331, 7
    %v1333 = vsub.s32 0, %v1332
    %v1334 = vrot.slane %v1272, %v1333
    %v1335 = vadd.f32 %v1329, %v1334
    %v1336 = vadd.f32 %v1330, %v1334
    %v1337 = vlaneseq
    %v1338 = vshrl.u32 %v1337, 7
    %v1339 = vsub.s32 0, %v1338
    %v1340 = vrot.slane %v1281, %v1339
    %v1342 = vsel %vm353, %v1335, 0
    %v1345 = vsel %vm353, %v1336, 0
    %1347 = vmatprep.subr.mxu0 0.0
    %1348 = vmatpush1.msra.mxu0 %v1277
    %1349 = vmatprep.subr.mxu0 0.0
    %1350 = vmatpush1.msra.mxu0 %v1278
    %1351 = vmatprep.subr.mxu0 0.0
    %1352 = vmatpush1.msra.mxu0 %v1279
    %1353 = vmatprep.subr.mxu0 0.0
    %1354 = vmatpush1.msra.mxu0 %v1280
    %1355 = vmatprep.subr.mxu0 0.0
    %1356 = vmatpush1.msra.mxu0 0.0
    %1357 = vmatprep.subr.mxu0 0.0
    %1358 = vmatpush1.msra.mxu0 0.0
    %1359 = vmatprep.subr.mxu0 0.0
    %1360 = vmatpush1.msra.mxu0 0.0
    %1361 = vmatprep.subr.mxu0 0.0
    %1362 = vmatpush1.msra.mxu0 0.0
    %1363 = vmatprep.subr.mxu0 0.0
    %1364 = vmatpush1.msra.mxu0 0.0
    %1365 = vmatprep.subr.mxu0 0.0
    %1366 = vmatpush1.msra.mxu0 0.0
    %1367 = vmatprep.subr.mxu0 0.0
    %1368 = vmatpush1.msra.mxu0 0.0
    %1369 = vmatprep.subr.mxu0 0.0
    %1370 = vmatpush1.msra.mxu0 0.0
    %1371 = vmatprep.subr.mxu0 0.0
    %1372 = vmatpush1.msra.mxu0 0.0
    %1373 = vmatprep.subr.mxu0 0.0
    %1374 = vmatpush1.msra.mxu0 0.0
    %1375 = vmatprep.subr.mxu0 0.0
    %1376 = vmatpush1.msra.mxu0 0.0
    %1377 = vmatprep.subr.mxu0 0.0
    %1378 = vmatpush1.msra.mxu0 0.0
    %1379 = vmatprep.subr.mxu0 0.0
    %1380 = vmatpush1.msra.mxu0 0.0
    %1381 = vmatprep.subr.mxu0 0.0
    %1382 = vmatpush1.msra.mxu0 0.0
    %1383 = vmatprep.subr.mxu0 0.0
    %1384 = vmatpush1.msra.mxu0 0.0
    %1385 = vmatprep.subr.mxu0 0.0
    %1386 = vmatpush1.msra.mxu0 0.0
    %1387 = vmatprep.subr.mxu0 0.0
    %1388 = vmatpush1.msra.mxu0 0.0
    %1389 = vmatprep.subr.mxu0 0.0
    %1390 = vmatpush1.msra.mxu0 0.0
    %1391 = vmatprep.subr.mxu0 0.0
    %1392 = vmatpush1.msra.mxu0 0.0
    %1393 = vmatprep.subr.mxu0 0.0
    %1394 = vmatpush1.msra.mxu0 0.0
    %1395 = vmatprep.subr.mxu0 0.0
    %1396 = vmatpush1.msra.mxu0 0.0
    %1397 = vmatprep.subr.mxu0 0.0
    %1398 = vmatpush1.msra.mxu0 0.0
    %1399 = vmatprep.subr.mxu0 0.0
    %1400 = vmatpush1.msra.mxu0 0.0
    %1401 = vmatprep.subr.mxu0 0.0
    %1402 = vmatpush1.msra.mxu0 0.0
    %1403 = vmatprep.subr.mxu0 0.0
    %1404 = vmatpush1.msra.mxu0 0.0
    %1405 = vmatprep.subr.mxu0 0.0
    %1406 = vmatpush1.msra.mxu0 0.0
    %1407 = vmatprep.subr.mxu0 0.0
    %1408 = vmatpush1.msra.mxu0 0.0
    %1409 = vmatprep.subr.mxu0 0.0
    %1410 = vmatpush1.msra.mxu0 0.0
    %1411 = vmatprep.mubr.f32.mxu0 0.0
    %1412 = vmatmul.mubr.f32.gmra.mrb[0].mxu0 %v1342
    %v1413 = vpop.f32.mrb[0].mxu0
    %v1414 = vadd.f32 %v1340, %v1413
    %v1415 = vpop.f32.mrb[0].mxu0
    %1416 = vmatprep.mubr.f32.mxu0 0.0
    %1417 = vmatmul.mubr.f32.gmra.mrb[0].mxu0 %v1345
    %v1418 = vpop.f32.mrb[0].mxu0
    %v1419 = vadd.f32 %v1340, %v1418
    %v1420 = vpop.f32.mrb[0].mxu0
    %1421 = vdwg.mxu0
    %v1424 = vrot.slane %v1414, 4
    %v1425 = vrot.slane %v1419, 4
    %v1426 = vsel %vm447, %v1424, %v1425
    %v1429 = vsel %vm447, %v1419, %v1424
    %v1430 = vmul.f32 %v1414, %v449
    %v1431 = vmul.f32 %v1429, %v450
    %v1432 = vmul.f32 %v1426, %v451
    %v1433 = vmul.f32 %v1414, %v452
    %v1434 = vmul.f32 %v1429, %v453
    %v1435 = vmul.f32 %v1426, %v454
    %1436 = vrot.lane.b32.xlu0 %v1414, 96
    %v1437 = vpop.permute.xlu0 %1436
    %1438 = vrot.lane.b32.xlu0 %v1419, 96
    %v1439 = vpop.permute.xlu0 %1438
    %v1441 = vsel %vm353, %v1430, 0
    %v1444 = vsel %vm353, %v1431, 0
    %v1447 = vsel %vm353, %v1432, 0
    %v1450 = vsel %vm353, %v1433, 0
    %v1453 = vsel %vm353, %v1434, 0
    %v1456 = vsel %vm353, %v1435, 0
    %v1458 = vsel %vm353, %v1437, 0
    %v1460 = vsel %vm353, %v1439, 0
    %1462 = vmatprep.subr.mxu0 0.0
    %1463 = vmatpush1.xpose.msra.mxu0 %v1458
    %1464 = vmatprep.subr.mxu0 0.0
    %1465 = vmatpush1.xpose.msra.mxu0 %v1460
    %1466 = vmatprep.subr.mxu0 0.0
    %1467 = vmatpush1.xpose.msra.mxu0 0.0
    %1468 = vmatprep.subr.mxu0 0.0
    %1469 = vmatpush1.xpose.msra.mxu0 0.0
    %1470 = vmatprep.subr.mxu0 0.0
    %1471 = vmatpush1.xpose.msra.mxu0 0.0
    %1472 = vmatprep.subr.mxu0 0.0
    %1473 = vmatpush1.xpose.msra.mxu0 0.0
    %1474 = vmatprep.subr.mxu0 0.0
    %1475 = vmatpush1.xpose.msra.mxu0 0.0
    %1476 = vmatprep.subr.mxu0 0.0
    %1477 = vmatpush1.xpose.msra.mxu0 0.0
    %1478 = vmatprep.subr.mxu0 0.0
    %1479 = vmatpush1.xpose.msra.mxu0 0.0
    %1480 = vmatprep.subr.mxu0 0.0
    %1481 = vmatpush1.xpose.msra.mxu0 0.0
    %1482 = vmatprep.subr.mxu0 0.0
    %1483 = vmatpush1.xpose.msra.mxu0 0.0
    %1484 = vmatprep.subr.mxu0 0.0
    %1485 = vmatpush1.xpose.msra.mxu0 0.0
    %1486 = vmatprep.subr.mxu0 0.0
    %1487 = vmatpush1.xpose.msra.mxu0 0.0
    %1488 = vmatprep.subr.mxu0 0.0
    %1489 = vmatpush1.xpose.msra.mxu0 0.0
    %1490 = vmatprep.subr.mxu0 0.0
    %1491 = vmatpush1.xpose.msra.mxu0 0.0
    %1492 = vmatprep.subr.mxu0 0.0
    %1493 = vmatpush1.xpose.msra.mxu0 0.0
    %1494 = vmatprep.subr.mxu0 0.0
    %1495 = vmatpush1.xpose.msra.mxu0 0.0
    %1496 = vmatprep.subr.mxu0 0.0
    %1497 = vmatpush1.xpose.msra.mxu0 0.0
    %1498 = vmatprep.subr.mxu0 0.0
    %1499 = vmatpush1.xpose.msra.mxu0 0.0
    %1500 = vmatprep.subr.mxu0 0.0
    %1501 = vmatpush1.xpose.msra.mxu0 0.0
    %1502 = vmatprep.subr.mxu0 0.0
    %1503 = vmatpush1.xpose.msra.mxu0 0.0
    %1504 = vmatprep.subr.mxu0 0.0
    %1505 = vmatpush1.xpose.msra.mxu0 0.0
    %1506 = vmatprep.subr.mxu0 0.0
    %1507 = vmatpush1.xpose.msra.mxu0 0.0
    %1508 = vmatprep.subr.mxu0 0.0
    %1509 = vmatpush1.xpose.msra.mxu0 0.0
    %1510 = vmatprep.subr.mxu0 0.0
    %1511 = vmatpush1.xpose.msra.mxu0 0.0
    %1512 = vmatprep.subr.mxu0 0.0
    %1513 = vmatpush1.xpose.msra.mxu0 0.0
    %1514 = vmatprep.subr.mxu0 0.0
    %1515 = vmatpush1.xpose.msra.mxu0 0.0
    %1516 = vmatprep.subr.mxu0 0.0
    %1517 = vmatpush1.xpose.msra.mxu0 0.0
    %1518 = vmatprep.subr.mxu0 0.0
    %1519 = vmatpush1.xpose.msra.mxu0 0.0
    %1520 = vmatprep.subr.mxu0 0.0
    %1521 = vmatpush1.xpose.msra.mxu0 0.0
    %1522 = vmatprep.subr.mxu0 0.0
    %1523 = vmatpush1.xpose.msra.mxu0 0.0
    %1524 = vmatprep.subr.mxu0 0.0
    %1525 = vmatpush1.xpose.msra.mxu0 0.0
    %1526 = vmatprep.mubr.f32.mxu0 0.0
    %1527 = vmatmul.mubr.f32.gmra.mrb[0].mxu0 %v1441
    %v1528 = vpop.f32.mrb[0].mxu0
    %v1529 = vadd.f32 %v455, %v1528
    %v1530 = vpop.f32.mrb[0].mxu0
    %1531 = vmatprep.mubr.f32.mxu0 0.0
    %1532 = vmatmul.mubr.f32.gmra.mrb[0].mxu0 %v1444
    %v1533 = vpop.f32.mrb[0].mxu0
    %v1534 = vadd.f32 %v456, %v1533
    %v1535 = vpop.f32.mrb[0].mxu0
    %1536 = vmatprep.mubr.f32.mxu0 0.0
    %1537 = vmatmul.mubr.f32.gmra.mrb[0].mxu0 %v1447
    %v1538 = vpop.f32.mrb[0].mxu0
    %v1539 = vadd.f32 %v457, %v1538
    %v1540 = vpop.f32.mrb[0].mxu0
    %1541 = vmatprep.mubr.f32.mxu0 0.0
    %1542 = vmatmul.mubr.f32.gmra.mrb[0].mxu0 %v1450
    %v1543 = vpop.f32.mrb[0].mxu0
    %v1544 = vadd.f32 %v458, %v1543
    %v1545 = vpop.f32.mrb[0].mxu0
    %1546 = vmatprep.mubr.f32.mxu0 0.0
    %1547 = vmatmul.mubr.f32.gmra.mrb[0].mxu0 %v1453
    %v1548 = vpop.f32.mrb[0].mxu0
    %v1549 = vadd.f32 %v459, %v1548
    %v1550 = vpop.f32.mrb[0].mxu0
    %1551 = vmatprep.mubr.f32.mxu0 0.0
    %1552 = vmatmul.mubr.f32.gmra.mrb[0].mxu0 %v1456
    %v1553 = vpop.f32.mrb[0].mxu0
    %v1554 = vadd.f32 %v460, %v1553
    %v1555 = vpop.f32.mrb[0].mxu0
    %1556 = vdwg.mxu0
    %v1557 = vsel %vm747, %v1529, -inf
    %1558 = vmax.xlane.f32.xlu0 %v1557
    %v1559 = vpop.xlane.xlu0 %1558
    %v1560 = vsel %vm747, %v1534, -inf
    %1561 = vmax.xlane.f32.xlu0 %v1560
    %v1562 = vpop.xlane.xlu0 %1561
    %v1563 = vsel %vm747, %v1539, -inf
    %1564 = vmax.xlane.f32.xlu0 %v1563
    %v1565 = vpop.xlane.xlu0 %1564
    %v1566 = vsel %vm747, %v1544, -inf
    %1567 = vmax.xlane.f32.xlu0 %v1566
    %v1568 = vpop.xlane.xlu0 %1567
    %v1569 = vsel %vm747, %v1549, -inf
    %1570 = vmax.xlane.f32.xlu0 %v1569
    %v1571 = vpop.xlane.xlu0 %1570
    %v1572 = vsel %vm747, %v1554, -inf
    %1573 = vmax.xlane.f32.xlu0 %v1572
    %v1574 = vpop.xlane.xlu0 %1573
    %v1575 = vsub.f32 %v1529, %v1559
    %v1576 = vsub.f32 %v1534, %v1562
    %v1577 = vsub.f32 %v1539, %v1565
    %v1578 = vsub.f32 %v1544, %v1568
    %v1579 = vsub.f32 %v1549, %v1571
    %v1580 = vsub.f32 %v1554, %v1574
    %v1581 = vmul.f32 %v1575, 1.442695
    %v1582 = vpow.pop %v1581
    %v1583 = vmul.f32 %v1576, 1.442695
    %v1584 = vpow.pop %v1583
    %v1585 = vmul.f32 %v1577, 1.442695
    %v1586 = vpow.pop %v1585
    %v1587 = vmul.f32 %v1578, 1.442695
    %v1588 = vpow.pop %v1587
    %v1589 = vmul.f32 %v1579, 1.442695
    %v1590 = vpow.pop %v1589
    %v1591 = vmul.f32 %v1580, 1.442695
    %v1592 = vpow.pop %v1591
    %v1593 = vsel %vm747, %v1582, 0.0
    %1594 = vadd.xlane.f32.xlu0 %v1593
    %v1595 = vpop.xlane.xlu0 %1594
    %v1596 = vsel %vm747, %v1584, 0.0
    %1597 = vadd.xlane.f32.xlu0 %v1596
    %v1598 = vpop.xlane.xlu0 %1597
    %v1599 = vsel %vm747, %v1586, 0.0
    %1600 = vadd.xlane.f32.xlu0 %v1599
    %v1601 = vpop.xlane.xlu0 %1600
    %v1602 = vsel %vm747, %v1588, 0.0
    %1603 = vadd.xlane.f32.xlu0 %v1602
    %v1604 = vpop.xlane.xlu0 %1603
    %v1605 = vsel %vm747, %v1590, 0.0
    %1606 = vadd.xlane.f32.xlu0 %v1605
    %v1607 = vpop.xlane.xlu0 %1606
    %v1608 = vsel %vm747, %v1592, 0.0
    %1609 = vadd.xlane.f32.xlu0 %v1608
    %v1610 = vpop.xlane.xlu0 %1609
    %v1611 = vrcp.pop %v1595
    %v1612 = vrcp.pop %v1598
    %v1613 = vrcp.pop %v1601
    %v1614 = vrcp.pop %v1604
    %v1615 = vrcp.pop %v1607
    %v1616 = vrcp.pop %v1610
    %v1617 = vmul.f32 %v1582, %v1611
    %v1618 = vmul.f32 %v1584, %v1612
    %v1619 = vmul.f32 %v1586, %v1613
    %v1620 = vmul.f32 %v1588, %v1614
    %v1621 = vmul.f32 %v1590, %v1615
    %v1622 = vmul.f32 %v1592, %v1616
    %1623 = vrot.lane.b32.xlu0 %v1414, 64
    %v1624 = vpop.permute.xlu0 %1623
    %1625 = vrot.lane.b32.xlu0 %v1419, 64
    %v1626 = vpop.permute.xlu0 %1625
    %v1629 = vsel %vm747, %v1617, 0
    %v1632 = vsel %vm747, %v1618, 0
    %v1635 = vsel %vm747, %v1619, 0
    %v1638 = vsel %vm747, %v1620, 0
    %v1641 = vsel %vm747, %v1621, 0
    %v1644 = vsel %vm747, %v1622, 0
    %v1646 = vsel %vm447, %v1626, 0
    %1648 = vmatprep.subr.mxu0 0.0
    %1649 = vmatpush1.msra.mxu0 %v1624
    %1650 = vmatprep.subr.mxu0 0.0
    %1651 = vmatpush1.msra.mxu0 %v1646
    %1652 = vmatprep.subr.mxu0 0.0
    %1653 = vmatpush1.msra.mxu0 0.0
    %1654 = vmatprep.subr.mxu0 0.0
    %1655 = vmatpush1.msra.mxu0 0.0
    %1656 = vmatprep.subr.mxu0 0.0
    %1657 = vmatpush1.msra.mxu0 0.0
    %1658 = vmatprep.subr.mxu0 0.0
    %1659 = vmatpush1.msra.mxu0 0.0
    %1660 = vmatprep.subr.mxu0 0.0
    %1661 = vmatpush1.msra.mxu0 0.0
    %1662 = vmatprep.subr.mxu0 0.0
    %1663 = vmatpush1.msra.mxu0 0.0
    %1664 = vmatprep.subr.mxu0 0.0
    %1665 = vmatpush1.msra.mxu0 0.0
    %1666 = vmatprep.subr.mxu0 0.0
    %1667 = vmatpush1.msra.mxu0 0.0
    %1668 = vmatprep.subr.mxu0 0.0
    %1669 = vmatpush1.msra.mxu0 0.0
    %1670 = vmatprep.subr.mxu0 0.0
    %1671 = vmatpush1.msra.mxu0 0.0
    %1672 = vmatprep.subr.mxu0 0.0
    %1673 = vmatpush1.msra.mxu0 0.0
    %1674 = vmatprep.subr.mxu0 0.0
    %1675 = vmatpush1.msra.mxu0 0.0
    %1676 = vmatprep.subr.mxu0 0.0
    %1677 = vmatpush1.msra.mxu0 0.0
    %1678 = vmatprep.subr.mxu0 0.0
    %1679 = vmatpush1.msra.mxu0 0.0
    %1680 = vmatprep.subr.mxu0 0.0
    %1681 = vmatpush1.msra.mxu0 0.0
    %1682 = vmatprep.subr.mxu0 0.0
    %1683 = vmatpush1.msra.mxu0 0.0
    %1684 = vmatprep.subr.mxu0 0.0
    %1685 = vmatpush1.msra.mxu0 0.0
    %1686 = vmatprep.subr.mxu0 0.0
    %1687 = vmatpush1.msra.mxu0 0.0
    %1688 = vmatprep.subr.mxu0 0.0
    %1689 = vmatpush1.msra.mxu0 0.0
    %1690 = vmatprep.subr.mxu0 0.0
    %1691 = vmatpush1.msra.mxu0 0.0
    %1692 = vmatprep.subr.mxu0 0.0
    %1693 = vmatpush1.msra.mxu0 0.0
    %1694 = vmatprep.subr.mxu0 0.0
    %1695 = vmatpush1.msra.mxu0 0.0
    %1696 = vmatprep.subr.mxu0 0.0
    %1697 = vmatpush1.msra.mxu0 0.0
    %1698 = vmatprep.subr.mxu0 0.0
    %1699 = vmatpush1.msra.mxu0 0.0
    %1700 = vmatprep.subr.mxu0 0.0
    %1701 = vmatpush1.msra.mxu0 0.0
    %1702 = vmatprep.subr.mxu0 0.0
    %1703 = vmatpush1.msra.mxu0 0.0
    %1704 = vmatprep.subr.mxu0 0.0
    %1705 = vmatpush1.msra.mxu0 0.0
    %1706 = vmatprep.subr.mxu0 0.0
    %1707 = vmatpush1.msra.mxu0 0.0
    %1708 = vmatprep.subr.mxu0 0.0
    %1709 = vmatpush1.msra.mxu0 0.0
    %1710 = vmatprep.subr.mxu0 0.0
    %1711 = vmatpush1.msra.mxu0 0.0
    %1712 = vmatprep.mubr.f32.mxu0 0.0
    %1713 = vmatmul.mubr.f32.gmra.mrb[0].mxu0 %v1629
    %v1714 = vpop.f32.mrb[0].mxu0
    %v1715 = vadd.f32 0.0, %v1714
    %v1716 = vpop.f32.mrb[0].mxu0
    %1717 = vmatprep.mubr.f32.mxu0 0.0
    %1718 = vmatmul.mubr.f32.gmra.mrb[0].mxu0 %v1632
    %v1719 = vpop.f32.mrb[0].mxu0
    %v1720 = vadd.f32 0.0, %v1719
    %v1721 = vpop.f32.mrb[0].mxu0
    %1722 = vmatprep.mubr.f32.mxu0 0.0
    %1723 = vmatmul.mubr.f32.gmra.mrb[0].mxu0 %v1635
    %v1724 = vpop.f32.mrb[0].mxu0
    %v1725 = vadd.f32 0.0, %v1724
    %v1726 = vpop.f32.mrb[0].mxu0
    %1727 = vmatprep.mubr.f32.mxu0 0.0
    %1728 = vmatmul.mubr.f32.gmra.mrb[0].mxu0 %v1638
    %v1729 = vpop.f32.mrb[0].mxu0
    %v1730 = vadd.f32 0.0, %v1729
    %v1731 = vpop.f32.mrb[0].mxu0
    %1732 = vmatprep.mubr.f32.mxu0 0.0
    %1733 = vmatmul.mubr.f32.gmra.mrb[0].mxu0 %v1641
    %v1734 = vpop.f32.mrb[0].mxu0
    %v1735 = vadd.f32 0.0, %v1734
    %v1736 = vpop.f32.mrb[0].mxu0
    %1737 = vmatprep.mubr.f32.mxu0 0.0
    %1738 = vmatmul.mubr.f32.gmra.mrb[0].mxu0 %v1644
    %v1739 = vpop.f32.mrb[0].mxu0
    %v1740 = vadd.f32 0.0, %v1739
    %v1741 = vpop.f32.mrb[0].mxu0
    %1742 = vdwg.mxu0
    %v1743 = vmul.f32 %v1715, %v449
    %v1744 = vmul.f32 %v1720, %v450
    %v1745 = vmul.f32 %v1725, %v451
    %v1746 = vmul.f32 %v1730, %v452
    %v1747 = vmul.f32 %v1735, %v453
    %v1748 = vmul.f32 %v1740, %v454
    %v1751 = vrot.slane %v1744, 4
    %v1752 = vrot.slane %v1745, 4
    %v1753 = vsel %vm447, %v1751, %v1752
    %v1756 = vadd.f32 %v1743, %v1753
    %v1757 = vadd.f32 %v1744, %v1752
    %v1758 = vadd.f32 %v1756, %v1746
    %v1759 = vadd.f32 %v1757, %v1747
    %v1762 = vrot.slane %v1747, 4
    %v1763 = vrot.slane %v1748, 4
    %v1764 = vsel %vm447, %v1762, %v1763
    %v1767 = vadd.f32 %v1758, %v1764
    %v1768 = vadd.f32 %v1759, %v1763
    %v1770 = vsel %vm353, %v1767, 0
    %v1773 = vsel %vm353, %v1768, 0
    %1775 = vmatprep.subr.mxu0 0.0
    %1776 = vmatpush1.msra.mxu0 %v1282
    %1777 = vmatprep.subr.mxu0 0.0
    %1778 = vmatpush1.msra.mxu0 %v1283
    %1779 = vmatprep.subr.mxu0 0.0
    %1780 = vmatpush1.msra.mxu0 %v1284
    %1781 = vmatprep.subr.mxu0 0.0
    %1782 = vmatpush1.msra.mxu0 %v1285
    %1783 = vmatprep.subr.mxu0 0.0
    %1784 = vmatpush1.msra.mxu0 0.0
    %1785 = vmatprep.subr.mxu0 0.0
    %1786 = vmatpush1.msra.mxu0 0.0
    %1787 = vmatprep.subr.mxu0 0.0
    %1788 = vmatpush1.msra.mxu0 0.0
    %1789 = vmatprep.subr.mxu0 0.0
    %1790 = vmatpush1.msra.mxu0 0.0
    %1791 = vmatprep.subr.mxu0 0.0
    %1792 = vmatpush1.msra.mxu0 0.0
    %1793 = vmatprep.subr.mxu0 0.0
    %1794 = vmatpush1.msra.mxu0 0.0
    %1795 = vmatprep.subr.mxu0 0.0
    %1796 = vmatpush1.msra.mxu0 0.0
    %1797 = vmatprep.subr.mxu0 0.0
    %1798 = vmatpush1.msra.mxu0 0.0
    %1799 = vmatprep.subr.mxu0 0.0
    %1800 = vmatpush1.msra.mxu0 0.0
    %1801 = vmatprep.subr.mxu0 0.0
    %1802 = vmatpush1.msra.mxu0 0.0
    %1803 = vmatprep.subr.mxu0 0.0
    %1804 = vmatpush1.msra.mxu0 0.0
    %1805 = vmatprep.subr.mxu0 0.0
    %1806 = vmatpush1.msra.mxu0 0.0
    %1807 = vmatprep.subr.mxu0 0.0
    %1808 = vmatpush1.msra.mxu0 0.0
    %1809 = vmatprep.subr.mxu0 0.0
    %1810 = vmatpush1.msra.mxu0 0.0
    %1811 = vmatprep.subr.mxu0 0.0
    %1812 = vmatpush1.msra.mxu0 0.0
    %1813 = vmatprep.subr.mxu0 0.0
    %1814 = vmatpush1.msra.mxu0 0.0
    %1815 = vmatprep.subr.mxu0 0.0
    %1816 = vmatpush1.msra.mxu0 0.0
    %1817 = vmatprep.subr.mxu0 0.0
    %1818 = vmatpush1.msra.mxu0 0.0
    %1819 = vmatprep.subr.mxu0 0.0
    %1820 = vmatpush1.msra.mxu0 0.0
    %1821 = vmatprep.subr.mxu0 0.0
    %1822 = vmatpush1.msra.mxu0 0.0
    %1823 = vmatprep.subr.mxu0 0.0
    %1824 = vmatpush1.msra.mxu0 0.0
    %1825 = vmatprep.subr.mxu0 0.0
    %1826 = vmatpush1.msra.mxu0 0.0
    %1827 = vmatprep.subr.mxu0 0.0
    %1828 = vmatpush1.msra.mxu0 0.0
    %1829 = vmatprep.subr.mxu0 0.0
    %1830 = vmatpush1.msra.mxu0 0.0
    %1831 = vmatprep.subr.mxu0 0.0
    %1832 = vmatpush1.msra.mxu0 0.0
    %1833 = vmatprep.subr.mxu0 0.0
    %1834 = vmatpush1.msra.mxu0 0.0
    %1835 = vmatprep.subr.mxu0 0.0
    %1836 = vmatpush1.msra.mxu0 0.0
    %1837 = vmatprep.subr.mxu0 0.0
    %1838 = vmatpush1.msra.mxu0 0.0
    %1839 = vmatprep.mubr.f32.mxu0 0.0
    %1840 = vmatmul.mubr.f32.gmra.mrb[0].mxu0 %v1770
    %v1841 = vpop.f32.mrb[0].mxu0
    %v1842 = vadd.f32 0.0, %v1841
    %v1843 = vpop.f32.mrb[0].mxu0
    %1844 = vmatprep.mubr.f32.mxu0 0.0
    %1845 = vmatmul.mubr.f32.gmra.mrb[0].mxu0 %v1773
    %v1846 = vpop.f32.mrb[0].mxu0
    %v1847 = vadd.f32 0.0, %v1846
    %v1848 = vpop.f32.mrb[0].mxu0
    %1849 = vdwg.mxu0
    %v1850 = vadd.f32 %v1269, %v1842
    %v1851 = vadd.f32 %v1270, %v1847
    %v1852 = vlaneseq
    %v1853 = vshrl.u32 %v1852, 7
    %v1854 = vsub.s32 0, %v1853
    %v1855 = vrot.slane %v1275, %v1854
    %v1856 = vadd.f32 %v1850, %v1855
    %v1857 = vadd.f32 %v1851, %v1855
    %v1858 = vsel %vm353, %v1856, 0.0
    %1859 = vadd.xlane.f32.xlu0 %v1858
    %v1860 = vpop.xlane.xlu0 %1859
    %v1861 = vsel %vm324, %v1857, 0.0
    %1862 = vadd.xlane.f32.xlu0 %v1861
    %v1863 = vpop.xlane.xlu0 %1862
    %v1864 = vmul.f32 %v1860, %v328
    %v1865 = vmul.f32 %v1863, %v328
    %v1866 = vsub.f32 %v1856, %v1864
    %v1867 = vsub.f32 %v1857, %v1865
    %v1868 = vmul.f32 %v1866, %v1866
    %v1869 = vmul.f32 %v1867, %v1867
    %v1870 = vsel %vm353, %v1868, 0.0
    %1871 = vadd.xlane.f32.xlu0 %v1870
    %v1872 = vpop.xlane.xlu0 %1871
    %v1873 = vsel %vm324, %v1869, 0.0
    %1874 = vadd.xlane.f32.xlu0 %v1873
    %v1875 = vpop.xlane.xlu0 %1874
    %v1876 = vmul.f32 %v1872, %v328
    %v1877 = vmul.f32 %v1875, %v328
    %v1878 = vadd.f32 %v1876, 1e-05
    %v1879 = vadd.f32 %v1877, 1e-05
    %v1880 = vrsqrt.pop %v1878
    %v1881 = vrsqrt.pop %v1879
    %v1882 = vmul.f32 %v1866, %v1880
    %v1883 = vmul.f32 %v1867, %v1881
    %v1884 = vlaneseq
    %v1885 = vshrl.u32 %v1884, 7
    %v1886 = vsub.s32 0, %v1885
    %v1887 = vrot.slane %v1273, %v1886
    %v1888 = vmul.f32 %v1882, %v1887
    %v1889 = vmul.f32 %v1883, %v1887
    %v1890 = vlaneseq
    %v1891 = vshrl.u32 %v1890, 7
    %v1892 = vsub.s32 0, %v1891
    %v1893 = vrot.slane %v1274, %v1892
    %v1894 = vadd.f32 %v1888, %v1893
    %v1895 = vadd.f32 %v1889, %v1893
    %v1896 = vlaneseq
    %v1897 = vshrl.u32 %v1896, 7
    %v1898 = vsub.s32 0, %v1897
    %v1899 = vrot.slane %v1290, %v1898
    %v1901 = vsel %vm353, %v1894, 0
    %v1904 = vsel %vm353, %v1895, 0
    %1906 = vmatprep.subr.mxu0 0.0
    %1907 = vmatpush1.msra.mxu0 %v1286
    %1908 = vmatprep.subr.mxu0 0.0
    %1909 = vmatpush1.msra.mxu0 %v1287
    %1910 = vmatprep.subr.mxu0 0.0
    %1911 = vmatpush1.msra.mxu0 %v1288
    %1912 = vmatprep.subr.mxu0 0.0
    %1913 = vmatpush1.msra.mxu0 %v1289
    %1914 = vmatprep.subr.mxu0 0.0
    %1915 = vmatpush1.msra.mxu0 0.0
    %1916 = vmatprep.subr.mxu0 0.0
    %1917 = vmatpush1.msra.mxu0 0.0
    %1918 = vmatprep.subr.mxu0 0.0
    %1919 = vmatpush1.msra.mxu0 0.0
    %1920 = vmatprep.subr.mxu0 0.0
    %1921 = vmatpush1.msra.mxu0 0.0
    %1922 = vmatprep.subr.mxu0 0.0
    %1923 = vmatpush1.msra.mxu0 0.0
    %1924 = vmatprep.subr.mxu0 0.0
    %1925 = vmatpush1.msra.mxu0 0.0
    %1926 = vmatprep.subr.mxu0 0.0
    %1927 = vmatpush1.msra.mxu0 0.0
    %1928 = vmatprep.subr.mxu0 0.0
    %1929 = vmatpush1.msra.mxu0 0.0
    %1930 = vmatprep.subr.mxu0 0.0
    %1931 = vmatpush1.msra.mxu0 0.0
    %1932 = vmatprep.subr.mxu0 0.0
    %1933 = vmatpush1.msra.mxu0 0.0
    %1934 = vmatprep.subr.mxu0 0.0
    %1935 = vmatpush1.msra.mxu0 0.0
    %1936 = vmatprep.subr.mxu0 0.0
    %1937 = vmatpush1.msra.mxu0 0.0
    %1938 = vmatprep.subr.mxu0 0.0
    %1939 = vmatpush1.msra.mxu0 0.0
    %1940 = vmatprep.subr.mxu0 0.0
    %1941 = vmatpush1.msra.mxu0 0.0
    %1942 = vmatprep.subr.mxu0 0.0
    %1943 = vmatpush1.msra.mxu0 0.0
    %1944 = vmatprep.subr.mxu0 0.0
    %1945 = vmatpush1.msra.mxu0 0.0
    %1946 = vmatprep.subr.mxu0 0.0
    %1947 = vmatpush1.msra.mxu0 0.0
    %1948 = vmatprep.subr.mxu0 0.0
    %1949 = vmatpush1.msra.mxu0 0.0
    %1950 = vmatprep.subr.mxu0 0.0
    %1951 = vmatpush1.msra.mxu0 0.0
    %1952 = vmatprep.subr.mxu0 0.0
    %1953 = vmatpush1.msra.mxu0 0.0
    %1954 = vmatprep.subr.mxu0 0.0
    %1955 = vmatpush1.msra.mxu0 0.0
    %1956 = vmatprep.subr.mxu0 0.0
    %1957 = vmatpush1.msra.mxu0 0.0
    %1958 = vmatprep.subr.mxu0 0.0
    %1959 = vmatpush1.msra.mxu0 0.0
    %1960 = vmatprep.subr.mxu0 0.0
    %1961 = vmatpush1.msra.mxu0 0.0
    %1962 = vmatprep.subr.mxu0 0.0
    %1963 = vmatpush1.msra.mxu0 0.0
    %1964 = vmatprep.subr.mxu0 0.0
    %1965 = vmatpush1.msra.mxu0 0.0
    %1966 = vmatprep.subr.mxu0 0.0
    %1967 = vmatpush1.msra.mxu0 0.0
    %1968 = vmatprep.subr.mxu0 0.0
    %1969 = vmatpush1.msra.mxu0 0.0
    %1970 = vmatprep.mubr.f32.mxu0 0.0
    %1971 = vmatmul.mubr.f32.gmra.mrb[0].mxu0 %v1901
    %v1972 = vpop.f32.mrb[0].mxu0
    %v1973 = vadd.f32 %v1899, %v1972
    %v1974 = vpop.f32.mrb[0].mxu0
    %1975 = vmatprep.mubr.f32.mxu0 0.0
    %1976 = vmatmul.mubr.f32.gmra.mrb[0].mxu0 %v1904
    %v1977 = vpop.f32.mrb[0].mxu0
    %v1978 = vadd.f32 %v1899, %v1977
    %v1979 = vpop.f32.mrb[0].mxu0
    %1980 = vdwg.mxu0
    %v1981 = vmul.f32 %v1973, 0.5
    %v1982 = vmul.f32 %v1978, 0.5
    %v1983 = vmul.f32 %v1973, 0.70710677
    %v1984 = vmul.f32 %v1978, 0.70710677
    %v1985 = verf.f32.pop %v1983
    %v1986 = verf.f32.pop %v1984
    %v1987 = vadd.f32 %v1985, 1.0
    %v1988 = vadd.f32 %v1986, 1.0
    %v1989 = vmul.f32 %v1981, %v1987
    %v1990 = vmul.f32 %v1982, %v1988
    %v1992 = vsel %vm95, %v1989, 0
    %v1995 = vsel %vm95, %v1990, 0
    %1997 = vmatprep.subr.mxu0 0.0
    %1998 = vmatpush1.msra.mxu0 %v1291
    %1999 = vmatprep.subr.mxu0 0.0
    %2000 = vmatpush1.msra.mxu0 %v1292
    %2001 = vmatprep.subr.mxu0 0.0
    %2002 = vmatpush1.msra.mxu0 %v1293
    %2003 = vmatprep.subr.mxu0 0.0
    %2004 = vmatpush1.msra.mxu0 %v1294
    %2005 = vmatprep.subr.mxu0 0.0
    %2006 = vmatpush1.msra.mxu0 %v1295
    %2007 = vmatprep.subr.mxu0 0.0
    %2008 = vmatpush1.msra.mxu0 %v1296
    %2009 = vmatprep.subr.mxu0 0.0
    %2010 = vmatpush1.msra.mxu0 %v1297
    %2011 = vmatprep.subr.mxu0 0.0
    %2012 = vmatpush1.msra.mxu0 %v1298
    %2013 = vmatprep.subr.mxu0 0.0
    %2014 = vmatpush1.msra.mxu0 0.0
    %2015 = vmatprep.subr.mxu0 0.0
    %2016 = vmatpush1.msra.mxu0 0.0
    %2017 = vmatprep.subr.mxu0 0.0
    %2018 = vmatpush1.msra.mxu0 0.0
    %2019 = vmatprep.subr.mxu0 0.0
    %2020 = vmatpush1.msra.mxu0 0.0
    %2021 = vmatprep.subr.mxu0 0.0
    %2022 = vmatpush1.msra.mxu0 0.0
    %2023 = vmatprep.subr.mxu0 0.0
    %2024 = vmatpush1.msra.mxu0 0.0
    %2025 = vmatprep.subr.mxu0 0.0
    %2026 = vmatpush1.msra.mxu0 0.0
    %2027 = vmatprep.subr.mxu0 0.0
    %2028 = vmatpush1.msra.mxu0 0.0
    %2029 = vmatprep.subr.mxu0 0.0
    %2030 = vmatpush1.msra.mxu0 0.0
    %2031 = vmatprep.subr.mxu0 0.0
    %2032 = vmatpush1.msra.mxu0 0.0
    %2033 = vmatprep.subr.mxu0 0.0
    %2034 = vmatpush1.msra.mxu0 0.0
    %2035 = vmatprep.subr.mxu0 0.0
    %2036 = vmatpush1.msra.mxu0 0.0
    %2037 = vmatprep.subr.mxu0 0.0
    %2038 = vmatpush1.msra.mxu0 0.0
    %2039 = vmatprep.subr.mxu0 0.0
    %2040 = vmatpush1.msra.mxu0 0.0
    %2041 = vmatprep.subr.mxu0 0.0
    %2042 = vmatpush1.msra.mxu0 0.0
    %2043 = vmatprep.subr.mxu0 0.0
    %2044 = vmatpush1.msra.mxu0 0.0
    %2045 = vmatprep.subr.mxu0 0.0
    %2046 = vmatpush1.msra.mxu0 0.0
    %2047 = vmatprep.subr.mxu0 0.0
    %2048 = vmatpush1.msra.mxu0 0.0
    %2049 = vmatprep.subr.mxu0 0.0
    %2050 = vmatpush1.msra.mxu0 0.0
    %2051 = vmatprep.subr.mxu0 0.0
    %2052 = vmatpush1.msra.mxu0 0.0
    %2053 = vmatprep.subr.mxu0 0.0
    %2054 = vmatpush1.msra.mxu0 0.0
    %2055 = vmatprep.subr.mxu0 0.0
    %2056 = vmatpush1.msra.mxu0 0.0
    %2057 = vmatprep.subr.mxu0 0.0
    %2058 = vmatpush1.msra.mxu0 0.0
    %2059 = vmatprep.subr.mxu0 0.0
    %2060 = vmatpush1.msra.mxu0 0.0
    %2061 = vmatprep.mubr.f32.mxu0 0.0
    %2062 = vmatmul.mubr.f32.gmra.mrb[0].mxu0 %v1992
    %v2063 = vpop.f32.mrb[0].mxu0
    %v2064 = vadd.f32 0.0, %v2063
    %v2065 = vpop.f32.mrb[0].mxu0
    %2066 = vmatprep.mubr.f32.mxu0 0.0
    %2067 = vmatmul.mubr.f32.gmra.mrb[0].mxu0 %v1995
    %v2068 = vpop.f32.mrb[0].mxu0
    %v2069 = vadd.f32 0.0, %v2068
    %v2070 = vpop.f32.mrb[0].mxu0
    %2071 = vdwg.mxu0
    %v2072 = vadd.f32 %v1856, %v2064
    %v2073 = vadd.f32 %v1857, %v2069
    %v2074 = vlaneseq
    %v2075 = vshrl.u32 %v2074, 7
    %v2076 = vsub.s32 0, %v2075
    %v2077 = vrot.slane %v1276, %v2076
    %v2078 = vadd.f32 %v2072, %v2077
    %v2079 = vadd.f32 %v2073, %v2077
    %v2080 = vld [vmem:[#allocation6 + $0x2b8] sm:$0xff]
    %v2081 = vld [vmem:[#allocation6 + $0x2c0] sm:$0xff]
    %v2082 = vld [vmem:[#allocation6 + $0x2c8] sm:$0xff]
    %v2083 = vld [vmem:[#allocation6 + $0x2d0] sm:$0xff]
    %v2084 = vld [vmem:[#allocation6 + $0x2d8] sm:$0x1]
    %v2085 = vlaneseq
    %v2086 = vshrl.u32 %v2085, 7
    %v2087 = vsub.s32 0, %v2086
    %v2088 = vrot.slane %v2084, %v2087
    %v2090 = vsel %vm353, %v2078, 0
    %v2093 = vsel %vm353, %v2079, 0
    %2095 = vmatprep.subr.mxu0 0.0
    %2096 = vmatpush1.msra.mxu0 %v2080
    %2097 = vmatprep.subr.mxu0 0.0
    %2098 = vmatpush1.msra.mxu0 %v2081
    %2099 = vmatprep.subr.mxu0 0.0
    %2100 = vmatpush1.msra.mxu0 %v2082
    %2101 = vmatprep.subr.mxu0 0.0
    %2102 = vmatpush1.msra.mxu0 %v2083
    %2103 = vmatprep.subr.mxu0 0.0
    %2104 = vmatpush1.msra.mxu0 0.0
    %2105 = vmatprep.subr.mxu0 0.0
    %2106 = vmatpush1.msra.mxu0 0.0
    %2107 = vmatprep.subr.mxu0 0.0
    %2108 = vmatpush1.msra.mxu0 0.0
    %2109 = vmatprep.subr.mxu0 0.0
    %2110 = vmatpush1.msra.mxu0 0.0
    %2111 = vmatprep.subr.mxu0 0.0
    %2112 = vmatpush1.msra.mxu0 0.0
    %2113 = vmatprep.subr.mxu0 0.0
    %2114 = vmatpush1.msra.mxu0 0.0
    %2115 = vmatprep.subr.mxu0 0.0
    %2116 = vmatpush1.msra.mxu0 0.0
    %2117 = vmatprep.subr.mxu0 0.0
    %2118 = vmatpush1.msra.mxu0 0.0
    %2119 = vmatprep.subr.mxu0 0.0
    %2120 = vmatpush1.msra.mxu0 0.0
    %2121 = vmatprep.subr.mxu0 0.0
    %2122 = vmatpush1.msra.mxu0 0.0
    %2123 = vmatprep.subr.mxu0 0.0
    %2124 = vmatpush1.msra.mxu0 0.0
    %2125 = vmatprep.subr.mxu0 0.0
    %2126 = vmatpush1.msra.mxu0 0.0
    %2127 = vmatprep.subr.mxu0 0.0
    %2128 = vmatpush1.msra.mxu0 0.0
    %2129 = vmatprep.subr.mxu0 0.0
    %2130 = vmatpush1.msra.mxu0 0.0
    %2131 = vmatprep.subr.mxu0 0.0
    %2132 = vmatpush1.msra.mxu0 0.0
    %2133 = vmatprep.subr.mxu0 0.0
    %2134 = vmatpush1.msra.mxu0 0.0
    %2135 = vmatprep.subr.mxu0 0.0
    %2136 = vmatpush1.msra.mxu0 0.0
    %2137 = vmatprep.subr.mxu0 0.0
    %2138 = vmatpush1.msra.mxu0 0.0
    %2139 = vmatprep.subr.mxu0 0.0
    %2140 = vmatpush1.msra.mxu0 0.0
    %2141 = vmatprep.subr.mxu0 0.0
    %2142 = vmatpush1.msra.mxu0 0.0
    %2143 = vmatprep.subr.mxu0 0.0
    %2144 = vmatpush1.msra.mxu0 0.0
    %2145 = vmatprep.subr.mxu0 0.0
    %2146 = vmatpush1.msra.mxu0 0.0
    %2147 = vmatprep.subr.mxu0 0.0
    %2148 = vmatpush1.msra.mxu0 0.0
    %2149 = vmatprep.subr.mxu0 0.0
    %2150 = vmatpush1.msra.mxu0 0.0
    %2151 = vmatprep.subr.mxu0 0.0
    %2152 = vmatpush1.msra.mxu0 0.0
    %2153 = vmatprep.subr.mxu0 0.0
    %2154 = vmatpush1.msra.mxu0 0.0
    %2155 = vmatprep.subr.mxu0 0.0
    %2156 = vmatpush1.msra.mxu0 0.0
    %2157 = vmatprep.subr.mxu0 0.0
    %2158 = vmatpush1.msra.mxu0 0.0
    %2159 = vmatprep.mubr.f32.mxu0 0.0
    %2160 = vmatmul.mubr.f32.gmra.mrb[0].mxu0 %v2090
    %v2161 = vpop.f32.mrb[0].mxu0
    %v2162 = vadd.f32 %v2088, %v2161
    %v2163 = vpop.f32.mrb[0].mxu0
    %2164 = vmatprep.mubr.f32.mxu0 0.0
    %2165 = vmatmul.mubr.f32.gmra.mrb[0].mxu0 %v2093
    %v2166 = vpop.f32.mrb[0].mxu0
    %v2167 = vadd.f32 %v2088, %v2166
    %v2168 = vpop.f32.mrb[0].mxu0
    %2169 = vdwg.mxu0
    %v2170 = vld [vmem:[#allocation6 + $0x298] sm:$0xff]
    %v2171 = vld [vmem:[#allocation6 + $0x2a0] sm:$0xff]
    %v2172 = vld [vmem:[#allocation6 + $0x300] sm:$0xff]
    %v2173 = vld [vmem:[#allocation6 + $0x308] sm:$0xff]
    %v2175 = vsel %vm353, %v2170, 0
    %v2178 = vsel %vm353, %v2171, 0
    %v2181 = vsel %vm353, %v2162, 0
    %v2184 = vsel %vm353, %v2167, 0
    %2186 = vmatprep.subr.mxu0 0.0
    %2187 = vmatpush1.xpose.msra.mxu0 %v2181
    %2188 = vmatprep.subr.mxu0 0.0
    %2189 = vmatpush1.xpose.msra.mxu0 %v2184
    %2190 = vmatprep.subr.mxu0 0.0
    %2191 = vmatpush1.xpose.msra.mxu0 0.0
    %2192 = vmatprep.subr.mxu0 0.0
    %2193 = vmatpush1.xpose.msra.mxu0 0.0
    %2194 = vmatprep.subr.mxu0 0.0
    %2195 = vmatpush1.xpose.msra.mxu0 0.0
    %2196 = vmatprep.subr.mxu0 0.0
    %2197 = vmatpush1.xpose.msra.mxu0 0.0
    %2198 = vmatprep.subr.mxu0 0.0
    %2199 = vmatpush1.xpose.msra.mxu0 0.0
    %2200 = vmatprep.subr.mxu0 0.0
    %2201 = vmatpush1.xpose.msra.mxu0 0.0
    %2202 = vmatprep.subr.mxu0 0.0
    %2203 = vmatpush1.xpose.msra.mxu0 0.0
    %2204 = vmatprep.subr.mxu0 0.0
    %2205 = vmatpush1.xpose.msra.mxu0 0.0
    %2206 = vmatprep.subr.mxu0 0.0
    %2207 = vmatpush1.xpose.msra.mxu0 0.0
    %2208 = vmatprep.subr.mxu0 0.0
    %2209 = vmatpush1.xpose.msra.mxu0 0.0
    %2210 = vmatprep.subr.mxu0 0.0
    %2211 = vmatpush1.xpose.msra.mxu0 0.0
    %2212 = vmatprep.subr.mxu0 0.0
    %2213 = vmatpush1.xpose.msra.mxu0 0.0
    %2214 = vmatprep.subr.mxu0 0.0
    %2215 = vmatpush1.xpose.msra.mxu0 0.0
    %2216 = vmatprep.subr.mxu0 0.0
    %2217 = vmatpush1.xpose.msra.mxu0 0.0
    %2218 = vmatprep.subr.mxu0 0.0
    %2219 = vmatpush1.xpose.msra.mxu0 0.0
    %2220 = vmatprep.subr.mxu0 0.0
    %2221 = vmatpush1.xpose.msra.mxu0 0.0
    %2222 = vmatprep.subr.mxu0 0.0
    %2223 = vmatpush1.xpose.msra.mxu0 0.0
    %2224 = vmatprep.subr.mxu0 0.0
    %2225 = vmatpush1.xpose.msra.mxu0 0.0
    %2226 = vmatprep.subr.mxu0 0.0
    %2227 = vmatpush1.xpose.msra.mxu0 0.0
    %2228 = vmatprep.subr.mxu0 0.0
    %2229 = vmatpush1.xpose.msra.mxu0 0.0
    %2230 = vmatprep.subr.mxu0 0.0
    %2231 = vmatpush1.xpose.msra.mxu0 0.0
    %2232 = vmatprep.subr.mxu0 0.0
    %2233 = vmatpush1.xpose.msra.mxu0 0.0
    %2234 = vmatprep.subr.mxu0 0.0
    %2235 = vmatpush1.xpose.msra.mxu0 0.0
    %2236 = vmatprep.subr.mxu0 0.0
    %2237 = vmatpush1.xpose.msra.mxu0 0.0
    %2238 = vmatprep.subr.mxu0 0.0
    %2239 = vmatpush1.xpose.msra.mxu0 0.0
    %2240 = vmatprep.subr.mxu0 0.0
    %2241 = vmatpush1.xpose.msra.mxu0 0.0
    %2242 = vmatprep.subr.mxu0 0.0
    %2243 = vmatpush1.xpose.msra.mxu0 0.0
    %2244 = vmatprep.subr.mxu0 0.0
    %2245 = vmatpush1.xpose.msra.mxu0 0.0
    %2246 = vmatprep.subr.mxu0 0.0
    %2247 = vmatpush1.xpose.msra.mxu0 0.0
    %2248 = vmatprep.subr.mxu0 0.0
    %2249 = vmatpush1.xpose.msra.mxu0 0.0
    %2250 = vmatprep.mubr.f32.mxu0 0.0
    %2251 = vmatmul.mubr.f32.gmra.mrb[0].mxu0 %v2175
    %v2252 = vpop.f32.mrb[0].mxu0
    %v2253 = vadd.f32 %v2172, %v2252
    %v2254 = vpop.f32.mrb[0].mxu0
    %2255 = vmatprep.mubr.f32.mxu0 0.0
    %2256 = vmatmul.mubr.f32.gmra.mrb[0].mxu0 %v2178
    %v2257 = vpop.f32.mrb[0].mxu0
    %v2258 = vadd.f32 %v2173, %v2257
    %v2259 = vpop.f32.mrb[0].mxu0
    %2260 = vdwg.mxu0
    %v2261 = vsel %vm747, %v2253, -inf
    %2262 = vmax.xlane.f32.xlu0 %v2261
    %v2263 = vpop.xlane.xlu0 %2262
    %v2264 = vsel %vm747, %v2258, -inf
    %2265 = vmax.xlane.f32.xlu0 %v2264
    %v2266 = vpop.xlane.xlu0 %2265
    %v2267 = vsub.f32 %v2253, %v2263
    %v2268 = vsub.f32 %v2258, %v2266
    %v2269 = vmul.f32 %v2267, 1.442695
    %v2270 = vpow.pop %v2269
    %v2271 = vmul.f32 %v2268, 1.442695
    %v2272 = vpow.pop %v2271
    %v2273 = vsel %vm747, %v2270, 0.0
    %2274 = vadd.xlane.f32.xlu0 %v2273
    %v2275 = vpop.xlane.xlu0 %2274
    %v2276 = vsel %vm747, %v2272, 0.0
    %2277 = vadd.xlane.f32.xlu0 %v2276
    %v2278 = vpop.xlane.xlu0 %2277
    %v2279 = vrcp.pop %v2275
    %v2280 = vrcp.pop %v2278
    %v2281 = vmul.f32 %v2270, %v2279
    %v2282 = vmul.f32 %v2272, %v2280
    %2283 = vrot.lane.b32.xlu0 %v2162, 96
    %v2284 = vpop.permute.xlu0 %2283
    %2285 = vrot.lane.b32.xlu0 %v2167, 96
    %v2286 = vpop.permute.xlu0 %2285
    %v2289 = vsel %vm747, %v2281, 0
    %v2292 = vsel %vm747, %v2282, 0
    %v2294 = vsel %vm447, %v2286, 0
    %2296 = vmatprep.subr.mxu0 0.0
    %2297 = vmatpush1.msra.mxu0 %v2284
    %2298 = vmatprep.subr.mxu0 0.0
    %2299 = vmatpush1.msra.mxu0 %v2294
    %2300 = vmatprep.subr.mxu0 0.0
    %2301 = vmatpush1.msra.mxu0 0.0
    %2302 = vmatprep.subr.mxu0 0.0
    %2303 = vmatpush1.msra.mxu0 0.0
    %2304 = vmatprep.subr.mxu0 0.0
    %2305 = vmatpush1.msra.mxu0 0.0
    %2306 = vmatprep.subr.mxu0 0.0
    %2307 = vmatpush1.msra.mxu0 0.0
    %2308 = vmatprep.subr.mxu0 0.0
    %2309 = vmatpush1.msra.mxu0 0.0
    %2310 = vmatprep.subr.mxu0 0.0
    %2311 = vmatpush1.msra.mxu0 0.0
    %2312 = vmatprep.subr.mxu0 0.0
    %2313 = vmatpush1.msra.mxu0 0.0
    %2314 = vmatprep.subr.mxu0 0.0
    %2315 = vmatpush1.msra.mxu0 0.0
    %2316 = vmatprep.subr.mxu0 0.0
    %2317 = vmatpush1.msra.mxu0 0.0
    %2318 = vmatprep.subr.mxu0 0.0
    %2319 = vmatpush1.msra.mxu0 0.0
    %2320 = vmatprep.subr.mxu0 0.0
    %2321 = vmatpush1.msra.mxu0 0.0
    %2322 = vmatprep.subr.mxu0 0.0
    %2323 = vmatpush1.msra.mxu0 0.0
    %2324 = vmatprep.subr.mxu0 0.0
    %2325 = vmatpush1.msra.mxu0 0.0
    %2326 = vmatprep.subr.mxu0 0.0
    %2327 = vmatpush1.msra.mxu0 0.0
    %2328 = vmatprep.subr.mxu0 0.0
    %2329 = vmatpush1.msra.mxu0 0.0
    %2330 = vmatprep.subr.mxu0 0.0
    %2331 = vmatpush1.msra.mxu0 0.0
    %2332 = vmatprep.subr.mxu0 0.0
    %2333 = vmatpush1.msra.mxu0 0.0
    %2334 = vmatprep.subr.mxu0 0.0
    %2335 = vmatpush1.msra.mxu0 0.0
    %2336 = vmatprep.subr.mxu0 0.0
    %2337 = vmatpush1.msra.mxu0 0.0
    %2338 = vmatprep.subr.mxu0 0.0
    %2339 = vmatpush1.msra.mxu0 0.0
    %2340 = vmatprep.subr.mxu0 0.0
    %2341 = vmatpush1.msra.mxu0 0.0
    %2342 = vmatprep.subr.mxu0 0.0
    %2343 = vmatpush1.msra.mxu0 0.0
    %2344 = vmatprep.subr.mxu0 0.0
    %2345 = vmatpush1.msra.mxu0 0.0
    %2346 = vmatprep.subr.mxu0 0.0
    %2347 = vmatpush1.msra.mxu0 0.0
    %2348 = vmatprep.subr.mxu0 0.0
    %2349 = vmatpush1.msra.mxu0 0.0
    %2350 = vmatprep.subr.mxu0 0.0
    %2351 = vmatpush1.msra.mxu0 0.0
    %2352 = vmatprep.subr.mxu0 0.0
    %2353 = vmatpush1.msra.mxu0 0.0
    %2354 = vmatprep.subr.mxu0 0.0
    %2355 = vmatpush1.msra.mxu0 0.0
    %2356 = vmatprep.subr.mxu0 0.0
    %2357 = vmatpush1.msra.mxu0 0.0
    %2358 = vmatprep.subr.mxu0 0.0
    %2359 = vmatpush1.msra.mxu0 0.0
    %2360 = vmatprep.mubr.f32.mxu0 0.0
    %2361 = vmatmul.mubr.f32.gmra.mrb[0].mxu0 %v2289
    %v2362 = vpop.f32.mrb[0].mxu0
    %v2363 = vadd.f32 0.0, %v2362
    %v2364 = vpop.f32.mrb[0].mxu0
    %2365 = vmatprep.mubr.f32.mxu0 0.0
    %2366 = vmatmul.mubr.f32.gmra.mrb[0].mxu0 %v2292
    %v2367 = vpop.f32.mrb[0].mxu0
    %v2368 = vadd.f32 0.0, %v2367
    %v2369 = vpop.f32.mrb[0].mxu0
    %2370 = vdwg.mxu0
    %v2371 = vld [vmem:[#allocation6 + $0x2a8] sm:$0xff]
    %v2372 = vld [vmem:[#allocation6 + $0x2b0] sm:$0xff]
    %v2373 = vmul.f32 %v2363, %v2371
    %v2374 = vmul.f32 %v2368, %v2372
    %v2376 = vrot.slane %v2373, 4
    %v2378 = vadd.f32 %v2373, %v2376
    %v2379 = vadd.f32 %v2378, %v2374
    %v2381 = vrot.slane %v2374, 4
    %v2383 = vadd.f32 %v2379, %v2381
    %v2384 = vld [vmem:[#allocation6 + $0x2e0] sm:$0xff]
    %v2385 = vld [vmem:[#allocation6 + $0x2e8] sm:$0xff]
    %v2386 = vld [vmem:[#allocation6 + $0x2f0] sm:$0xff]
    %v2387 = vld [vmem:[#allocation6 + $0x2f8] sm:$0xff]
    %v2389 = vsel %vm353, %v2383, 0
    %2391 = vmatprep.subr.mxu0 0.0
    %2392 = vmatpush1.msra.mxu0 %v2384
    %2393 = vmatprep.subr.mxu0 0.0
    %2394 = vmatpush1.msra.mxu0 %v2385
    %2395 = vmatprep.subr.mxu0 0.0
    %2396 = vmatpush1.msra.mxu0 %v2386
    %2397 = vmatprep.subr.mxu0 0.0
    %2398 = vmatpush1.msra.mxu0 %v2387
    %2399 = vmatprep.subr.mxu0 0.0
    %2400 = vmatpush1.msra.mxu0 0.0
    %2401 = vmatprep.subr.mxu0 0.0
    %2402 = vmatpush1.msra.mxu0 0.0
    %2403 = vmatprep.subr.mxu0 0.0
    %2404 = vmatpush1.msra.mxu0 0.0
    %2405 = vmatprep.subr.mxu0 0.0
    %2406 = vmatpush1.msra.mxu0 0.0
    %2407 = vmatprep.subr.mxu0 0.0
    %2408 = vmatpush1.msra.mxu0 0.0
    %2409 = vmatprep.subr.mxu0 0.0
    %2410 = vmatpush1.msra.mxu0 0.0
    %2411 = vmatprep.subr.mxu0 0.0
    %2412 = vmatpush1.msra.mxu0 0.0
    %2413 = vmatprep.subr.mxu0 0.0
    %2414 = vmatpush1.msra.mxu0 0.0
    %2415 = vmatprep.subr.mxu0 0.0
    %2416 = vmatpush1.msra.mxu0 0.0
    %2417 = vmatprep.subr.mxu0 0.0
    %2418 = vmatpush1.msra.mxu0 0.0
    %2419 = vmatprep.subr.mxu0 0.0
    %2420 = vmatpush1.msra.mxu0 0.0
    %2421 = vmatprep.subr.mxu0 0.0
    %2422 = vmatpush1.msra.mxu0 0.0
    %2423 = vmatprep.subr.mxu0 0.0
    %2424 = vmatpush1.msra.mxu0 0.0
    %2425 = vmatprep.subr.mxu0 0.0
    %2426 = vmatpush1.msra.mxu0 0.0
    %2427 = vmatprep.subr.mxu0 0.0
    %2428 = vmatpush1.msra.mxu0 0.0
    %2429 = vmatprep.subr.mxu0 0.0
    %2430 = vmatpush1.msra.mxu0 0.0
    %2431 = vmatprep.subr.mxu0 0.0
    %2432 = vmatpush1.msra.mxu0 0.0
    %2433 = vmatprep.subr.mxu0 0.0
    %2434 = vmatpush1.msra.mxu0 0.0
    %2435 = vmatprep.subr.mxu0 0.0
    %2436 = vmatpush1.msra.mxu0 0.0
    %2437 = vmatprep.subr.mxu0 0.0
    %2438 = vmatpush1.msra.mxu0 0.0
    %2439 = vmatprep.subr.mxu0 0.0
    %2440 = vmatpush1.msra.mxu0 0.0
    %2441 = vmatprep.subr.mxu0 0.0
    %2442 = vmatpush1.msra.mxu0 0.0
    %2443 = vmatprep.subr.mxu0 0.0
    %2444 = vmatpush1.msra.mxu0 0.0
    %2445 = vmatprep.subr.mxu0 0.0
    %2446 = vmatpush1.msra.mxu0 0.0
    %2447 = vmatprep.subr.mxu0 0.0
    %2448 = vmatpush1.msra.mxu0 0.0
    %2449 = vmatprep.subr.mxu0 0.0
    %2450 = vmatpush1.msra.mxu0 0.0
    %2451 = vmatprep.subr.mxu0 0.0
    %2452 = vmatpush1.msra.mxu0 0.0
    %2453 = vmatprep.subr.mxu0 0.0
    %2454 = vmatpush1.msra.mxu0 0.0
    %2455 = vmatprep.mubr.f32.mxu0 0.0
    %2456 = vmatmul.mubr.f32.gmra.mrb[0].mxu0 %v2389
    %v2457 = vpop.f32.mrb[0].mxu0
    %v2458 = vadd.f32 0.0, %v2457
    %v2459 = vpop.f32.mrb[0].mxu0
    %2460 = vdwg.mxu0
    %v2461 = vld [vmem:[#allocation6 + $0x310] sm:$0xff]
    %v2462 = vld [vmem:[#allocation6 + $0x318] sm:$0xf]
    %v2464 = vsel %vm447, %v2462, 0
    %2466 = vmatprep.subr.mxu0 0.0
    %2467 = vmatpush1.msra.mxu0 %v2461
    %2468 = vmatprep.subr.mxu0 0.0
    %2469 = vmatpush1.msra.mxu0 %v2464
    %2470 = vmatprep.subr.mxu0 0.0
    %2471 = vmatpush1.msra.mxu0 0.0
    %2472 = vmatprep.subr.mxu0 0.0
    %2473 = vmatpush1.msra.mxu0 0.0
    %2474 = vmatprep.subr.mxu0 0.0
    %2475 = vmatpush1.msra.mxu0 0.0
    %2476 = vmatprep.subr.mxu0 0.0
    %2477 = vmatpush1.msra.mxu0 0.0
    %2478 = vmatprep.subr.mxu0 0.0
    %2479 = vmatpush1.msra.mxu0 0.0
    %2480 = vmatprep.subr.mxu0 0.0
    %2481 = vmatpush1.msra.mxu0 0.0
    %2482 = vmatprep.subr.mxu0 0.0
    %2483 = vmatpush1.msra.mxu0 0.0
    %2484 = vmatprep.subr.mxu0 0.0
    %2485 = vmatpush1.msra.mxu0 0.0
    %2486 = vmatprep.subr.mxu0 0.0
    %2487 = vmatpush1.msra.mxu0 0.0
    %2488 = vmatprep.subr.mxu0 0.0
    %2489 = vmatpush1.msra.mxu0 0.0
    %2490 = vmatprep.subr.mxu0 0.0
    %2491 = vmatpush1.msra.mxu0 0.0
    %2492 = vmatprep.subr.mxu0 0.0
    %2493 = vmatpush1.msra.mxu0 0.0
    %2494 = vmatprep.subr.mxu0 0.0
    %2495 = vmatpush1.msra.mxu0 0.0
    %2496 = vmatprep.subr.mxu0 0.0
    %2497 = vmatpush1.msra.mxu0 0.0
    %2498 = vmatprep.subr.mxu0 0.0
    %2499 = vmatpush1.msra.mxu0 0.0
    %2500 = vmatprep.subr.mxu0 0.0
    %2501 = vmatpush1.msra.mxu0 0.0
    %2502 = vmatprep.subr.mxu0 0.0
    %2503 = vmatpush1.msra.mxu0 0.0
    %2504 = vmatprep.subr.mxu0 0.0
    %2505 = vmatpush1.msra.mxu0 0.0
    %2506 = vmatprep.subr.mxu0 0.0
    %2507 = vmatpush1.msra.mxu0 0.0
    %2508 = vmatprep.subr.mxu0 0.0
    %2509 = vmatpush1.msra.mxu0 0.0
    %2510 = vmatprep.subr.mxu0 0.0
    %2511 = vmatpush1.msra.mxu0 0.0
    %2512 = vmatprep.subr.mxu0 0.0
    %2513 = vmatpush1.msra.mxu0 0.0
    %2514 = vmatprep.subr.mxu0 0.0
    %2515 = vmatpush1.msra.mxu0 0.0
    %2516 = vmatprep.subr.mxu0 0.0
    %2517 = vmatpush1.msra.mxu0 0.0
    %2518 = vmatprep.subr.mxu0 0.0
    %2519 = vmatpush1.msra.mxu0 0.0
    %2520 = vmatprep.subr.mxu0 0.0
    %2521 = vmatpush1.msra.mxu0 0.0
    %2522 = vmatprep.subr.mxu0 0.0
    %2523 = vmatpush1.msra.mxu0 0.0
    %2524 = vmatprep.subr.mxu0 0.0
    %2525 = vmatpush1.msra.mxu0 0.0
    %2526 = vmatprep.subr.mxu0 0.0
    %2527 = vmatpush1.msra.mxu0 0.0
    %2528 = vmatprep.subr.mxu0 0.0
    %2529 = vmatpush1.msra.mxu0 0.0
    %2530 = vmatprep.mubr.f32.mxu0 0.0
    %2531 = vmatmul.mubr.f32.gmra.mrb[0].mxu0 %v2289
    %v2532 = vpop.f32.mrb[0].mxu0
    %v2533 = vadd.f32 0.0, %v2532
    %v2534 = vpop.f32.mrb[0].mxu0
    %2535 = vmatprep.mubr.f32.mxu0 0.0
    %2536 = vmatmul.mubr.f32.gmra.mrb[0].mxu0 %v2292
    %v2537 = vpop.f32.mrb[0].mxu0
    %v2538 = vadd.f32 0.0, %v2537
    %v2539 = vpop.f32.mrb[0].mxu0
    %2540 = vdwg.mxu0
    %v2542 = vrot.slane %v2533, 4
    %v2544 = vadd.f32 %v2533, %v2542
    %v2545 = vadd.f32 %v2544, %v2538
    %v2547 = vrot.slane %v2538, 4
    %v2549 = vadd.f32 %v2545, %v2547
    %v2550 = vmul.f32 %v2549, 0.25
    %v2551 = vld [vmem:[#allocation6 + $0x320] sm:$0xff]
    %v2552 = vld [vmem:[#allocation6 + $0x328] sm:$0xff]
    %v2553 = vld [vmem:[#allocation6 + $0x330] sm:$0xff]
    %v2554 = vld [vmem:[#allocation6 + $0x338] sm:$0xff]
    %v2555 = vld [vmem:[#allocation6 + $0x340] sm:$0x1]
    %v2556 = vlaneseq
    %v2557 = vshrl.u32 %v2556, 7
    %v2558 = vsub.s32 0, %v2557
    %v2559 = vrot.slane %v2555, %v2558
    %v2561 = vsel %vm353, %v2458, 0
    %2563 = vmatprep.subr.mxu0 0.0
    %2564 = vmatpush1.msra.mxu0 %v2551
    %2565 = vmatprep.subr.mxu0 0.0
    %2566 = vmatpush1.msra.mxu0 %v2552
    %2567 = vmatprep.subr.mxu0 0.0
    %2568 = vmatpush1.msra.mxu0 %v2553
    %2569 = vmatprep.subr.mxu0 0.0
    %2570 = vmatpush1.msra.mxu0 %v2554
    %2571 = vmatprep.subr.mxu0 0.0
    %2572 = vmatpush1.msra.mxu0 0.0
    %2573 = vmatprep.subr.mxu0 0.0
    %2574 = vmatpush1.msra.mxu0 0.0
    %2575 = vmatprep.subr.mxu0 0.0
    %2576 = vmatpush1.msra.mxu0 0.0
    %2577 = vmatprep.subr.mxu0 0.0
    %2578 = vmatpush1.msra.mxu0 0.0
    %2579 = vmatprep.subr.mxu0 0.0
    %2580 = vmatpush1.msra.mxu0 0.0
    %2581 = vmatprep.subr.mxu0 0.0
    %2582 = vmatpush1.msra.mxu0 0.0
    %2583 = vmatprep.subr.mxu0 0.0
    %2584 = vmatpush1.msra.mxu0 0.0
    %2585 = vmatprep.subr.mxu0 0.0
    %2586 = vmatpush1.msra.mxu0 0.0
    %2587 = vmatprep.subr.mxu0 0.0
    %2588 = vmatpush1.msra.mxu0 0.0
    %2589 = vmatprep.subr.mxu0 0.0
    %2590 = vmatpush1.msra.mxu0 0.0
    %2591 = vmatprep.subr.mxu0 0.0
    %2592 = vmatpush1.msra.mxu0 0.0
    %2593 = vmatprep.subr.mxu0 0.0
    %2594 = vmatpush1.msra.mxu0 0.0
    %2595 = vmatprep.subr.mxu0 0.0
    %2596 = vmatpush1.msra.mxu0 0.0
    %2597 = vmatprep.subr.mxu0 0.0
    %2598 = vmatpush1.msra.mxu0 0.0
    %2599 = vmatprep.subr.mxu0 0.0
    %2600 = vmatpush1.msra.mxu0 0.0
    %2601 = vmatprep.subr.mxu0 0.0
    %2602 = vmatpush1.msra.mxu0 0.0
    %2603 = vmatprep.subr.mxu0 0.0
    %2604 = vmatpush1.msra.mxu0 0.0
    %2605 = vmatprep.subr.mxu0 0.0
    %2606 = vmatpush1.msra.mxu0 0.0
    %2607 = vmatprep.subr.mxu0 0.0
    %2608 = vmatpush1.msra.mxu0 0.0
    %2609 = vmatprep.subr.mxu0 0.0
    %2610 = vmatpush1.msra.mxu0 0.0
    %2611 = vmatprep.subr.mxu0 0.0
    %2612 = vmatpush1.msra.mxu0 0.0
    %2613 = vmatprep.subr.mxu0 0.0
    %2614 = vmatpush1.msra.mxu0 0.0
    %2615 = vmatprep.subr.mxu0 0.0
    %2616 = vmatpush1.msra.mxu0 0.0
    %2617 = vmatprep.subr.mxu0 0.0
    %2618 = vmatpush1.msra.mxu0 0.0
    %2619 = vmatprep.subr.mxu0 0.0
    %2620 = vmatpush1.msra.mxu0 0.0
    %2621 = vmatprep.subr.mxu0 0.0
    %2622 = vmatpush1.msra.mxu0 0.0
    %2623 = vmatprep.subr.mxu0 0.0
    %2624 = vmatpush1.msra.mxu0 0.0
    %2625 = vmatprep.subr.mxu0 0.0
    %2626 = vmatpush1.msra.mxu0 0.0
    %2627 = vmatprep.mubr.f32.mxu0 0.0
    %2628 = vmatmul.mubr.f32.gmra.mrb[0].mxu0 %v2561
    %v2629 = vpop.f32.mrb[0].mxu0
    %v2630 = vadd.f32 %v2559, %v2629
    %v2631 = vpop.f32.mrb[0].mxu0
    %2632 = vdwg.mxu0
    %v2633 = vmul.f32 %v2630, 0.5
    %v2634 = vmul.f32 %v2630, 0.70710677
    %v2635 = verf.f32.pop %v2634
    %v2636 = vadd.f32 %v2635, 1.0
    %v2637 = vmul.f32 %v2633, %v2636
    %v2638 = vld [vmem:[#allocation6 + $0x348] sm:$0xff]
    %v2639 = vld [vmem:[#allocation6 + $0x350] sm:$0xff]
    %v2640 = vld [vmem:[#allocation6 + $0x358] sm:$0xff]
    %v2641 = vld [vmem:[#allocation6 + $0x360] sm:$0xff]
    %v2642 = vld [vmem:[#allocation6 + $0x368] sm:$0xff]
    %v2643 = vld [vmem:[#allocation6 + $0x370] sm:$0xff]
    %v2644 = vld [vmem:[#allocation6 + $0x378] sm:$0xff]
    %v2645 = vld [vmem:[#allocation6 + $0x380] sm:$0xff]
    %v2646 = vld [vmem:[#allocation6 + $0x388] sm:$0x1]
    %v2647 = vlaneseq
    %v2648 = vshrl.u32 %v2647, 7
    %v2649 = vsub.s32 0, %v2648
    %v2650 = vrot.slane %v2646, %v2649
    %v2652 = vsel %vm95, %v2637, 0
    %2654 = vmatprep.subr.mxu0 0.0
    %2655 = vmatpush1.msra.mxu0 %v2638
    %2656 = vmatprep.subr.mxu0 0.0
    %2657 = vmatpush1.msra.mxu0 %v2639
    %2658 = vmatprep.subr.mxu0 0.0
    %2659 = vmatpush1.msra.mxu0 %v2640
    %2660 = vmatprep.subr.mxu0 0.0
    %2661 = vmatpush1.msra.mxu0 %v2641
    %2662 = vmatprep.subr.mxu0 0.0
    %2663 = vmatpush1.msra.mxu0 %v2642
    %2664 = vmatprep.subr.mxu0 0.0
    %2665 = vmatpush1.msra.mxu0 %v2643
    %2666 = vmatprep.subr.mxu0 0.0
    %2667 = vmatpush1.msra.mxu0 %v2644
    %2668 = vmatprep.subr.mxu0 0.0
    %2669 = vmatpush1.msra.mxu0 %v2645
    %2670 = vmatprep.subr.mxu0 0.0
    %2671 = vmatpush1.msra.mxu0 0.0
    %2672 = vmatprep.subr.mxu0 0.0
    %2673 = vmatpush1.msra.mxu0 0.0
    %2674 = vmatprep.subr.mxu0 0.0
    %2675 = vmatpush1.msra.mxu0 0.0
    %2676 = vmatprep.subr.mxu0 0.0
    %2677 = vmatpush1.msra.mxu0 0.0
    %2678 = vmatprep.subr.mxu0 0.0
    %2679 = vmatpush1.msra.mxu0 0.0
    %2680 = vmatprep.subr.mxu0 0.0
    %2681 = vmatpush1.msra.mxu0 0.0
    %2682 = vmatprep.subr.mxu0 0.0
    %2683 = vmatpush1.msra.mxu0 0.0
    %2684 = vmatprep.subr.mxu0 0.0
    %2685 = vmatpush1.msra.mxu0 0.0
    %2686 = vmatprep.subr.mxu0 0.0
    %2687 = vmatpush1.msra.mxu0 0.0
    %2688 = vmatprep.subr.mxu0 0.0
    %2689 = vmatpush1.msra.mxu0 0.0
    %2690 = vmatprep.subr.mxu0 0.0
    %2691 = vmatpush1.msra.mxu0 0.0
    %2692 = vmatprep.subr.mxu0 0.0
    %2693 = vmatpush1.msra.mxu0 0.0
    %2694 = vmatprep.subr.mxu0 0.0
    %2695 = vmatpush1.msra.mxu0 0.0
    %2696 = vmatprep.subr.mxu0 0.0
    %2697 = vmatpush1.msra.mxu0 0.0
    %2698 = vmatprep.subr.mxu0 0.0
    %2699 = vmatpush1.msra.mxu0 0.0
    %2700 = vmatprep.subr.mxu0 0.0
    %2701 = vmatpush1.msra.mxu0 0.0
    %2702 = vmatprep.subr.mxu0 0.0
    %2703 = vmatpush1.msra.mxu0 0.0
    %2704 = vmatprep.subr.mxu0 0.0
    %2705 = vmatpush1.msra.mxu0 0.0
    %2706 = vmatprep.subr.mxu0 0.0
    %2707 = vmatpush1.msra.mxu0 0.0
    %2708 = vmatprep.subr.mxu0 0.0
    %2709 = vmatpush1.msra.mxu0 0.0
    %2710 = vmatprep.subr.mxu0 0.0
    %2711 = vmatpush1.msra.mxu0 0.0
    %2712 = vmatprep.subr.mxu0 0.0
    %2713 = vmatpush1.msra.mxu0 0.0
    %2714 = vmatprep.subr.mxu0 0.0
    %2715 = vmatpush1.msra.mxu0 0.0
    %2716 = vmatprep.subr.mxu0 0.0
    %2717 = vmatpush1.msra.mxu0 0.0
    %2718 = vmatprep.mubr.f32.mxu0 0.0
    %2719 = vmatmul.mubr.f32.gmra.mrb[0].mxu0 %v2652
    %v2720 = vpop.f32.mrb[0].mxu0
    %v2721 = vadd.f32 %v2650, %v2720
    %v2722 = vpop.f32.mrb[0].mxu0
    %2723 = vdwg.mxu0
    %v2724 = vmul.f32 %v2721, 0.5
    %v2725 = vmul.f32 %v2721, 0.70710677
    %v2726 = verf.f32.pop %v2725
    %v2727 = vadd.f32 %v2726, 1.0
    %v2728 = vmul.f32 %v2724, %v2727
    %v2729 = vld [vmem:[#allocation6 + $0x390] sm:$0xff]
    %v2730 = vld [vmem:[#allocation6 + $0x398] sm:$0xff]
    %v2731 = vld [vmem:[#allocation6 + $0x3a0] sm:$0xff]
    %v2732 = vld [vmem:[#allocation6 + $0x3a8] sm:$0xff]
    %v2733 = vld [vmem:[#allocation6 + $0x3b0] sm:$0x1]
    %v2734 = vlaneseq
    %v2735 = vshrl.u32 %v2734, 7
    %v2736 = vsub.s32 0, %v2735
    %v2737 = vrot.slane %v2733, %v2736
    %v2739 = vsel %vm353, %v2728, 0
    %2741 = vmatprep.subr.mxu0 0.0
    %2742 = vmatpush1.msra.mxu0 %v2729
    %2743 = vmatprep.subr.mxu0 0.0
    %2744 = vmatpush1.msra.mxu0 %v2730
    %2745 = vmatprep.subr.mxu0 0.0
    %2746 = vmatpush1.msra.mxu0 %v2731
    %2747 = vmatprep.subr.mxu0 0.0
    %2748 = vmatpush1.msra.mxu0 %v2732
    %2749 = vmatprep.subr.mxu0 0.0
    %2750 = vmatpush1.msra.mxu0 0.0
    %2751 = vmatprep.subr.mxu0 0.0
    %2752 = vmatpush1.msra.mxu0 0.0
    %2753 = vmatprep.subr.mxu0 0.0
    %2754 = vmatpush1.msra.mxu0 0.0
    %2755 = vmatprep.subr.mxu0 0.0
    %2756 = vmatpush1.msra.mxu0 0.0
    %2757 = vmatprep.subr.mxu0 0.0
    %2758 = vmatpush1.msra.mxu0 0.0
    %2759 = vmatprep.subr.mxu0 0.0
    %2760 = vmatpush1.msra.mxu0 0.0
    %2761 = vmatprep.subr.mxu0 0.0
    %2762 = vmatpush1.msra.mxu0 0.0
    %2763 = vmatprep.subr.mxu0 0.0
    %2764 = vmatpush1.msra.mxu0 0.0
    %2765 = vmatprep.subr.mxu0 0.0
    %2766 = vmatpush1.msra.mxu0 0.0
    %2767 = vmatprep.subr.mxu0 0.0
    %2768 = vmatpush1.msra.mxu0 0.0
    %2769 = vmatprep.subr.mxu0 0.0
    %2770 = vmatpush1.msra.mxu0 0.0
    %2771 = vmatprep.subr.mxu0 0.0
    %2772 = vmatpush1.msra.mxu0 0.0
    %2773 = vmatprep.subr.mxu0 0.0
    %2774 = vmatpush1.msra.mxu0 0.0
    %2775 = vmatprep.subr.mxu0 0.0
    %2776 = vmatpush1.msra.mxu0 0.0
    %2777 = vmatprep.subr.mxu0 0.0
    %2778 = vmatpush1.msra.mxu0 0.0
    %2779 = vmatprep.subr.mxu0 0.0
    %2780 = vmatpush1.msra.mxu0 0.0
    %2781 = vmatprep.subr.mxu0 0.0
    %2782 = vmatpush1.msra.mxu0 0.0
    %2783 = vmatprep.subr.mxu0 0.0
    %2784 = vmatpush1.msra.mxu0 0.0
    %2785 = vmatprep.subr.mxu0 0.0
    %2786 = vmatpush1.msra.mxu0 0.0
    %2787 = vmatprep.subr.mxu0 0.0
    %2788 = vmatpush1.msra.mxu0 0.0
    %2789 = vmatprep.subr.mxu0 0.0
    %2790 = vmatpush1.msra.mxu0 0.0
    %2791 = vmatprep.subr.mxu0 0.0
    %2792 = vmatpush1.msra.mxu0 0.0
    %2793 = vmatprep.subr.mxu0 0.0
    %2794 = vmatpush1.msra.mxu0 0.0
    %2795 = vmatprep.subr.mxu0 0.0
    %2796 = vmatpush1.msra.mxu0 0.0
    %2797 = vmatprep.subr.mxu0 0.0
    %2798 = vmatpush1.msra.mxu0 0.0
    %2799 = vmatprep.subr.mxu0 0.0
    %2800 = vmatpush1.msra.mxu0 0.0
    %2801 = vmatprep.subr.mxu0 0.0
    %2802 = vmatpush1.msra.mxu0 0.0
    %2803 = vmatprep.subr.mxu0 0.0
    %2804 = vmatpush1.msra.mxu0 0.0
    %2805 = vmatprep.mubr.f32.mxu0 0.0
    %2806 = vmatmul.mubr.f32.gmra.mrb[0].mxu0 %v2739
    %v2807 = vpop.f32.mrb[0].mxu0
    %v2808 = vadd.f32 %v2737, %v2807
    %v2809 = vpop.f32.mrb[0].mxu0
    %2810 = vdwg.mxu0
    %2812 = vrot.lane.b32.xlu0 %v2550, 8
    %v2813 = vpop.permute.xlu0 %2812
    %vm2815 = vcmask 64512
    %v2816 = vsel %vm2815, %v2808, %v2813
    %vm2817 = vcmask 89088
    %v2818 = vsel %vm2817, %v2816, 0.0
    %2819 = vst [vmem:[%s4] sm:$0xf] %v2818
    // Predicated region
    $region30: #{_fused_forward.1} parent=1 // pred_check
      _
    $region31: #{_fused_forward.1} parent=1 // pred_check_branch
      %2821 = sbr.rel (0) target = $region33
    $region32: #{_fused_forward.1} parent=1 // pred_region
      _
    $region33: #{_fused_forward.1} parent=1 // pred_fallthru
      _
    // Predicated region
    $region34: #{_fused_forward.1} parent=1 // pred_check
      _
    $region35: #{_fused_forward.1} parent=1 // pred_check_branch
      %2823 = sbr.rel (0) target = $region37
    $region36: #{_fused_forward.1} parent=1 // pred_region
      _
    $region37: #{_fused_forward.1} parent=1 // pred_fallthru
      _
    %2824 = vsyncpa [#allocation3], 1
    %2825 = vsyncpa [#allocation5], 1

</llo_original>
